<compile_context>
chip_gen: v7x
topology: tpu7x:2x2x1
jax: 0.10.0
libtpu: 0.0.40
codegen_flags: <defaults>
</compile_context>

<pallas_src>
import functools
import math

import jax
import jax.numpy as jnp
from jax.experimental import pallas as pl
from jax.experimental.pallas import tpu as pltpu


CFG = dict(
    vocab_size=50,
    max_position=16,
    type_vocab=2,
    hidden=32,
    heads=2,
    layers=2,
    intermediate=64,
    num_classes_sbdh=15,
)

_LANE = 128  # classifier output padded to a full lane width for dense stores


# ----------------------------- in-kernel helpers -----------------------------

def _mxu(a, b):
    # MXU matmul: bf16 operands (weights already bf16 => cast is a no-op), f32 accumulation.
    return jnp.dot(a.astype(jnp.bfloat16), b.astype(jnp.bfloat16),
                   preferred_element_type=jnp.float32)


def _mxu_qkt(q, k):
    # q @ k^T without an explicit transpose: contract the last dims of both.
    return jax.lax.dot_general(
        q.astype(jnp.bfloat16), k.astype(jnp.bfloat16),
        dimension_numbers=(((1,), (1,)), ((), ())),
        preferred_element_type=jnp.float32)


def _layernorm(x, g, b):
    mu = jnp.mean(x, axis=-1, keepdims=True)
    xc = x - mu
    var = jnp.mean(xc * xc, axis=-1, keepdims=True)
    return xc * jax.lax.rsqrt(var + 1e-12) * g + b


def _gelu(x):
    # TODO(synk): HuggingFace BERT's default 'gelu' is the exact erf form; tanh approx used here.
    c = math.sqrt(2.0 / math.pi)
    return 0.5 * x * (1.0 + jnp.tanh(c * (x + 0.044715 * x * x * x)))


# ----------------------------- fused kernel (single grid step) -----------------------------

def _fused_kernel(
    x_emb_ref, addmask_ref, emb_g_ref, emb_b_ref,
    wq_ref, wk_ref, wv_ref, bq_ref, bk_ref, bv_ref,
    wo_ref, bo_ref, ln1g_ref, ln1b_ref,
    w1_ref, b1_ref, w2_ref, b2_ref, ln2g_ref, ln2b_ref,
    clsw_ref, clsb_ref,
    out_ref,
    *, L, heads, scale):

    # Embedding LayerNorm (no-residual path).
    x = _layernorm(x_emb_ref[...], emb_g_ref[...], emb_b_ref[...])   # (M, H) f32

    # Precomputed block-diagonal + padding additive mask over the flat (B*S) rows.
    addmask = addmask_ref[...]                                       # (M, M) f32

    for l in range(L):                      # static unroll: all weights VMEM-resident
        # ---- multi-head self-attention over all B*S rows at once ----
        acc = None
        for h in range(heads):              # static unroll over heads (head-major weights)
            q = _mxu(x, wq_ref[l, h]) + bq_ref[l, h]          # (M, dh)
            k = _mxu(x, wk_ref[l, h]) + bk_ref[l, h]          # (M, dh)
            v = _mxu(x, wv_ref[l, h]) + bv_ref[l, h]          # (M, dh)
            s = _mxu_qkt(q, k) * scale + addmask              # (M, M)
            s = s - jnp.max(s, axis=-1, keepdims=True)
            p = jnp.exp(s)
            p = p * pl.reciprocal(jnp.sum(p, axis=-1, keepdims=True), approx=True)
            ctx = _mxu(p, v)                                  # (M, dh)
            part = _mxu(ctx, wo_ref[l, h])                    # (M, H): head block of Wo
            acc = part if acc is None else acc + part
        attn_out = acc + bo_ref[l]
        x = _layernorm(attn_out + x, ln1g_ref[l], ln1b_ref[l])

        # ---- feed-forward ----
        hmid = _gelu(_mxu(x, w1_ref[l]) + b1_ref[l])
        ffn = _mxu(hmid, w2_ref[l]) + b2_ref[l]
        x = _layernorm(ffn + x, ln2g_ref[l], ln2b_ref[l])

    # ---- NER classifier head, lane-dense 128-wide output ----
    out_ref[...] = _mxu(x, clsw_ref[...]) + clsb_ref[...]


# ----------------------------- pallas_call wrapper -----------------------------

def _full(shape):
    nd = len(shape)
    return pl.BlockSpec(shape, lambda *_: (0,) * nd)


def fused_encoder_classifier(x_emb, add_mask, params, cfg):
    M, H = x_emb.shape
    heads = cfg["heads"]
    dh = H // heads
    I = cfg["intermediate"]
    L = cfg["layers"]
    C_pad = params["cls_w_pad"].shape[1]

    kernel = functools.partial(_fused_kernel, L=L, heads=heads,
                               scale=1.0 / math.sqrt(dh))

    return pl.pallas_call(
        kernel,
        out_shape=jax.ShapeDtypeStruct((M, C_pad), jnp.float32),
        grid=(1,),                                   # single step: no pipeline overhead
        in_specs=[
            _full((M, H)),                           # x_emb (pre-LN embedding sum)
            _full((M, M)),                           # block-diagonal additive attention mask
            _full((1, H)), _full((1, H)),            # emb LN gamma/beta
            _full((L, heads, H, dh)),                # wq (bf16, head-major)
            _full((L, heads, H, dh)),                # wk
            _full((L, heads, H, dh)),                # wv
            _full((L, heads, 1, dh)),                # bq
            _full((L, heads, 1, dh)),                # bk
            _full((L, heads, 1, dh)),                # bv
            _full((L, heads, dh, H)),                # wo (head-major row blocks, bf16)
            _full((L, 1, H)),                        # bo
            _full((L, 1, H)), _full((L, 1, H)),      # ln1 gamma/beta
            _full((L, H, I)), _full((L, 1, I)),      # w1 (bf16), b1
            _full((L, I, H)), _full((L, 1, H)),      # w2 (bf16), b2
            _full((L, 1, H)), _full((L, 1, H)),      # ln2 gamma/beta
            _full((H, C_pad)), _full((1, C_pad)),    # cls weight (bf16, padded), bias
        ],
        out_specs=_full((M, C_pad)),
        compiler_params=pltpu.CompilerParams(dimension_semantics=("arbitrary",)),
    )(
        x_emb, add_mask,
        params["emb_ln_g"], params["emb_ln_b"],
        params["wq"], params["wk"], params["wv"],
        params["bq"], params["bk"], params["bv"],
        params["wo"], params["bo"],
        params["ln1_g"], params["ln1_b"],
        params["w1"], params["b1"],
        params["w2"], params["b2"],
        params["ln2_g"], params["ln2_b"],
        params["cls_w_pad"], params["cls_b_pad"],
    )


# ----------------------------- params & forward -----------------------------

def init_params(key, cfg):
    H, I, L = cfg["hidden"], cfg["intermediate"], cfg["layers"]
    heads = cfg["heads"]
    dh = H // heads
    C = cfg["num_classes_sbdh"]

    def normal(k, shape, scale=0.02):
        return scale * jax.random.normal(k, shape, dtype=jnp.float32)

    keys = iter(jax.random.split(key, 16))

    cls_w = normal(next(keys), (H, C))
    cls_w_pad = (jnp.zeros((H, _LANE), jnp.float32).at[:, :C].set(cls_w)
                 ).astype(jnp.bfloat16)
    cls_b_pad = jnp.zeros((1, _LANE), jnp.float32)

    return {
        "word_emb": normal(next(keys), (cfg["vocab_size"], H)),
        "pos_emb": normal(next(keys), (cfg["max_position"], H)),
        "type_emb": normal(next(keys), (cfg["type_vocab"], H)),
        "emb_ln_g": jnp.ones((1, H), jnp.float32),
        "emb_ln_b": jnp.zeros((1, H), jnp.float32),
        # Head-major per-layer attention weights, pre-cast to bf16 (MXU operands).
        "wq": normal(next(keys), (L, heads, H, dh)).astype(jnp.bfloat16),
        "wk": normal(next(keys), (L, heads, H, dh)).astype(jnp.bfloat16),
        "wv": normal(next(keys), (L, heads, H, dh)).astype(jnp.bfloat16),
        "bq": jnp.zeros((L, heads, 1, dh), jnp.float32),
        "bk": jnp.zeros((L, heads, 1, dh), jnp.float32),
        "bv": jnp.zeros((L, heads, 1, dh), jnp.float32),
        "wo": normal(next(keys), (L, heads, dh, H)).astype(jnp.bfloat16),
        "bo": jnp.zeros((L, 1, H), jnp.float32),
        "ln1_g": jnp.ones((L, 1, H), jnp.float32),
        "ln1_b": jnp.zeros((L, 1, H), jnp.float32),
        "w1": normal(next(keys), (L, H, I)).astype(jnp.bfloat16),
        "b1": jnp.zeros((L, 1, I), jnp.float32),
        "w2": normal(next(keys), (L, I, H)).astype(jnp.bfloat16),
        "b2": jnp.zeros((L, 1, H), jnp.float32),
        "ln2_g": jnp.ones((L, 1, H), jnp.float32),
        "ln2_b": jnp.zeros((L, 1, H), jnp.float32),
        "cls_w_pad": cls_w_pad,
        "cls_b_pad": cls_b_pad,
    }


def sbdh_forward(params, input_ids, attention_mask, token_type_ids=None, cfg=CFG):
    B, S = input_ids.shape
    H = cfg["hidden"]
    M = B * S
    if token_type_ids is None:
        token_type_ids = jnp.zeros_like(input_ids)

    # Embedding gathers stay in XLA (data-dependent gather, tiny); everything else is one kernel.
    positions = jnp.arange(S, dtype=jnp.int32)
    x_emb = (params["word_emb"][input_ids]
             + params["pos_emb"][positions][None, :, :]
             + params["type_emb"][token_type_ids]).reshape(M, H)

    # Block-diagonal additive attention mask over the flattened (B*S) rows, built once:
    # 0 where query & key share a batch and the key is not padding; -1e9 otherwise.
    batch_idx = jnp.repeat(jnp.arange(B, dtype=jnp.int32), S)          # (M,)
    key_valid = attention_mask.reshape(M) > 0                          # (M,)
    same_batch = batch_idx[:, None] == batch_idx[None, :]              # (M, M)
    add_mask = jnp.where(same_batch & key_valid[None, :], 0.0, -1e9).astype(jnp.float32)

    logits_pad = fused_encoder_classifier(x_emb, add_mask, params, cfg)   # (M, 128)
    logits_sbdh = logits_pad[:, :cfg["num_classes_sbdh"]].reshape(
        B, S, cfg["num_classes_sbdh"])
    logits_umls = None   # mtl=False, matches the PyTorch forward
    return logits_sbdh, logits_umls


# ----------------------------- main -----------------------------

if __name__ == "__main__":
    key = jax.random.PRNGKey(0)
    pkey, ikey = jax.random.split(key)

    params = init_params(pkey, CFG)

    B, S = 2, 8
    input_ids = jax.random.randint(ikey, (B, S), 0, CFG["vocab_size"], dtype=jnp.int32)
    attention_mask = jnp.ones((B, S), dtype=jnp.int32).at[1, 6:].set(0)  # pad tail of row 1
    token_type_ids = jnp.zeros((B, S), dtype=jnp.int32)

    logits_sbdh, logits_umls = sbdh_forward(params, input_ids, attention_mask, token_type_ids)
    jax.block_until_ready(logits_sbdh)

    assert logits_sbdh.shape == (B, S, CFG["num_classes_sbdh"])
    assert logits_umls is None
    assert bool(jnp.all(jnp.isfinite(logits_sbdh)))
    print("KERNEL_OK")
</pallas_src>

<mosaic_0001>
module attributes {stable_mosaic.version = 11 : i64} {
  func.func @_fused_kernel(%arg0: i32, %arg1: memref<16x32xf32, #tpu.memory_space<vmem>>, %arg2: memref<16x16xf32, #tpu.memory_space<vmem>>, %arg3: memref<1x32xf32, #tpu.memory_space<vmem>>, %arg4: memref<1x32xf32, #tpu.memory_space<vmem>>, %arg5: memref<2x2x32x16xbf16, #tpu.memory_space<vmem>>, %arg6: memref<2x2x32x16xbf16, #tpu.memory_space<vmem>>, %arg7: memref<2x2x32x16xbf16, #tpu.memory_space<vmem>>, %arg8: memref<2x2x1x16xf32, #tpu.memory_space<vmem>>, %arg9: memref<2x2x1x16xf32, #tpu.memory_space<vmem>>, %arg10: memref<2x2x1x16xf32, #tpu.memory_space<vmem>>, %arg11: memref<2x2x16x32xbf16, #tpu.memory_space<vmem>>, %arg12: memref<2x1x32xf32, #tpu.memory_space<vmem>>, %arg13: memref<2x1x32xf32, #tpu.memory_space<vmem>>, %arg14: memref<2x1x32xf32, #tpu.memory_space<vmem>>, %arg15: memref<2x32x64xbf16, #tpu.memory_space<vmem>>, %arg16: memref<2x1x64xf32, #tpu.memory_space<vmem>>, %arg17: memref<2x64x32xbf16, #tpu.memory_space<vmem>>, %arg18: memref<2x1x32xf32, #tpu.memory_space<vmem>>, %arg19: memref<2x1x32xf32, #tpu.memory_space<vmem>>, %arg20: memref<2x1x32xf32, #tpu.memory_space<vmem>>, %arg21: memref<32x128xbf16, #tpu.memory_space<vmem>>, %arg22: memref<1x128xf32, #tpu.memory_space<vmem>>, %arg23: memref<16x128xf32, #tpu.memory_space<vmem>>) attributes {dimension_semantics = [#tpu.dimension_semantics<arbitrary>], iteration_bounds = array<i64: 1>, scalar_prefetch = 0 : i64, scratch_operands = 0 : i64, tpu.core_type = #tpu.core_type<tc>, window_params = [{pipeline_mode = #tpu.pipeline_mode<synchronous>, transform_indices = @transform_0, window_bounds = array<i64: 16, 32>}, {pipeline_mode = #tpu.pipeline_mode<synchronous>, transform_indices = @transform_1, window_bounds = array<i64: 16, 16>}, {pipeline_mode = #tpu.pipeline_mode<synchronous>, transform_indices = @transform_2, window_bounds = array<i64: 1, 32>}, {pipeline_mode = #tpu.pipeline_mode<synchronous>, transform_indices = @transform_3, window_bounds = array<i64: 1, 32>}, {pipeline_mode = #tpu.pipeline_mode<synchronous>, transform_indices = @transform_4, window_bounds = array<i64: 2, 2, 32, 16>}, {pipeline_mode = #tpu.pipeline_mode<synchronous>, transform_indices = @transform_5, window_bounds = array<i64: 2, 2, 32, 16>}, {pipeline_mode = #tpu.pipeline_mode<synchronous>, transform_indices = @transform_6, window_bounds = array<i64: 2, 2, 32, 16>}, {pipeline_mode = #tpu.pipeline_mode<synchronous>, transform_indices = @transform_7, window_bounds = array<i64: 2, 2, 1, 16>}, {pipeline_mode = #tpu.pipeline_mode<synchronous>, transform_indices = @transform_8, window_bounds = array<i64: 2, 2, 1, 16>}, {pipeline_mode = #tpu.pipeline_mode<synchronous>, transform_indices = @transform_9, window_bounds = array<i64: 2, 2, 1, 16>}, {pipeline_mode = #tpu.pipeline_mode<synchronous>, transform_indices = @transform_10, window_bounds = array<i64: 2, 2, 16, 32>}, {pipeline_mode = #tpu.pipeline_mode<synchronous>, transform_indices = @transform_11, window_bounds = array<i64: 2, 1, 32>}, {pipeline_mode = #tpu.pipeline_mode<synchronous>, transform_indices = @transform_12, window_bounds = array<i64: 2, 1, 32>}, {pipeline_mode = #tpu.pipeline_mode<synchronous>, transform_indices = @transform_13, window_bounds = array<i64: 2, 1, 32>}, {pipeline_mode = #tpu.pipeline_mode<synchronous>, transform_indices = @transform_14, window_bounds = array<i64: 2, 32, 64>}, {pipeline_mode = #tpu.pipeline_mode<synchronous>, transform_indices = @transform_15, window_bounds = array<i64: 2, 1, 64>}, {pipeline_mode = #tpu.pipeline_mode<synchronous>, transform_indices = @transform_16, window_bounds = array<i64: 2, 64, 32>}, {pipeline_mode = #tpu.pipeline_mode<synchronous>, transform_indices = @transform_17, window_bounds = array<i64: 2, 1, 32>}, {pipeline_mode = #tpu.pipeline_mode<synchronous>, transform_indices = @transform_18, window_bounds = array<i64: 2, 1, 32>}, {pipeline_mode = #tpu.pipeline_mode<synchronous>, transform_indices = @transform_19, window_bounds = array<i64: 2, 1, 32>}, {pipeline_mode = #tpu.pipeline_mode<synchronous>, transform_indices = @transform_20, window_bounds = array<i64: 32, 128>}, {pipeline_mode = #tpu.pipeline_mode<synchronous>, transform_indices = @transform_21, window_bounds = array<i64: 1, 128>}, {pipeline_mode = #tpu.pipeline_mode<synchronous>, transform_indices = @transform_22, window_bounds = array<i64: 16, 128>}]} {
    %c0 = arith.constant 0 : index
    %c0_0 = arith.constant 0 : index
    %0 = vector.load %arg1[%c0, %c0_0] : memref<16x32xf32, #tpu.memory_space<vmem>>, vector<16x32xf32>
    %c0_1 = arith.constant 0 : index
    %c0_2 = arith.constant 0 : index
    %1 = vector.load %arg3[%c0_1, %c0_2] : memref<1x32xf32, #tpu.memory_space<vmem>>, vector<1x32xf32>
    %c0_3 = arith.constant 0 : index
    %c0_4 = arith.constant 0 : index
    %2 = vector.load %arg4[%c0_3, %c0_4] : memref<1x32xf32, #tpu.memory_space<vmem>>, vector<1x32xf32>
    %cst = arith.constant dense<0.000000e+00> : vector<16xf32>
    %3 = vector.multi_reduction <add>, %0, %cst [1] : vector<16x32xf32> to vector<16xf32>
    %4 = vector.shape_cast %3 : vector<16xf32> to vector<16x1xf32>
    %cst_5 = arith.constant 3.200000e+01 : f32
    %5 = vector.broadcast %cst_5 : f32 to vector<16x1xf32>
    %6 = arith.divf %4, %5 : vector<16x1xf32>
    %7 = vector.broadcast %6 : vector<16x1xf32> to vector<16x32xf32>
    %8 = arith.subf %0, %7 : vector<16x32xf32>
    %9 = arith.mulf %8, %8 : vector<16x32xf32>
    %cst_6 = arith.constant dense<0.000000e+00> : vector<16xf32>
    %10 = vector.multi_reduction <add>, %9, %cst_6 [1] : vector<16x32xf32> to vector<16xf32>
    %11 = vector.shape_cast %10 : vector<16xf32> to vector<16x1xf32>
    %cst_7 = arith.constant 3.200000e+01 : f32
    %12 = vector.broadcast %cst_7 : f32 to vector<16x1xf32>
    %13 = arith.divf %11, %12 : vector<16x1xf32>
    %cst_8 = arith.constant 9.99999996E-13 : f32
    %14 = vector.broadcast %cst_8 : f32 to vector<16x1xf32>
    %15 = arith.addf %13, %14 : vector<16x1xf32>
    %16 = math.rsqrt %15 : vector<16x1xf32>
    %17 = vector.broadcast %16 : vector<16x1xf32> to vector<16x32xf32>
    %18 = arith.mulf %8, %17 : vector<16x32xf32>
    %19 = vector.broadcast %1 : vector<1x32xf32> to vector<16x32xf32>
    %20 = arith.mulf %18, %19 : vector<16x32xf32>
    %21 = vector.broadcast %2 : vector<1x32xf32> to vector<16x32xf32>
    %22 = arith.addf %20, %21 : vector<16x32xf32>
    %c0_9 = arith.constant 0 : index
    %c0_10 = arith.constant 0 : index
    %23 = vector.load %arg2[%c0_9, %c0_10] : memref<16x16xf32, #tpu.memory_space<vmem>>, vector<16x16xf32>
    %c0_11 = arith.constant 0 : index
    %c0_12 = arith.constant 0 : index
    %c0_13 = arith.constant 0 : index
    %c0_14 = arith.constant 0 : index
    %24 = vector.load %arg5[%c0_11, %c0_12, %c0_13, %c0_14] : memref<2x2x32x16xbf16, #tpu.memory_space<vmem>>, vector<1x1x32x16xbf16>
    %25 = vector.shape_cast %24 : vector<1x1x32x16xbf16> to vector<32x16xbf16>
    %26 = arith.truncf %22 : vector<16x32xf32> to vector<16x32xbf16>
    %cst_15 = arith.constant dense<0.000000e+00> : vector<16x16xf32>
    %27 = tpu.matmul %26, %25, %cst_15 {dimension_numbers = #tpu.dot_dimension_numbers<[1], [0], [0], [1], [0, 0, 1, 1], [], []>} : vector<16x32xbf16>, vector<32x16xbf16>, vector<16x16xf32> -> vector<16x16xf32>
    %c0_16 = arith.constant 0 : index
    %c0_17 = arith.constant 0 : index
    %c0_18 = arith.constant 0 : index
    %c0_19 = arith.constant 0 : index
    %28 = vector.load %arg8[%c0_16, %c0_17, %c0_18, %c0_19] : memref<2x2x1x16xf32, #tpu.memory_space<vmem>>, vector<1x1x1x16xf32>
    %29 = vector.shape_cast %28 : vector<1x1x1x16xf32> to vector<1x16xf32>
    %30 = vector.broadcast %29 : vector<1x16xf32> to vector<16x16xf32>
    %31 = arith.addf %27, %30 : vector<16x16xf32>
    %c0_20 = arith.constant 0 : index
    %c0_21 = arith.constant 0 : index
    %c0_22 = arith.constant 0 : index
    %c0_23 = arith.constant 0 : index
    %32 = vector.load %arg6[%c0_20, %c0_21, %c0_22, %c0_23] : memref<2x2x32x16xbf16, #tpu.memory_space<vmem>>, vector<1x1x32x16xbf16>
    %33 = vector.shape_cast %32 : vector<1x1x32x16xbf16> to vector<32x16xbf16>
    %34 = arith.truncf %22 : vector<16x32xf32> to vector<16x32xbf16>
    %cst_24 = arith.constant dense<0.000000e+00> : vector<16x16xf32>
    %35 = tpu.matmul %34, %33, %cst_24 {dimension_numbers = #tpu.dot_dimension_numbers<[1], [0], [0], [1], [0, 0, 1, 1], [], []>} : vector<16x32xbf16>, vector<32x16xbf16>, vector<16x16xf32> -> vector<16x16xf32>
    %c0_25 = arith.constant 0 : index
    %c0_26 = arith.constant 0 : index
    %c0_27 = arith.constant 0 : index
    %c0_28 = arith.constant 0 : index
    %36 = vector.load %arg9[%c0_25, %c0_26, %c0_27, %c0_28] : memref<2x2x1x16xf32, #tpu.memory_space<vmem>>, vector<1x1x1x16xf32>
    %37 = vector.shape_cast %36 : vector<1x1x1x16xf32> to vector<1x16xf32>
    %38 = vector.broadcast %37 : vector<1x16xf32> to vector<16x16xf32>
    %39 = arith.addf %35, %38 : vector<16x16xf32>
    %c0_29 = arith.constant 0 : index
    %c0_30 = arith.constant 0 : index
    %c0_31 = arith.constant 0 : index
    %c0_32 = arith.constant 0 : index
    %40 = vector.load %arg7[%c0_29, %c0_30, %c0_31, %c0_32] : memref<2x2x32x16xbf16, #tpu.memory_space<vmem>>, vector<1x1x32x16xbf16>
    %41 = vector.shape_cast %40 : vector<1x1x32x16xbf16> to vector<32x16xbf16>
    %42 = arith.truncf %22 : vector<16x32xf32> to vector<16x32xbf16>
    %cst_33 = arith.constant dense<0.000000e+00> : vector<16x16xf32>
    %43 = tpu.matmul %42, %41, %cst_33 {dimension_numbers = #tpu.dot_dimension_numbers<[1], [0], [0], [1], [0, 0, 1, 1], [], []>} : vector<16x32xbf16>, vector<32x16xbf16>, vector<16x16xf32> -> vector<16x16xf32>
    %c0_34 = arith.constant 0 : index
    %c0_35 = arith.constant 0 : index
    %c0_36 = arith.constant 0 : index
    %c0_37 = arith.constant 0 : index
    %44 = vector.load %arg10[%c0_34, %c0_35, %c0_36, %c0_37] : memref<2x2x1x16xf32, #tpu.memory_space<vmem>>, vector<1x1x1x16xf32>
    %45 = vector.shape_cast %44 : vector<1x1x1x16xf32> to vector<1x16xf32>
    %46 = vector.broadcast %45 : vector<1x16xf32> to vector<16x16xf32>
    %47 = arith.addf %43, %46 : vector<16x16xf32>
    %48 = arith.truncf %31 : vector<16x16xf32> to vector<16x16xbf16>
    %49 = arith.truncf %39 : vector<16x16xf32> to vector<16x16xbf16>
    %cst_38 = arith.constant dense<0.000000e+00> : vector<16x16xf32>
    %50 = tpu.matmul %48, %49, %cst_38 {dimension_numbers = #tpu.dot_dimension_numbers<[1], [1], [0], [0], [0, 0, 1, 0], [], []>} : vector<16x16xbf16>, vector<16x16xbf16>, vector<16x16xf32> -> vector<16x16xf32>
    %cst_39 = arith.constant 2.500000e-01 : f32
    %51 = vector.broadcast %cst_39 : f32 to vector<16x16xf32>
    %52 = arith.mulf %50, %51 : vector<16x16xf32>
    %53 = arith.addf %52, %23 : vector<16x16xf32>
    %cst_40 = arith.constant dense<0xFF800000> : vector<16xf32>
    %54 = vector.multi_reduction <maximumf>, %53, %cst_40 [1] : vector<16x16xf32> to vector<16xf32>
    %55 = vector.shape_cast %54 : vector<16xf32> to vector<16x1xf32>
    %56 = vector.broadcast %55 : vector<16x1xf32> to vector<16x16xf32>
    %57 = arith.subf %53, %56 : vector<16x16xf32>
    %58 = math.exp %57 : vector<16x16xf32>
    %cst_41 = arith.constant dense<0.000000e+00> : vector<16xf32>
    %59 = vector.multi_reduction <add>, %58, %cst_41 [1] : vector<16x16xf32> to vector<16xf32>
    %60 = vector.shape_cast %59 : vector<16xf32> to vector<16x1xf32>
    %61 = tpu.reciprocal %60 {approx = true} : vector<16x1xf32> -> vector<16x1xf32>
    %62 = vector.broadcast %61 : vector<16x1xf32> to vector<16x16xf32>
    %63 = arith.mulf %58, %62 : vector<16x16xf32>
    %64 = arith.truncf %63 : vector<16x16xf32> to vector<16x16xbf16>
    %65 = arith.truncf %47 : vector<16x16xf32> to vector<16x16xbf16>
    %cst_42 = arith.constant dense<0.000000e+00> : vector<16x16xf32>
    %66 = tpu.matmul %64, %65, %cst_42 {dimension_numbers = #tpu.dot_dimension_numbers<[1], [0], [0], [1], [0, 0, 1, 1], [], []>} : vector<16x16xbf16>, vector<16x16xbf16>, vector<16x16xf32> -> vector<16x16xf32>
    %c0_43 = arith.constant 0 : index
    %c0_44 = arith.constant 0 : index
    %c0_45 = arith.constant 0 : index
    %c0_46 = arith.constant 0 : index
    %67 = vector.load %arg11[%c0_43, %c0_44, %c0_45, %c0_46] : memref<2x2x16x32xbf16, #tpu.memory_space<vmem>>, vector<1x1x16x32xbf16>
    %68 = vector.shape_cast %67 : vector<1x1x16x32xbf16> to vector<16x32xbf16>
    %69 = arith.truncf %66 : vector<16x16xf32> to vector<16x16xbf16>
    %cst_47 = arith.constant dense<0.000000e+00> : vector<16x32xf32>
    %70 = tpu.matmul %69, %68, %cst_47 {dimension_numbers = #tpu.dot_dimension_numbers<[1], [0], [0], [1], [0, 0, 1, 1], [], []>} : vector<16x16xbf16>, vector<16x32xbf16>, vector<16x32xf32> -> vector<16x32xf32>
    %c0_48 = arith.constant 0 : index
    %c1 = arith.constant 1 : index
    %c0_49 = arith.constant 0 : index
    %c0_50 = arith.constant 0 : index
    %71 = vector.load %arg5[%c0_48, %c1, %c0_49, %c0_50] : memref<2x2x32x16xbf16, #tpu.memory_space<vmem>>, vector<1x1x32x16xbf16>
    %72 = vector.shape_cast %71 : vector<1x1x32x16xbf16> to vector<32x16xbf16>
    %73 = arith.truncf %22 : vector<16x32xf32> to vector<16x32xbf16>
    %cst_51 = arith.constant dense<0.000000e+00> : vector<16x16xf32>
    %74 = tpu.matmul %73, %72, %cst_51 {dimension_numbers = #tpu.dot_dimension_numbers<[1], [0], [0], [1], [0, 0, 1, 1], [], []>} : vector<16x32xbf16>, vector<32x16xbf16>, vector<16x16xf32> -> vector<16x16xf32>
    %c0_52 = arith.constant 0 : index
    %c1_53 = arith.constant 1 : index
    %c0_54 = arith.constant 0 : index
    %c0_55 = arith.constant 0 : index
    %75 = vector.load %arg8[%c0_52, %c1_53, %c0_54, %c0_55] : memref<2x2x1x16xf32, #tpu.memory_space<vmem>>, vector<1x1x1x16xf32>
    %76 = vector.shape_cast %75 : vector<1x1x1x16xf32> to vector<1x16xf32>
    %77 = vector.broadcast %76 : vector<1x16xf32> to vector<16x16xf32>
    %78 = arith.addf %74, %77 : vector<16x16xf32>
    %c0_56 = arith.constant 0 : index
    %c1_57 = arith.constant 1 : index
    %c0_58 = arith.constant 0 : index
    %c0_59 = arith.constant 0 : index
    %79 = vector.load %arg6[%c0_56, %c1_57, %c0_58, %c0_59] : memref<2x2x32x16xbf16, #tpu.memory_space<vmem>>, vector<1x1x32x16xbf16>
    %80 = vector.shape_cast %79 : vector<1x1x32x16xbf16> to vector<32x16xbf16>
    %81 = arith.truncf %22 : vector<16x32xf32> to vector<16x32xbf16>
    %cst_60 = arith.constant dense<0.000000e+00> : vector<16x16xf32>
    %82 = tpu.matmul %81, %80, %cst_60 {dimension_numbers = #tpu.dot_dimension_numbers<[1], [0], [0], [1], [0, 0, 1, 1], [], []>} : vector<16x32xbf16>, vector<32x16xbf16>, vector<16x16xf32> -> vector<16x16xf32>
    %c0_61 = arith.constant 0 : index
    %c1_62 = arith.constant 1 : index
    %c0_63 = arith.constant 0 : index
    %c0_64 = arith.constant 0 : index
    %83 = vector.load %arg9[%c0_61, %c1_62, %c0_63, %c0_64] : memref<2x2x1x16xf32, #tpu.memory_space<vmem>>, vector<1x1x1x16xf32>
    %84 = vector.shape_cast %83 : vector<1x1x1x16xf32> to vector<1x16xf32>
    %85 = vector.broadcast %84 : vector<1x16xf32> to vector<16x16xf32>
    %86 = arith.addf %82, %85 : vector<16x16xf32>
    %c0_65 = arith.constant 0 : index
    %c1_66 = arith.constant 1 : index
    %c0_67 = arith.constant 0 : index
    %c0_68 = arith.constant 0 : index
    %87 = vector.load %arg7[%c0_65, %c1_66, %c0_67, %c0_68] : memref<2x2x32x16xbf16, #tpu.memory_space<vmem>>, vector<1x1x32x16xbf16>
    %88 = vector.shape_cast %87 : vector<1x1x32x16xbf16> to vector<32x16xbf16>
    %89 = arith.truncf %22 : vector<16x32xf32> to vector<16x32xbf16>
    %cst_69 = arith.constant dense<0.000000e+00> : vector<16x16xf32>
    %90 = tpu.matmul %89, %88, %cst_69 {dimension_numbers = #tpu.dot_dimension_numbers<[1], [0], [0], [1], [0, 0, 1, 1], [], []>} : vector<16x32xbf16>, vector<32x16xbf16>, vector<16x16xf32> -> vector<16x16xf32>
    %c0_70 = arith.constant 0 : index
    %c1_71 = arith.constant 1 : index
    %c0_72 = arith.constant 0 : index
    %c0_73 = arith.constant 0 : index
    %91 = vector.load %arg10[%c0_70, %c1_71, %c0_72, %c0_73] : memref<2x2x1x16xf32, #tpu.memory_space<vmem>>, vector<1x1x1x16xf32>
    %92 = vector.shape_cast %91 : vector<1x1x1x16xf32> to vector<1x16xf32>
    %93 = vector.broadcast %92 : vector<1x16xf32> to vector<16x16xf32>
    %94 = arith.addf %90, %93 : vector<16x16xf32>
    %95 = arith.truncf %78 : vector<16x16xf32> to vector<16x16xbf16>
    %96 = arith.truncf %86 : vector<16x16xf32> to vector<16x16xbf16>
    %cst_74 = arith.constant dense<0.000000e+00> : vector<16x16xf32>
    %97 = tpu.matmul %95, %96, %cst_74 {dimension_numbers = #tpu.dot_dimension_numbers<[1], [1], [0], [0], [0, 0, 1, 0], [], []>} : vector<16x16xbf16>, vector<16x16xbf16>, vector<16x16xf32> -> vector<16x16xf32>
    %cst_75 = arith.constant 2.500000e-01 : f32
    %98 = vector.broadcast %cst_75 : f32 to vector<16x16xf32>
    %99 = arith.mulf %97, %98 : vector<16x16xf32>
    %100 = arith.addf %99, %23 : vector<16x16xf32>
    %cst_76 = arith.constant dense<0xFF800000> : vector<16xf32>
    %101 = vector.multi_reduction <maximumf>, %100, %cst_76 [1] : vector<16x16xf32> to vector<16xf32>
    %102 = vector.shape_cast %101 : vector<16xf32> to vector<16x1xf32>
    %103 = vector.broadcast %102 : vector<16x1xf32> to vector<16x16xf32>
    %104 = arith.subf %100, %103 : vector<16x16xf32>
    %105 = math.exp %104 : vector<16x16xf32>
    %cst_77 = arith.constant dense<0.000000e+00> : vector<16xf32>
    %106 = vector.multi_reduction <add>, %105, %cst_77 [1] : vector<16x16xf32> to vector<16xf32>
    %107 = vector.shape_cast %106 : vector<16xf32> to vector<16x1xf32>
    %108 = tpu.reciprocal %107 {approx = true} : vector<16x1xf32> -> vector<16x1xf32>
    %109 = vector.broadcast %108 : vector<16x1xf32> to vector<16x16xf32>
    %110 = arith.mulf %105, %109 : vector<16x16xf32>
    %111 = arith.truncf %110 : vector<16x16xf32> to vector<16x16xbf16>
    %112 = arith.truncf %94 : vector<16x16xf32> to vector<16x16xbf16>
    %cst_78 = arith.constant dense<0.000000e+00> : vector<16x16xf32>
    %113 = tpu.matmul %111, %112, %cst_78 {dimension_numbers = #tpu.dot_dimension_numbers<[1], [0], [0], [1], [0, 0, 1, 1], [], []>} : vector<16x16xbf16>, vector<16x16xbf16>, vector<16x16xf32> -> vector<16x16xf32>
    %c0_79 = arith.constant 0 : index
    %c1_80 = arith.constant 1 : index
    %c0_81 = arith.constant 0 : index
    %c0_82 = arith.constant 0 : index
    %114 = vector.load %arg11[%c0_79, %c1_80, %c0_81, %c0_82] : memref<2x2x16x32xbf16, #tpu.memory_space<vmem>>, vector<1x1x16x32xbf16>
    %115 = vector.shape_cast %114 : vector<1x1x16x32xbf16> to vector<16x32xbf16>
    %116 = arith.truncf %113 : vector<16x16xf32> to vector<16x16xbf16>
    %cst_83 = arith.constant dense<0.000000e+00> : vector<16x32xf32>
    %117 = tpu.matmul %116, %115, %cst_83 {dimension_numbers = #tpu.dot_dimension_numbers<[1], [0], [0], [1], [0, 0, 1, 1], [], []>} : vector<16x16xbf16>, vector<16x32xbf16>, vector<16x32xf32> -> vector<16x32xf32>
    %118 = arith.addf %70, %117 : vector<16x32xf32>
    %c0_84 = arith.constant 0 : index
    %c0_85 = arith.constant 0 : index
    %c0_86 = arith.constant 0 : index
    %119 = vector.load %arg12[%c0_84, %c0_85, %c0_86] : memref<2x1x32xf32, #tpu.memory_space<vmem>>, vector<1x1x32xf32>
    %120 = vector.shape_cast %119 : vector<1x1x32xf32> to vector<1x32xf32>
    %121 = vector.broadcast %120 : vector<1x32xf32> to vector<16x32xf32>
    %122 = arith.addf %118, %121 : vector<16x32xf32>
    %123 = arith.addf %122, %22 : vector<16x32xf32>
    %c0_87 = arith.constant 0 : index
    %c0_88 = arith.constant 0 : index
    %c0_89 = arith.constant 0 : index
    %124 = vector.load %arg13[%c0_87, %c0_88, %c0_89] : memref<2x1x32xf32, #tpu.memory_space<vmem>>, vector<1x1x32xf32>
    %125 = vector.shape_cast %124 : vector<1x1x32xf32> to vector<1x32xf32>
    %c0_90 = arith.constant 0 : index
    %c0_91 = arith.constant 0 : index
    %c0_92 = arith.constant 0 : index
    %126 = vector.load %arg14[%c0_90, %c0_91, %c0_92] : memref<2x1x32xf32, #tpu.memory_space<vmem>>, vector<1x1x32xf32>
    %127 = vector.shape_cast %126 : vector<1x1x32xf32> to vector<1x32xf32>
    %cst_93 = arith.constant dense<0.000000e+00> : vector<16xf32>
    %128 = vector.multi_reduction <add>, %123, %cst_93 [1] : vector<16x32xf32> to vector<16xf32>
    %129 = vector.shape_cast %128 : vector<16xf32> to vector<16x1xf32>
    %cst_94 = arith.constant 3.200000e+01 : f32
    %130 = vector.broadcast %cst_94 : f32 to vector<16x1xf32>
    %131 = arith.divf %129, %130 : vector<16x1xf32>
    %132 = vector.broadcast %131 : vector<16x1xf32> to vector<16x32xf32>
    %133 = arith.subf %123, %132 : vector<16x32xf32>
    %134 = arith.mulf %133, %133 : vector<16x32xf32>
    %cst_95 = arith.constant dense<0.000000e+00> : vector<16xf32>
    %135 = vector.multi_reduction <add>, %134, %cst_95 [1] : vector<16x32xf32> to vector<16xf32>
    %136 = vector.shape_cast %135 : vector<16xf32> to vector<16x1xf32>
    %cst_96 = arith.constant 3.200000e+01 : f32
    %137 = vector.broadcast %cst_96 : f32 to vector<16x1xf32>
    %138 = arith.divf %136, %137 : vector<16x1xf32>
    %cst_97 = arith.constant 9.99999996E-13 : f32
    %139 = vector.broadcast %cst_97 : f32 to vector<16x1xf32>
    %140 = arith.addf %138, %139 : vector<16x1xf32>
    %141 = math.rsqrt %140 : vector<16x1xf32>
    %142 = vector.broadcast %141 : vector<16x1xf32> to vector<16x32xf32>
    %143 = arith.mulf %133, %142 : vector<16x32xf32>
    %144 = vector.broadcast %125 : vector<1x32xf32> to vector<16x32xf32>
    %145 = arith.mulf %143, %144 : vector<16x32xf32>
    %146 = vector.broadcast %127 : vector<1x32xf32> to vector<16x32xf32>
    %147 = arith.addf %145, %146 : vector<16x32xf32>
    %c0_98 = arith.constant 0 : index
    %c0_99 = arith.constant 0 : index
    %c0_100 = arith.constant 0 : index
    %148 = vector.load %arg15[%c0_98, %c0_99, %c0_100] : memref<2x32x64xbf16, #tpu.memory_space<vmem>>, vector<1x32x64xbf16>
    %149 = vector.shape_cast %148 : vector<1x32x64xbf16> to vector<32x64xbf16>
    %150 = arith.truncf %147 : vector<16x32xf32> to vector<16x32xbf16>
    %cst_101 = arith.constant dense<0.000000e+00> : vector<16x64xf32>
    %151 = tpu.matmul %150, %149, %cst_101 {dimension_numbers = #tpu.dot_dimension_numbers<[1], [0], [0], [1], [0, 0, 1, 1], [], []>} : vector<16x32xbf16>, vector<32x64xbf16>, vector<16x64xf32> -> vector<16x64xf32>
    %c0_102 = arith.constant 0 : index
    %c0_103 = arith.constant 0 : index
    %c0_104 = arith.constant 0 : index
    %152 = vector.load %arg16[%c0_102, %c0_103, %c0_104] : memref<2x1x64xf32, #tpu.memory_space<vmem>>, vector<1x1x64xf32>
    %153 = vector.shape_cast %152 : vector<1x1x64xf32> to vector<1x64xf32>
    %154 = vector.broadcast %153 : vector<1x64xf32> to vector<16x64xf32>
    %155 = arith.addf %151, %154 : vector<16x64xf32>
    %cst_105 = arith.constant 5.000000e-01 : f32
    %156 = vector.broadcast %cst_105 : f32 to vector<16x64xf32>
    %157 = arith.mulf %156, %155 : vector<16x64xf32>
    %cst_106 = arith.constant 4.471500e-02 : f32
    %158 = vector.broadcast %cst_106 : f32 to vector<16x64xf32>
    %159 = arith.mulf %158, %155 : vector<16x64xf32>
    %160 = arith.mulf %159, %155 : vector<16x64xf32>
    %161 = arith.mulf %160, %155 : vector<16x64xf32>
    %162 = arith.addf %155, %161 : vector<16x64xf32>
    %cst_107 = arith.constant 0.797884583 : f32
    %163 = vector.broadcast %cst_107 : f32 to vector<16x64xf32>
    %164 = arith.mulf %163, %162 : vector<16x64xf32>
    %165 = math.tanh %164 : vector<16x64xf32>
    %cst_108 = arith.constant 1.000000e+00 : f32
    %166 = vector.broadcast %cst_108 : f32 to vector<16x64xf32>
    %167 = arith.addf %166, %165 : vector<16x64xf32>
    %168 = arith.mulf %157, %167 : vector<16x64xf32>
    %c0_109 = arith.constant 0 : index
    %c0_110 = arith.constant 0 : index
    %c0_111 = arith.constant 0 : index
    %169 = vector.load %arg17[%c0_109, %c0_110, %c0_111] : memref<2x64x32xbf16, #tpu.memory_space<vmem>>, vector<1x64x32xbf16>
    %170 = vector.shape_cast %169 : vector<1x64x32xbf16> to vector<64x32xbf16>
    %171 = arith.truncf %168 : vector<16x64xf32> to vector<16x64xbf16>
    %cst_112 = arith.constant dense<0.000000e+00> : vector<16x32xf32>
    %172 = tpu.matmul %171, %170, %cst_112 {dimension_numbers = #tpu.dot_dimension_numbers<[1], [0], [0], [1], [0, 0, 1, 1], [], []>} : vector<16x64xbf16>, vector<64x32xbf16>, vector<16x32xf32> -> vector<16x32xf32>
    %c0_113 = arith.constant 0 : index
    %c0_114 = arith.constant 0 : index
    %c0_115 = arith.constant 0 : index
    %173 = vector.load %arg18[%c0_113, %c0_114, %c0_115] : memref<2x1x32xf32, #tpu.memory_space<vmem>>, vector<1x1x32xf32>
    %174 = vector.shape_cast %173 : vector<1x1x32xf32> to vector<1x32xf32>
    %175 = vector.broadcast %174 : vector<1x32xf32> to vector<16x32xf32>
    %176 = arith.addf %172, %175 : vector<16x32xf32>
    %177 = arith.addf %176, %147 : vector<16x32xf32>
    %c0_116 = arith.constant 0 : index
    %c0_117 = arith.constant 0 : index
    %c0_118 = arith.constant 0 : index
    %178 = vector.load %arg19[%c0_116, %c0_117, %c0_118] : memref<2x1x32xf32, #tpu.memory_space<vmem>>, vector<1x1x32xf32>
    %179 = vector.shape_cast %178 : vector<1x1x32xf32> to vector<1x32xf32>
    %c0_119 = arith.constant 0 : index
    %c0_120 = arith.constant 0 : index
    %c0_121 = arith.constant 0 : index
    %180 = vector.load %arg20[%c0_119, %c0_120, %c0_121] : memref<2x1x32xf32, #tpu.memory_space<vmem>>, vector<1x1x32xf32>
    %181 = vector.shape_cast %180 : vector<1x1x32xf32> to vector<1x32xf32>
    %cst_122 = arith.constant dense<0.000000e+00> : vector<16xf32>
    %182 = vector.multi_reduction <add>, %177, %cst_122 [1] : vector<16x32xf32> to vector<16xf32>
    %183 = vector.shape_cast %182 : vector<16xf32> to vector<16x1xf32>
    %cst_123 = arith.constant 3.200000e+01 : f32
    %184 = vector.broadcast %cst_123 : f32 to vector<16x1xf32>
    %185 = arith.divf %183, %184 : vector<16x1xf32>
    %186 = vector.broadcast %185 : vector<16x1xf32> to vector<16x32xf32>
    %187 = arith.subf %177, %186 : vector<16x32xf32>
    %188 = arith.mulf %187, %187 : vector<16x32xf32>
    %cst_124 = arith.constant dense<0.000000e+00> : vector<16xf32>
    %189 = vector.multi_reduction <add>, %188, %cst_124 [1] : vector<16x32xf32> to vector<16xf32>
    %190 = vector.shape_cast %189 : vector<16xf32> to vector<16x1xf32>
    %cst_125 = arith.constant 3.200000e+01 : f32
    %191 = vector.broadcast %cst_125 : f32 to vector<16x1xf32>
    %192 = arith.divf %190, %191 : vector<16x1xf32>
    %cst_126 = arith.constant 9.99999996E-13 : f32
    %193 = vector.broadcast %cst_126 : f32 to vector<16x1xf32>
    %194 = arith.addf %192, %193 : vector<16x1xf32>
    %195 = math.rsqrt %194 : vector<16x1xf32>
    %196 = vector.broadcast %195 : vector<16x1xf32> to vector<16x32xf32>
    %197 = arith.mulf %187, %196 : vector<16x32xf32>
    %198 = vector.broadcast %179 : vector<1x32xf32> to vector<16x32xf32>
    %199 = arith.mulf %197, %198 : vector<16x32xf32>
    %200 = vector.broadcast %181 : vector<1x32xf32> to vector<16x32xf32>
    %201 = arith.addf %199, %200 : vector<16x32xf32>
    %c1_127 = arith.constant 1 : index
    %c0_128 = arith.constant 0 : index
    %c0_129 = arith.constant 0 : index
    %c0_130 = arith.constant 0 : index
    %202 = vector.load %arg5[%c1_127, %c0_128, %c0_129, %c0_130] : memref<2x2x32x16xbf16, #tpu.memory_space<vmem>>, vector<1x1x32x16xbf16>
    %203 = vector.shape_cast %202 : vector<1x1x32x16xbf16> to vector<32x16xbf16>
    %204 = arith.truncf %201 : vector<16x32xf32> to vector<16x32xbf16>
    %cst_131 = arith.constant dense<0.000000e+00> : vector<16x16xf32>
    %205 = tpu.matmul %204, %203, %cst_131 {dimension_numbers = #tpu.dot_dimension_numbers<[1], [0], [0], [1], [0, 0, 1, 1], [], []>} : vector<16x32xbf16>, vector<32x16xbf16>, vector<16x16xf32> -> vector<16x16xf32>
    %c1_132 = arith.constant 1 : index
    %c0_133 = arith.constant 0 : index
    %c0_134 = arith.constant 0 : index
    %c0_135 = arith.constant 0 : index
    %206 = vector.load %arg8[%c1_132, %c0_133, %c0_134, %c0_135] : memref<2x2x1x16xf32, #tpu.memory_space<vmem>>, vector<1x1x1x16xf32>
    %207 = vector.shape_cast %206 : vector<1x1x1x16xf32> to vector<1x16xf32>
    %208 = vector.broadcast %207 : vector<1x16xf32> to vector<16x16xf32>
    %209 = arith.addf %205, %208 : vector<16x16xf32>
    %c1_136 = arith.constant 1 : index
    %c0_137 = arith.constant 0 : index
    %c0_138 = arith.constant 0 : index
    %c0_139 = arith.constant 0 : index
    %210 = vector.load %arg6[%c1_136, %c0_137, %c0_138, %c0_139] : memref<2x2x32x16xbf16, #tpu.memory_space<vmem>>, vector<1x1x32x16xbf16>
    %211 = vector.shape_cast %210 : vector<1x1x32x16xbf16> to vector<32x16xbf16>
    %212 = arith.truncf %201 : vector<16x32xf32> to vector<16x32xbf16>
    %cst_140 = arith.constant dense<0.000000e+00> : vector<16x16xf32>
    %213 = tpu.matmul %212, %211, %cst_140 {dimension_numbers = #tpu.dot_dimension_numbers<[1], [0], [0], [1], [0, 0, 1, 1], [], []>} : vector<16x32xbf16>, vector<32x16xbf16>, vector<16x16xf32> -> vector<16x16xf32>
    %c1_141 = arith.constant 1 : index
    %c0_142 = arith.constant 0 : index
    %c0_143 = arith.constant 0 : index
    %c0_144 = arith.constant 0 : index
    %214 = vector.load %arg9[%c1_141, %c0_142, %c0_143, %c0_144] : memref<2x2x1x16xf32, #tpu.memory_space<vmem>>, vector<1x1x1x16xf32>
    %215 = vector.shape_cast %214 : vector<1x1x1x16xf32> to vector<1x16xf32>
    %216 = vector.broadcast %215 : vector<1x16xf32> to vector<16x16xf32>
    %217 = arith.addf %213, %216 : vector<16x16xf32>
    %c1_145 = arith.constant 1 : index
    %c0_146 = arith.constant 0 : index
    %c0_147 = arith.constant 0 : index
    %c0_148 = arith.constant 0 : index
    %218 = vector.load %arg7[%c1_145, %c0_146, %c0_147, %c0_148] : memref<2x2x32x16xbf16, #tpu.memory_space<vmem>>, vector<1x1x32x16xbf16>
    %219 = vector.shape_cast %218 : vector<1x1x32x16xbf16> to vector<32x16xbf16>
    %220 = arith.truncf %201 : vector<16x32xf32> to vector<16x32xbf16>
    %cst_149 = arith.constant dense<0.000000e+00> : vector<16x16xf32>
    %221 = tpu.matmul %220, %219, %cst_149 {dimension_numbers = #tpu.dot_dimension_numbers<[1], [0], [0], [1], [0, 0, 1, 1], [], []>} : vector<16x32xbf16>, vector<32x16xbf16>, vector<16x16xf32> -> vector<16x16xf32>
    %c1_150 = arith.constant 1 : index
    %c0_151 = arith.constant 0 : index
    %c0_152 = arith.constant 0 : index
    %c0_153 = arith.constant 0 : index
    %222 = vector.load %arg10[%c1_150, %c0_151, %c0_152, %c0_153] : memref<2x2x1x16xf32, #tpu.memory_space<vmem>>, vector<1x1x1x16xf32>
    %223 = vector.shape_cast %222 : vector<1x1x1x16xf32> to vector<1x16xf32>
    %224 = vector.broadcast %223 : vector<1x16xf32> to vector<16x16xf32>
    %225 = arith.addf %221, %224 : vector<16x16xf32>
    %226 = arith.truncf %209 : vector<16x16xf32> to vector<16x16xbf16>
    %227 = arith.truncf %217 : vector<16x16xf32> to vector<16x16xbf16>
    %cst_154 = arith.constant dense<0.000000e+00> : vector<16x16xf32>
    %228 = tpu.matmul %226, %227, %cst_154 {dimension_numbers = #tpu.dot_dimension_numbers<[1], [1], [0], [0], [0, 0, 1, 0], [], []>} : vector<16x16xbf16>, vector<16x16xbf16>, vector<16x16xf32> -> vector<16x16xf32>
    %cst_155 = arith.constant 2.500000e-01 : f32
    %229 = vector.broadcast %cst_155 : f32 to vector<16x16xf32>
    %230 = arith.mulf %228, %229 : vector<16x16xf32>
    %231 = arith.addf %230, %23 : vector<16x16xf32>
    %cst_156 = arith.constant dense<0xFF800000> : vector<16xf32>
    %232 = vector.multi_reduction <maximumf>, %231, %cst_156 [1] : vector<16x16xf32> to vector<16xf32>
    %233 = vector.shape_cast %232 : vector<16xf32> to vector<16x1xf32>
    %234 = vector.broadcast %233 : vector<16x1xf32> to vector<16x16xf32>
    %235 = arith.subf %231, %234 : vector<16x16xf32>
    %236 = math.exp %235 : vector<16x16xf32>
    %cst_157 = arith.constant dense<0.000000e+00> : vector<16xf32>
    %237 = vector.multi_reduction <add>, %236, %cst_157 [1] : vector<16x16xf32> to vector<16xf32>
    %238 = vector.shape_cast %237 : vector<16xf32> to vector<16x1xf32>
    %239 = tpu.reciprocal %238 {approx = true} : vector<16x1xf32> -> vector<16x1xf32>
    %240 = vector.broadcast %239 : vector<16x1xf32> to vector<16x16xf32>
    %241 = arith.mulf %236, %240 : vector<16x16xf32>
    %242 = arith.truncf %241 : vector<16x16xf32> to vector<16x16xbf16>
    %243 = arith.truncf %225 : vector<16x16xf32> to vector<16x16xbf16>
    %cst_158 = arith.constant dense<0.000000e+00> : vector<16x16xf32>
    %244 = tpu.matmul %242, %243, %cst_158 {dimension_numbers = #tpu.dot_dimension_numbers<[1], [0], [0], [1], [0, 0, 1, 1], [], []>} : vector<16x16xbf16>, vector<16x16xbf16>, vector<16x16xf32> -> vector<16x16xf32>
    %c1_159 = arith.constant 1 : index
    %c0_160 = arith.constant 0 : index
    %c0_161 = arith.constant 0 : index
    %c0_162 = arith.constant 0 : index
    %245 = vector.load %arg11[%c1_159, %c0_160, %c0_161, %c0_162] : memref<2x2x16x32xbf16, #tpu.memory_space<vmem>>, vector<1x1x16x32xbf16>
    %246 = vector.shape_cast %245 : vector<1x1x16x32xbf16> to vector<16x32xbf16>
    %247 = arith.truncf %244 : vector<16x16xf32> to vector<16x16xbf16>
    %cst_163 = arith.constant dense<0.000000e+00> : vector<16x32xf32>
    %248 = tpu.matmul %247, %246, %cst_163 {dimension_numbers = #tpu.dot_dimension_numbers<[1], [0], [0], [1], [0, 0, 1, 1], [], []>} : vector<16x16xbf16>, vector<16x32xbf16>, vector<16x32xf32> -> vector<16x32xf32>
    %c1_164 = arith.constant 1 : index
    %c1_165 = arith.constant 1 : index
    %c0_166 = arith.constant 0 : index
    %c0_167 = arith.constant 0 : index
    %249 = vector.load %arg5[%c1_164, %c1_165, %c0_166, %c0_167] : memref<2x2x32x16xbf16, #tpu.memory_space<vmem>>, vector<1x1x32x16xbf16>
    %250 = vector.shape_cast %249 : vector<1x1x32x16xbf16> to vector<32x16xbf16>
    %251 = arith.truncf %201 : vector<16x32xf32> to vector<16x32xbf16>
    %cst_168 = arith.constant dense<0.000000e+00> : vector<16x16xf32>
    %252 = tpu.matmul %251, %250, %cst_168 {dimension_numbers = #tpu.dot_dimension_numbers<[1], [0], [0], [1], [0, 0, 1, 1], [], []>} : vector<16x32xbf16>, vector<32x16xbf16>, vector<16x16xf32> -> vector<16x16xf32>
    %c1_169 = arith.constant 1 : index
    %c1_170 = arith.constant 1 : index
    %c0_171 = arith.constant 0 : index
    %c0_172 = arith.constant 0 : index
    %253 = vector.load %arg8[%c1_169, %c1_170, %c0_171, %c0_172] : memref<2x2x1x16xf32, #tpu.memory_space<vmem>>, vector<1x1x1x16xf32>
    %254 = vector.shape_cast %253 : vector<1x1x1x16xf32> to vector<1x16xf32>
    %255 = vector.broadcast %254 : vector<1x16xf32> to vector<16x16xf32>
    %256 = arith.addf %252, %255 : vector<16x16xf32>
    %c1_173 = arith.constant 1 : index
    %c1_174 = arith.constant 1 : index
    %c0_175 = arith.constant 0 : index
    %c0_176 = arith.constant 0 : index
    %257 = vector.load %arg6[%c1_173, %c1_174, %c0_175, %c0_176] : memref<2x2x32x16xbf16, #tpu.memory_space<vmem>>, vector<1x1x32x16xbf16>
    %258 = vector.shape_cast %257 : vector<1x1x32x16xbf16> to vector<32x16xbf16>
    %259 = arith.truncf %201 : vector<16x32xf32> to vector<16x32xbf16>
    %cst_177 = arith.constant dense<0.000000e+00> : vector<16x16xf32>
    %260 = tpu.matmul %259, %258, %cst_177 {dimension_numbers = #tpu.dot_dimension_numbers<[1], [0], [0], [1], [0, 0, 1, 1], [], []>} : vector<16x32xbf16>, vector<32x16xbf16>, vector<16x16xf32> -> vector<16x16xf32>
    %c1_178 = arith.constant 1 : index
    %c1_179 = arith.constant 1 : index
    %c0_180 = arith.constant 0 : index
    %c0_181 = arith.constant 0 : index
    %261 = vector.load %arg9[%c1_178, %c1_179, %c0_180, %c0_181] : memref<2x2x1x16xf32, #tpu.memory_space<vmem>>, vector<1x1x1x16xf32>
    %262 = vector.shape_cast %261 : vector<1x1x1x16xf32> to vector<1x16xf32>
    %263 = vector.broadcast %262 : vector<1x16xf32> to vector<16x16xf32>
    %264 = arith.addf %260, %263 : vector<16x16xf32>
    %c1_182 = arith.constant 1 : index
    %c1_183 = arith.constant 1 : index
    %c0_184 = arith.constant 0 : index
    %c0_185 = arith.constant 0 : index
    %265 = vector.load %arg7[%c1_182, %c1_183, %c0_184, %c0_185] : memref<2x2x32x16xbf16, #tpu.memory_space<vmem>>, vector<1x1x32x16xbf16>
    %266 = vector.shape_cast %265 : vector<1x1x32x16xbf16> to vector<32x16xbf16>
    %267 = arith.truncf %201 : vector<16x32xf32> to vector<16x32xbf16>
    %cst_186 = arith.constant dense<0.000000e+00> : vector<16x16xf32>
    %268 = tpu.matmul %267, %266, %cst_186 {dimension_numbers = #tpu.dot_dimension_numbers<[1], [0], [0], [1], [0, 0, 1, 1], [], []>} : vector<16x32xbf16>, vector<32x16xbf16>, vector<16x16xf32> -> vector<16x16xf32>
    %c1_187 = arith.constant 1 : index
    %c1_188 = arith.constant 1 : index
    %c0_189 = arith.constant 0 : index
    %c0_190 = arith.constant 0 : index
    %269 = vector.load %arg10[%c1_187, %c1_188, %c0_189, %c0_190] : memref<2x2x1x16xf32, #tpu.memory_space<vmem>>, vector<1x1x1x16xf32>
    %270 = vector.shape_cast %269 : vector<1x1x1x16xf32> to vector<1x16xf32>
    %271 = vector.broadcast %270 : vector<1x16xf32> to vector<16x16xf32>
    %272 = arith.addf %268, %271 : vector<16x16xf32>
    %273 = arith.truncf %256 : vector<16x16xf32> to vector<16x16xbf16>
    %274 = arith.truncf %264 : vector<16x16xf32> to vector<16x16xbf16>
    %cst_191 = arith.constant dense<0.000000e+00> : vector<16x16xf32>
    %275 = tpu.matmul %273, %274, %cst_191 {dimension_numbers = #tpu.dot_dimension_numbers<[1], [1], [0], [0], [0, 0, 1, 0], [], []>} : vector<16x16xbf16>, vector<16x16xbf16>, vector<16x16xf32> -> vector<16x16xf32>
    %cst_192 = arith.constant 2.500000e-01 : f32
    %276 = vector.broadcast %cst_192 : f32 to vector<16x16xf32>
    %277 = arith.mulf %275, %276 : vector<16x16xf32>
    %278 = arith.addf %277, %23 : vector<16x16xf32>
    %cst_193 = arith.constant dense<0xFF800000> : vector<16xf32>
    %279 = vector.multi_reduction <maximumf>, %278, %cst_193 [1] : vector<16x16xf32> to vector<16xf32>
    %280 = vector.shape_cast %279 : vector<16xf32> to vector<16x1xf32>
    %281 = vector.broadcast %280 : vector<16x1xf32> to vector<16x16xf32>
    %282 = arith.subf %278, %281 : vector<16x16xf32>
    %283 = math.exp %282 : vector<16x16xf32>
    %cst_194 = arith.constant dense<0.000000e+00> : vector<16xf32>
    %284 = vector.multi_reduction <add>, %283, %cst_194 [1] : vector<16x16xf32> to vector<16xf32>
    %285 = vector.shape_cast %284 : vector<16xf32> to vector<16x1xf32>
    %286 = tpu.reciprocal %285 {approx = true} : vector<16x1xf32> -> vector<16x1xf32>
    %287 = vector.broadcast %286 : vector<16x1xf32> to vector<16x16xf32>
    %288 = arith.mulf %283, %287 : vector<16x16xf32>
    %289 = arith.truncf %288 : vector<16x16xf32> to vector<16x16xbf16>
    %290 = arith.truncf %272 : vector<16x16xf32> to vector<16x16xbf16>
    %cst_195 = arith.constant dense<0.000000e+00> : vector<16x16xf32>
    %291 = tpu.matmul %289, %290, %cst_195 {dimension_numbers = #tpu.dot_dimension_numbers<[1], [0], [0], [1], [0, 0, 1, 1], [], []>} : vector<16x16xbf16>, vector<16x16xbf16>, vector<16x16xf32> -> vector<16x16xf32>
    %c1_196 = arith.constant 1 : index
    %c1_197 = arith.constant 1 : index
    %c0_198 = arith.constant 0 : index
    %c0_199 = arith.constant 0 : index
    %292 = vector.load %arg11[%c1_196, %c1_197, %c0_198, %c0_199] : memref<2x2x16x32xbf16, #tpu.memory_space<vmem>>, vector<1x1x16x32xbf16>
    %293 = vector.shape_cast %292 : vector<1x1x16x32xbf16> to vector<16x32xbf16>
    %294 = arith.truncf %291 : vector<16x16xf32> to vector<16x16xbf16>
    %cst_200 = arith.constant dense<0.000000e+00> : vector<16x32xf32>
    %295 = tpu.matmul %294, %293, %cst_200 {dimension_numbers = #tpu.dot_dimension_numbers<[1], [0], [0], [1], [0, 0, 1, 1], [], []>} : vector<16x16xbf16>, vector<16x32xbf16>, vector<16x32xf32> -> vector<16x32xf32>
    %296 = arith.addf %248, %295 : vector<16x32xf32>
    %c1_201 = arith.constant 1 : index
    %c0_202 = arith.constant 0 : index
    %c0_203 = arith.constant 0 : index
    %297 = vector.load %arg12[%c1_201, %c0_202, %c0_203] : memref<2x1x32xf32, #tpu.memory_space<vmem>>, vector<1x1x32xf32>
    %298 = vector.shape_cast %297 : vector<1x1x32xf32> to vector<1x32xf32>
    %299 = vector.broadcast %298 : vector<1x32xf32> to vector<16x32xf32>
    %300 = arith.addf %296, %299 : vector<16x32xf32>
    %301 = arith.addf %300, %201 : vector<16x32xf32>
    %c1_204 = arith.constant 1 : index
    %c0_205 = arith.constant 0 : index
    %c0_206 = arith.constant 0 : index
    %302 = vector.load %arg13[%c1_204, %c0_205, %c0_206] : memref<2x1x32xf32, #tpu.memory_space<vmem>>, vector<1x1x32xf32>
    %303 = vector.shape_cast %302 : vector<1x1x32xf32> to vector<1x32xf32>
    %c1_207 = arith.constant 1 : index
    %c0_208 = arith.constant 0 : index
    %c0_209 = arith.constant 0 : index
    %304 = vector.load %arg14[%c1_207, %c0_208, %c0_209] : memref<2x1x32xf32, #tpu.memory_space<vmem>>, vector<1x1x32xf32>
    %305 = vector.shape_cast %304 : vector<1x1x32xf32> to vector<1x32xf32>
    %cst_210 = arith.constant dense<0.000000e+00> : vector<16xf32>
    %306 = vector.multi_reduction <add>, %301, %cst_210 [1] : vector<16x32xf32> to vector<16xf32>
    %307 = vector.shape_cast %306 : vector<16xf32> to vector<16x1xf32>
    %cst_211 = arith.constant 3.200000e+01 : f32
    %308 = vector.broadcast %cst_211 : f32 to vector<16x1xf32>
    %309 = arith.divf %307, %308 : vector<16x1xf32>
    %310 = vector.broadcast %309 : vector<16x1xf32> to vector<16x32xf32>
    %311 = arith.subf %301, %310 : vector<16x32xf32>
    %312 = arith.mulf %311, %311 : vector<16x32xf32>
    %cst_212 = arith.constant dense<0.000000e+00> : vector<16xf32>
    %313 = vector.multi_reduction <add>, %312, %cst_212 [1] : vector<16x32xf32> to vector<16xf32>
    %314 = vector.shape_cast %313 : vector<16xf32> to vector<16x1xf32>
    %cst_213 = arith.constant 3.200000e+01 : f32
    %315 = vector.broadcast %cst_213 : f32 to vector<16x1xf32>
    %316 = arith.divf %314, %315 : vector<16x1xf32>
    %cst_214 = arith.constant 9.99999996E-13 : f32
    %317 = vector.broadcast %cst_214 : f32 to vector<16x1xf32>
    %318 = arith.addf %316, %317 : vector<16x1xf32>
    %319 = math.rsqrt %318 : vector<16x1xf32>
    %320 = vector.broadcast %319 : vector<16x1xf32> to vector<16x32xf32>
    %321 = arith.mulf %311, %320 : vector<16x32xf32>
    %322 = vector.broadcast %303 : vector<1x32xf32> to vector<16x32xf32>
    %323 = arith.mulf %321, %322 : vector<16x32xf32>
    %324 = vector.broadcast %305 : vector<1x32xf32> to vector<16x32xf32>
    %325 = arith.addf %323, %324 : vector<16x32xf32>
    %c1_215 = arith.constant 1 : index
    %c0_216 = arith.constant 0 : index
    %c0_217 = arith.constant 0 : index
    %326 = vector.load %arg15[%c1_215, %c0_216, %c0_217] : memref<2x32x64xbf16, #tpu.memory_space<vmem>>, vector<1x32x64xbf16>
    %327 = vector.shape_cast %326 : vector<1x32x64xbf16> to vector<32x64xbf16>
    %328 = arith.truncf %325 : vector<16x32xf32> to vector<16x32xbf16>
    %cst_218 = arith.constant dense<0.000000e+00> : vector<16x64xf32>
    %329 = tpu.matmul %328, %327, %cst_218 {dimension_numbers = #tpu.dot_dimension_numbers<[1], [0], [0], [1], [0, 0, 1, 1], [], []>} : vector<16x32xbf16>, vector<32x64xbf16>, vector<16x64xf32> -> vector<16x64xf32>
    %c1_219 = arith.constant 1 : index
    %c0_220 = arith.constant 0 : index
    %c0_221 = arith.constant 0 : index
    %330 = vector.load %arg16[%c1_219, %c0_220, %c0_221] : memref<2x1x64xf32, #tpu.memory_space<vmem>>, vector<1x1x64xf32>
    %331 = vector.shape_cast %330 : vector<1x1x64xf32> to vector<1x64xf32>
    %332 = vector.broadcast %331 : vector<1x64xf32> to vector<16x64xf32>
    %333 = arith.addf %329, %332 : vector<16x64xf32>
    %cst_222 = arith.constant 5.000000e-01 : f32
    %334 = vector.broadcast %cst_222 : f32 to vector<16x64xf32>
    %335 = arith.mulf %334, %333 : vector<16x64xf32>
    %cst_223 = arith.constant 4.471500e-02 : f32
    %336 = vector.broadcast %cst_223 : f32 to vector<16x64xf32>
    %337 = arith.mulf %336, %333 : vector<16x64xf32>
    %338 = arith.mulf %337, %333 : vector<16x64xf32>
    %339 = arith.mulf %338, %333 : vector<16x64xf32>
    %340 = arith.addf %333, %339 : vector<16x64xf32>
    %cst_224 = arith.constant 0.797884583 : f32
    %341 = vector.broadcast %cst_224 : f32 to vector<16x64xf32>
    %342 = arith.mulf %341, %340 : vector<16x64xf32>
    %343 = math.tanh %342 : vector<16x64xf32>
    %cst_225 = arith.constant 1.000000e+00 : f32
    %344 = vector.broadcast %cst_225 : f32 to vector<16x64xf32>
    %345 = arith.addf %344, %343 : vector<16x64xf32>
    %346 = arith.mulf %335, %345 : vector<16x64xf32>
    %c1_226 = arith.constant 1 : index
    %c0_227 = arith.constant 0 : index
    %c0_228 = arith.constant 0 : index
    %347 = vector.load %arg17[%c1_226, %c0_227, %c0_228] : memref<2x64x32xbf16, #tpu.memory_space<vmem>>, vector<1x64x32xbf16>
    %348 = vector.shape_cast %347 : vector<1x64x32xbf16> to vector<64x32xbf16>
    %349 = arith.truncf %346 : vector<16x64xf32> to vector<16x64xbf16>
    %cst_229 = arith.constant dense<0.000000e+00> : vector<16x32xf32>
    %350 = tpu.matmul %349, %348, %cst_229 {dimension_numbers = #tpu.dot_dimension_numbers<[1], [0], [0], [1], [0, 0, 1, 1], [], []>} : vector<16x64xbf16>, vector<64x32xbf16>, vector<16x32xf32> -> vector<16x32xf32>
    %c1_230 = arith.constant 1 : index
    %c0_231 = arith.constant 0 : index
    %c0_232 = arith.constant 0 : index
    %351 = vector.load %arg18[%c1_230, %c0_231, %c0_232] : memref<2x1x32xf32, #tpu.memory_space<vmem>>, vector<1x1x32xf32>
    %352 = vector.shape_cast %351 : vector<1x1x32xf32> to vector<1x32xf32>
    %353 = vector.broadcast %352 : vector<1x32xf32> to vector<16x32xf32>
    %354 = arith.addf %350, %353 : vector<16x32xf32>
    %355 = arith.addf %354, %325 : vector<16x32xf32>
    %c1_233 = arith.constant 1 : index
    %c0_234 = arith.constant 0 : index
    %c0_235 = arith.constant 0 : index
    %356 = vector.load %arg19[%c1_233, %c0_234, %c0_235] : memref<2x1x32xf32, #tpu.memory_space<vmem>>, vector<1x1x32xf32>
    %357 = vector.shape_cast %356 : vector<1x1x32xf32> to vector<1x32xf32>
    %c1_236 = arith.constant 1 : index
    %c0_237 = arith.constant 0 : index
    %c0_238 = arith.constant 0 : index
    %358 = vector.load %arg20[%c1_236, %c0_237, %c0_238] : memref<2x1x32xf32, #tpu.memory_space<vmem>>, vector<1x1x32xf32>
    %359 = vector.shape_cast %358 : vector<1x1x32xf32> to vector<1x32xf32>
    %cst_239 = arith.constant dense<0.000000e+00> : vector<16xf32>
    %360 = vector.multi_reduction <add>, %355, %cst_239 [1] : vector<16x32xf32> to vector<16xf32>
    %361 = vector.shape_cast %360 : vector<16xf32> to vector<16x1xf32>
    %cst_240 = arith.constant 3.200000e+01 : f32
    %362 = vector.broadcast %cst_240 : f32 to vector<16x1xf32>
    %363 = arith.divf %361, %362 : vector<16x1xf32>
    %364 = vector.broadcast %363 : vector<16x1xf32> to vector<16x32xf32>
    %365 = arith.subf %355, %364 : vector<16x32xf32>
    %366 = arith.mulf %365, %365 : vector<16x32xf32>
    %cst_241 = arith.constant dense<0.000000e+00> : vector<16xf32>
    %367 = vector.multi_reduction <add>, %366, %cst_241 [1] : vector<16x32xf32> to vector<16xf32>
    %368 = vector.shape_cast %367 : vector<16xf32> to vector<16x1xf32>
    %cst_242 = arith.constant 3.200000e+01 : f32
    %369 = vector.broadcast %cst_242 : f32 to vector<16x1xf32>
    %370 = arith.divf %368, %369 : vector<16x1xf32>
    %cst_243 = arith.constant 9.99999996E-13 : f32
    %371 = vector.broadcast %cst_243 : f32 to vector<16x1xf32>
    %372 = arith.addf %370, %371 : vector<16x1xf32>
    %373 = math.rsqrt %372 : vector<16x1xf32>
    %374 = vector.broadcast %373 : vector<16x1xf32> to vector<16x32xf32>
    %375 = arith.mulf %365, %374 : vector<16x32xf32>
    %376 = vector.broadcast %357 : vector<1x32xf32> to vector<16x32xf32>
    %377 = arith.mulf %375, %376 : vector<16x32xf32>
    %378 = vector.broadcast %359 : vector<1x32xf32> to vector<16x32xf32>
    %379 = arith.addf %377, %378 : vector<16x32xf32>
    %c0_244 = arith.constant 0 : index
    %c0_245 = arith.constant 0 : index
    %380 = vector.load %arg21[%c0_244, %c0_245] : memref<32x128xbf16, #tpu.memory_space<vmem>>, vector<32x128xbf16>
    %381 = arith.truncf %379 : vector<16x32xf32> to vector<16x32xbf16>
    %cst_246 = arith.constant dense<0.000000e+00> : vector<16x128xf32>
    %382 = tpu.matmul %381, %380, %cst_246 {dimension_numbers = #tpu.dot_dimension_numbers<[1], [0], [0], [1], [0, 0, 1, 1], [], []>} : vector<16x32xbf16>, vector<32x128xbf16>, vector<16x128xf32> -> vector<16x128xf32>
    %c0_247 = arith.constant 0 : index
    %c0_248 = arith.constant 0 : index
    %383 = vector.load %arg22[%c0_247, %c0_248] : memref<1x128xf32, #tpu.memory_space<vmem>>, vector<1x128xf32>
    %384 = vector.broadcast %383 : vector<1x128xf32> to vector<16x128xf32>
    %385 = arith.addf %382, %384 : vector<16x128xf32>
    %c0_249 = arith.constant 0 : index
    %c0_250 = arith.constant 0 : index
    %386 = vector.load %arg23[%c0_249, %c0_250] : memref<16x128xf32, #tpu.memory_space<vmem>>, vector<16x128xf32>
    tpu.vector_store %arg23[%c0_249, %c0_250], %385 {strides = array<i32>} : memref<16x128xf32, #tpu.memory_space<vmem>>, vector<16x128xf32>,
    return
  }
  func.func @transform_0(%arg0: i32) -> (i32, i32) {
    %c0_i32 = arith.constant 0 : i32
    %c0_i32_0 = arith.constant 0 : i32
    %c0_i32_1 = arith.constant 0 : i32
    return %c0_i32, %c0_i32_0 : i32, i32
  }
  func.func @transform_1(%arg0: i32) -> (i32, i32) {
    %c0_i32 = arith.constant 0 : i32
    %c0_i32_0 = arith.constant 0 : i32
    %c0_i32_1 = arith.constant 0 : i32
    return %c0_i32, %c0_i32_0 : i32, i32
  }
  func.func @transform_2(%arg0: i32) -> (i32, i32) {
    %c0_i32 = arith.constant 0 : i32
    %c0_i32_0 = arith.constant 0 : i32
    %c0_i32_1 = arith.constant 0 : i32
    return %c0_i32, %c0_i32_0 : i32, i32
  }
  func.func @transform_3(%arg0: i32) -> (i32, i32) {
    %c0_i32 = arith.constant 0 : i32
    %c0_i32_0 = arith.constant 0 : i32
    %c0_i32_1 = arith.constant 0 : i32
    return %c0_i32, %c0_i32_0 : i32, i32
  }
  func.func @transform_4(%arg0: i32) -> (i32, i32, i32, i32) {
    %c0_i32 = arith.constant 0 : i32
    %c0_i32_0 = arith.constant 0 : i32
    %c0_i32_1 = arith.constant 0 : i32
    %c0_i32_2 = arith.constant 0 : i32
    %c0_i32_3 = arith.constant 0 : i32
    return %c0_i32, %c0_i32_0, %c0_i32_1, %c0_i32_2 : i32, i32, i32, i32
  }
  func.func @transform_5(%arg0: i32) -> (i32, i32, i32, i32) {
    %c0_i32 = arith.constant 0 : i32
    %c0_i32_0 = arith.constant 0 : i32
    %c0_i32_1 = arith.constant 0 : i32
    %c0_i32_2 = arith.constant 0 : i32
    %c0_i32_3 = arith.constant 0 : i32
    return %c0_i32, %c0_i32_0, %c0_i32_1, %c0_i32_2 : i32, i32, i32, i32
  }
  func.func @transform_6(%arg0: i32) -> (i32, i32, i32, i32) {
    %c0_i32 = arith.constant 0 : i32
    %c0_i32_0 = arith.constant 0 : i32
    %c0_i32_1 = arith.constant 0 : i32
    %c0_i32_2 = arith.constant 0 : i32
    %c0_i32_3 = arith.constant 0 : i32
    return %c0_i32, %c0_i32_0, %c0_i32_1, %c0_i32_2 : i32, i32, i32, i32
  }
  func.func @transform_7(%arg0: i32) -> (i32, i32, i32, i32) {
    %c0_i32 = arith.constant 0 : i32
    %c0_i32_0 = arith.constant 0 : i32
    %c0_i32_1 = arith.constant 0 : i32
    %c0_i32_2 = arith.constant 0 : i32
    %c0_i32_3 = arith.constant 0 : i32
    return %c0_i32, %c0_i32_0, %c0_i32_1, %c0_i32_2 : i32, i32, i32, i32
  }
  func.func @transform_8(%arg0: i32) -> (i32, i32, i32, i32) {
    %c0_i32 = arith.constant 0 : i32
    %c0_i32_0 = arith.constant 0 : i32
    %c0_i32_1 = arith.constant 0 : i32
    %c0_i32_2 = arith.constant 0 : i32
    %c0_i32_3 = arith.constant 0 : i32
    return %c0_i32, %c0_i32_0, %c0_i32_1, %c0_i32_2 : i32, i32, i32, i32
  }
  func.func @transform_9(%arg0: i32) -> (i32, i32, i32, i32) {
    %c0_i32 = arith.constant 0 : i32
    %c0_i32_0 = arith.constant 0 : i32
    %c0_i32_1 = arith.constant 0 : i32
    %c0_i32_2 = arith.constant 0 : i32
    %c0_i32_3 = arith.constant 0 : i32
    return %c0_i32, %c0_i32_0, %c0_i32_1, %c0_i32_2 : i32, i32, i32, i32
  }
  func.func @transform_10(%arg0: i32) -> (i32, i32, i32, i32) {
    %c0_i32 = arith.constant 0 : i32
    %c0_i32_0 = arith.constant 0 : i32
    %c0_i32_1 = arith.constant 0 : i32
    %c0_i32_2 = arith.constant 0 : i32
    %c0_i32_3 = arith.constant 0 : i32
    return %c0_i32, %c0_i32_0, %c0_i32_1, %c0_i32_2 : i32, i32, i32, i32
  }
  func.func @transform_11(%arg0: i32) -> (i32, i32, i32) {
    %c0_i32 = arith.constant 0 : i32
    %c0_i32_0 = arith.constant 0 : i32
    %c0_i32_1 = arith.constant 0 : i32
    %c0_i32_2 = arith.constant 0 : i32
    return %c0_i32, %c0_i32_0, %c0_i32_1 : i32, i32, i32
  }
  func.func @transform_12(%arg0: i32) -> (i32, i32, i32) {
    %c0_i32 = arith.constant 0 : i32
    %c0_i32_0 = arith.constant 0 : i32
    %c0_i32_1 = arith.constant 0 : i32
    %c0_i32_2 = arith.constant 0 : i32
    return %c0_i32, %c0_i32_0, %c0_i32_1 : i32, i32, i32
  }
  func.func @transform_13(%arg0: i32) -> (i32, i32, i32) {
    %c0_i32 = arith.constant 0 : i32
    %c0_i32_0 = arith.constant 0 : i32
    %c0_i32_1 = arith.constant 0 : i32
    %c0_i32_2 = arith.constant 0 : i32
    return %c0_i32, %c0_i32_0, %c0_i32_1 : i32, i32, i32
  }
  func.func @transform_14(%arg0: i32) -> (i32, i32, i32) {
    %c0_i32 = arith.constant 0 : i32
    %c0_i32_0 = arith.constant 0 : i32
    %c0_i32_1 = arith.constant 0 : i32
    %c0_i32_2 = arith.constant 0 : i32
    return %c0_i32, %c0_i32_0, %c0_i32_1 : i32, i32, i32
  }
  func.func @transform_15(%arg0: i32) -> (i32, i32, i32) {
    %c0_i32 = arith.constant 0 : i32
    %c0_i32_0 = arith.constant 0 : i32
    %c0_i32_1 = arith.constant 0 : i32
    %c0_i32_2 = arith.constant 0 : i32
    return %c0_i32, %c0_i32_0, %c0_i32_1 : i32, i32, i32
  }
  func.func @transform_16(%arg0: i32) -> (i32, i32, i32) {
    %c0_i32 = arith.constant 0 : i32
    %c0_i32_0 = arith.constant 0 : i32
    %c0_i32_1 = arith.constant 0 : i32
    %c0_i32_2 = arith.constant 0 : i32
    return %c0_i32, %c0_i32_0, %c0_i32_1 : i32, i32, i32
  }
  func.func @transform_17(%arg0: i32) -> (i32, i32, i32) {
    %c0_i32 = arith.constant 0 : i32
    %c0_i32_0 = arith.constant 0 : i32
    %c0_i32_1 = arith.constant 0 : i32
    %c0_i32_2 = arith.constant 0 : i32
    return %c0_i32, %c0_i32_0, %c0_i32_1 : i32, i32, i32
  }
  func.func @transform_18(%arg0: i32) -> (i32, i32, i32) {
    %c0_i32 = arith.constant 0 : i32
    %c0_i32_0 = arith.constant 0 : i32
    %c0_i32_1 = arith.constant 0 : i32
    %c0_i32_2 = arith.constant 0 : i32
    return %c0_i32, %c0_i32_0, %c0_i32_1 : i32, i32, i32
  }
  func.func @transform_19(%arg0: i32) -> (i32, i32, i32) {
    %c0_i32 = arith.constant 0 : i32
    %c0_i32_0 = arith.constant 0 : i32
    %c0_i32_1 = arith.constant 0 : i32
    %c0_i32_2 = arith.constant 0 : i32
    return %c0_i32, %c0_i32_0, %c0_i32_1 : i32, i32, i32
  }
  func.func @transform_20(%arg0: i32) -> (i32, i32) {
    %c0_i32 = arith.constant 0 : i32
    %c0_i32_0 = arith.constant 0 : i32
    %c0_i32_1 = arith.constant 0 : i32
    return %c0_i32, %c0_i32_0 : i32, i32
  }
  func.func @transform_21(%arg0: i32) -> (i32, i32) {
    %c0_i32 = arith.constant 0 : i32
    %c0_i32_0 = arith.constant 0 : i32
    %c0_i32_1 = arith.constant 0 : i32
    return %c0_i32, %c0_i32_0 : i32, i32
  }
  func.func @transform_22(%arg0: i32) -> (i32, i32) {
    %c0_i32 = arith.constant 0 : i32
    %c0_i32_0 = arith.constant 0 : i32
    %c0_i32_1 = arith.constant 0 : i32
    return %c0_i32, %c0_i32_0 : i32, i32
  }
}

</mosaic_0001>

<llo_original>
// kernel: tpu_custom_call.1
$region0: #{tpu_custom_call.1}
  #allocation0 [shape = 'u32[]', space=smem, size = 0x4, offset = 0x4, fixed_abs, tag = 'smem constant byte address 0x4 - core index']
  #allocation1 [shape = 'u32[144,128]{1,0:T(1,128)}', space=vmem, size = 0x12000, scoped, tag = 'internal scratch']
  %s0 = inlined_call_operand.vmem [shape: f32[16,32], index: 0, kind: input, shape index: {}]
  %s1 = inlined_call_operand.vmem [shape: f32[16,16], index: 1, kind: input, shape index: {}]
  %s2 = inlined_call_operand.vmem [shape: f32[1,32], index: 2, kind: input, shape index: {}]
  %s3 = inlined_call_operand.vmem [shape: f32[1,32], index: 3, kind: input, shape index: {}]
  %s4 = inlined_call_operand.vmem [shape: bf16[2,2,32,16], index: 4, kind: input, shape index: {}]
  %s5 = inlined_call_operand.vmem [shape: bf16[2,2,32,16], index: 5, kind: input, shape index: {}]
  %s6 = inlined_call_operand.vmem [shape: bf16[2,2,32,16], index: 6, kind: input, shape index: {}]
  %s7 = inlined_call_operand.vmem [shape: f32[2,2,1,16], index: 7, kind: input, shape index: {}]
  %s8 = inlined_call_operand.vmem [shape: f32[2,2,1,16], index: 8, kind: input, shape index: {}]
  %s9 = inlined_call_operand.vmem [shape: f32[2,2,1,16], index: 9, kind: input, shape index: {}]
  %s10 = inlined_call_operand.vmem [shape: bf16[2,2,16,32], index: 10, kind: input, shape index: {}]
  %s11 = inlined_call_operand.vmem [shape: f32[2,1,32], index: 11, kind: input, shape index: {}]
  %s12 = inlined_call_operand.vmem [shape: f32[2,1,32], index: 12, kind: input, shape index: {}]
  %s13 = inlined_call_operand.vmem [shape: f32[2,1,32], index: 13, kind: input, shape index: {}]
  %s14 = inlined_call_operand.vmem [shape: bf16[2,32,64], index: 14, kind: input, shape index: {}]
  %s15 = inlined_call_operand.vmem [shape: f32[2,1,64], index: 15, kind: input, shape index: {}]
  %s16 = inlined_call_operand.vmem [shape: bf16[2,64,32], index: 16, kind: input, shape index: {}]
  %s17 = inlined_call_operand.vmem [shape: f32[2,1,32], index: 17, kind: input, shape index: {}]
  %s18 = inlined_call_operand.vmem [shape: f32[2,1,32], index: 18, kind: input, shape index: {}]
  %s19 = inlined_call_operand.vmem [shape: f32[2,1,32], index: 19, kind: input, shape index: {}]
  %s20 = inlined_call_operand.vmem [shape: bf16[32,128], index: 20, kind: input, shape index: {}]
  %s21 = inlined_call_operand.vmem [shape: f32[1,128], index: 21, kind: input, shape index: {}]
  %s22 = inlined_call_operand.hbm [shape: f32[16,128], index: 22, kind: output, shape index: {}]
  %s23 = sld [smem:[#allocation0]]
  $region98: #{tpu_custom_call.1} parent=0
    _
  %s25 = ssub.s32 1, %s23
  %s26 = scalar_select 0, %s25, %s23
  $region1: #{tpu_custom_call.1} parent=0
    #allocation2 [shape = 'u8[8192]{0}', space=vmem, size = 0x2000, scoped, tag = 'output window, operand 0, single buffered']
    #allocation3 [shape = 's32[1]{0}', space=sflag, size = 0x4, scoped, tag = 'scoped memory for tpu_custom_call.1']
    %27 = vsyncpa [#allocation3], 0
    // Predicated region
    $region2: #{tpu_custom_call.1} parent=1 // pred_check
      _
    $region3: #{tpu_custom_call.1} parent=1 // pred_check_branch
      %29 = sbr.rel (0) target = $region5
    $region4: #{tpu_custom_call.1} parent=1 // pred_region
      _
    $region5: #{tpu_custom_call.1} parent=1 // pred_fallthru
      _
    // Predicated region
    $region6: #{tpu_custom_call.1} parent=1 // pred_check
      _
    $region7: #{tpu_custom_call.1} parent=1 // pred_check_branch
      %31 = sbr.rel (0) target = $region9
    $region8: #{tpu_custom_call.1} parent=1 // pred_region
      _
    $region9: #{tpu_custom_call.1} parent=1 // pred_fallthru
      _
    // Predicated region
    $region10: #{tpu_custom_call.1} parent=1 // pred_check
      _
    $region11: #{tpu_custom_call.1} parent=1 // pred_check_branch
      %33 = sbr.rel (0) target = $region13
    $region12: #{tpu_custom_call.1} parent=1 // pred_region
      _
    $region13: #{tpu_custom_call.1} parent=1 // pred_fallthru
      _
    // Predicated region
    $region14: #{tpu_custom_call.1} parent=1 // pred_check
      _
    $region15: #{tpu_custom_call.1} parent=1 // pred_check_branch
      %35 = sbr.rel (0) target = $region17
    $region16: #{tpu_custom_call.1} parent=1 // pred_region
      _
    $region17: #{tpu_custom_call.1} parent=1 // pred_fallthru
      _
    // Predicated region
    $region18: #{tpu_custom_call.1} parent=1 // pred_check
      _
    $region19: #{tpu_custom_call.1} parent=1 // pred_check_branch
      %37 = sbr.rel (0) target = $region21
    $region20: #{tpu_custom_call.1} parent=1 // pred_region
      _
    $region21: #{tpu_custom_call.1} parent=1 // pred_fallthru
      _
    // Predicated region
    $region22: #{tpu_custom_call.1} parent=1 // pred_check
      _
    $region23: #{tpu_custom_call.1} parent=1 // pred_check_branch
      %39 = sbr.rel (0) target = $region25
    $region24: #{tpu_custom_call.1} parent=1 // pred_region
      _
    $region25: #{tpu_custom_call.1} parent=1 // pred_fallthru
      _
    // Predicated region
    $region26: #{tpu_custom_call.1} parent=1 // pred_check
      _
    $region27: #{tpu_custom_call.1} parent=1 // pred_check_branch
      %41 = sbr.rel (0) target = $region29
    $region28: #{tpu_custom_call.1} parent=1 // pred_region
      _
    $region29: #{tpu_custom_call.1} parent=1 // pred_fallthru
      _
    // Predicated region
    $region30: #{tpu_custom_call.1} parent=1 // pred_check
      _
    $region31: #{tpu_custom_call.1} parent=1 // pred_check_branch
      %43 = sbr.rel (0) target = $region33
    $region32: #{tpu_custom_call.1} parent=1 // pred_region
      _
    $region33: #{tpu_custom_call.1} parent=1 // pred_fallthru
      _
    // Predicated region
    $region34: #{tpu_custom_call.1} parent=1 // pred_check
      _
    $region35: #{tpu_custom_call.1} parent=1 // pred_check_branch
      %45 = sbr.rel (0) target = $region37
    $region36: #{tpu_custom_call.1} parent=1 // pred_region
      _
    $region37: #{tpu_custom_call.1} parent=1 // pred_fallthru
      _
    // Predicated region
    $region38: #{tpu_custom_call.1} parent=1 // pred_check
      _
    $region39: #{tpu_custom_call.1} parent=1 // pred_check_branch
      %47 = sbr.rel (0) target = $region41
    $region40: #{tpu_custom_call.1} parent=1 // pred_region
      _
    $region41: #{tpu_custom_call.1} parent=1 // pred_fallthru
      _
    // Predicated region
    $region42: #{tpu_custom_call.1} parent=1 // pred_check
      _
    $region43: #{tpu_custom_call.1} parent=1 // pred_check_branch
      %49 = sbr.rel (0) target = $region45
    $region44: #{tpu_custom_call.1} parent=1 // pred_region
      _
    $region45: #{tpu_custom_call.1} parent=1 // pred_fallthru
      _
    // Predicated region
    $region46: #{tpu_custom_call.1} parent=1 // pred_check
      _
    $region47: #{tpu_custom_call.1} parent=1 // pred_check_branch
      %51 = sbr.rel (0) target = $region49
    $region48: #{tpu_custom_call.1} parent=1 // pred_region
      _
    $region49: #{tpu_custom_call.1} parent=1 // pred_fallthru
      _
    // Predicated region
    $region50: #{tpu_custom_call.1} parent=1 // pred_check
      _
    $region51: #{tpu_custom_call.1} parent=1 // pred_check_branch
      %53 = sbr.rel (0) target = $region53
    $region52: #{tpu_custom_call.1} parent=1 // pred_region
      _
    $region53: #{tpu_custom_call.1} parent=1 // pred_fallthru
      _
    // Predicated region
    $region54: #{tpu_custom_call.1} parent=1 // pred_check
      _
    $region55: #{tpu_custom_call.1} parent=1 // pred_check_branch
      %55 = sbr.rel (0) target = $region57
    $region56: #{tpu_custom_call.1} parent=1 // pred_region
      _
    $region57: #{tpu_custom_call.1} parent=1 // pred_fallthru
      _
    // Predicated region
    $region58: #{tpu_custom_call.1} parent=1 // pred_check
      _
    $region59: #{tpu_custom_call.1} parent=1 // pred_check_branch
      %57 = sbr.rel (0) target = $region61
    $region60: #{tpu_custom_call.1} parent=1 // pred_region
      _
    $region61: #{tpu_custom_call.1} parent=1 // pred_fallthru
      _
    // Predicated region
    $region62: #{tpu_custom_call.1} parent=1 // pred_check
      _
    $region63: #{tpu_custom_call.1} parent=1 // pred_check_branch
      %59 = sbr.rel (0) target = $region65
    $region64: #{tpu_custom_call.1} parent=1 // pred_region
      _
    $region65: #{tpu_custom_call.1} parent=1 // pred_fallthru
      _
    // Predicated region
    $region66: #{tpu_custom_call.1} parent=1 // pred_check
      _
    $region67: #{tpu_custom_call.1} parent=1 // pred_check_branch
      %61 = sbr.rel (0) target = $region69
    $region68: #{tpu_custom_call.1} parent=1 // pred_region
      _
    $region69: #{tpu_custom_call.1} parent=1 // pred_fallthru
      _
    // Predicated region
    $region70: #{tpu_custom_call.1} parent=1 // pred_check
      _
    $region71: #{tpu_custom_call.1} parent=1 // pred_check_branch
      %63 = sbr.rel (0) target = $region73
    $region72: #{tpu_custom_call.1} parent=1 // pred_region
      _
    $region73: #{tpu_custom_call.1} parent=1 // pred_fallthru
      _
    // Predicated region
    $region74: #{tpu_custom_call.1} parent=1 // pred_check
      _
    $region75: #{tpu_custom_call.1} parent=1 // pred_check_branch
      %65 = sbr.rel (0) target = $region77
    $region76: #{tpu_custom_call.1} parent=1 // pred_region
      _
    $region77: #{tpu_custom_call.1} parent=1 // pred_fallthru
      _
    // Predicated region
    $region78: #{tpu_custom_call.1} parent=1 // pred_check
      _
    $region79: #{tpu_custom_call.1} parent=1 // pred_check_branch
      %67 = sbr.rel (0) target = $region81
    $region80: #{tpu_custom_call.1} parent=1 // pred_region
      _
    $region81: #{tpu_custom_call.1} parent=1 // pred_fallthru
      _
    // Predicated region
    $region82: #{tpu_custom_call.1} parent=1 // pred_check
      _
    $region83: #{tpu_custom_call.1} parent=1 // pred_check_branch
      %69 = sbr.rel (0) target = $region85
    $region84: #{tpu_custom_call.1} parent=1 // pred_region
      _
    $region85: #{tpu_custom_call.1} parent=1 // pred_fallthru
      _
    // Predicated region
    $region86: #{tpu_custom_call.1} parent=1 // pred_check
      _
    $region87: #{tpu_custom_call.1} parent=1 // pred_check_branch
      %71 = sbr.rel (0) target = $region89
    $region88: #{tpu_custom_call.1} parent=1 // pred_region
      _
    $region89: #{tpu_custom_call.1} parent=1 // pred_fallthru
      _
    %v73 = vld [vmem:[%s0] sm:$0xff]
    %v74 = vld [vmem:[%s0 + $0x8] sm:$0xff]
    %v75 = vld [vmem:[%s2] sm:$0x1]
    %v76 = vld [vmem:[%s3] sm:$0x1]
    %vm77 = vcmask 261120
    %v78 = vsel %vm77, %v73, 0.0
    %79 = vadd.xlane.f32.xlu0 %v78
    %v80 = vpop.xlane.xlu0 %79
    %v81 = vsel %vm77, %v74, 0.0
    %82 = vadd.xlane.f32.xlu0 %v81
    %v83 = vpop.xlane.xlu0 %82
    %v84 = vrcp.pop 32.0
    %v85 = vmul.f32 %v80, %v84
    %v86 = vmul.f32 %v83, %v84
    %v87 = vsub.f32 %v73, %v85
    %v88 = vsub.f32 %v74, %v86
    %v89 = vmul.f32 %v87, %v87
    %v90 = vmul.f32 %v88, %v88
    %v91 = vsel %vm77, %v89, 0.0
    %92 = vadd.xlane.f32.xlu0 %v91
    %v93 = vpop.xlane.xlu0 %92
    %v94 = vsel %vm77, %v90, 0.0
    %95 = vadd.xlane.f32.xlu0 %v94
    %v96 = vpop.xlane.xlu0 %95
    %v97 = vmul.f32 %v93, %v84
    %v98 = vmul.f32 %v96, %v84
    %v99 = vadd.f32 %v97, 1e-12
    %v100 = vadd.f32 %v98, 1e-12
    %v101 = vrsqrt.pop %v99
    %v102 = vrsqrt.pop %v100
    %v103 = vmul.f32 %v87, %v101
    %v104 = vmul.f32 %v88, %v102
    %v106 = vlaneseq
    %v107 = vshrl.u32 %v106, 7
    %v108 = vsub.s32 0, %v107
    %v109 = vrot.slane %v75, %v108
    %v111 = vmul.f32 %v103, %v109
    %v112 = vmul.f32 %v104, %v109
    %v114 = vlaneseq
    %v115 = vshrl.u32 %v114, 7
    %v116 = vsub.s32 0, %v115
    %v117 = vrot.slane %v76, %v116
    %v119 = vadd.f32 %v111, %v117
    %v120 = vadd.f32 %v112, %v117
    %v121 = vld [vmem:[%s1] sm:$0xff]
    %v122 = vld [vmem:[%s1 + $0x8] sm:$0xff]
    %v123 = vld [vmem:[%s4] sm:$0xf]
    %v124 = vld [vmem:[%s4 + $0x4] sm:$0xf]
    %v125 = vld [vmem:[%s4 + $0x8] sm:$0xf]
    %v126 = vld [vmem:[%s4 + $0xc] sm:$0xf]
    %v127 = vpack.c.bf16 %v120, %v119
    %v128 = vld [vmem:[%s7] sm:$0x1]
    %v130 = vlaneseq
    %v131 = vshrl.u32 %v130, 7
    %v132 = vsub.s32 0, %v131
    %v133 = vrot.slane %v128, %v132
    %v139 = vunpack.c.l.b16 %v123
    %v140 = vunpack.c.l.b16 %v124
    %v141 = vunpack.c.l.b16 %v125
    %v142 = vunpack.c.l.b16 %v126
    %v143 = vpack.c.b16 %v140, %v139
    %v144 = vpack.c.b16 %v142, %v141
    %v148 = vsel %vm77, %v127, 0
    %150 = vmatprep.subr.bf16.mxu0 0
    %151 = vmatpush1.bf16.msra.mxu0 %v143
    %152 = vmatprep.subr.bf16.mxu0 0
    %153 = vmatpush1.bf16.msra.mxu0 %v144
    %154 = vmatprep.subr.bf16.mxu0 0
    %155 = vmatpush1.bf16.msra.mxu0 0
    %156 = vmatprep.subr.bf16.mxu0 0
    %157 = vmatpush1.bf16.msra.mxu0 0
    %158 = vmatprep.subr.bf16.mxu0 0
    %159 = vmatpush1.bf16.msra.mxu0 0
    %160 = vmatprep.subr.bf16.mxu0 0
    %161 = vmatpush1.bf16.msra.mxu0 0
    %162 = vmatprep.subr.bf16.mxu0 0
    %163 = vmatpush1.bf16.msra.mxu0 0
    %164 = vmatprep.subr.bf16.mxu0 0
    %165 = vmatpush1.bf16.msra.mxu0 0
    %166 = vmatprep.subr.bf16.mxu0 0
    %167 = vmatpush1.bf16.msra.mxu0 0
    %168 = vmatprep.subr.bf16.mxu0 0
    %169 = vmatpush1.bf16.msra.mxu0 0
    %170 = vmatprep.subr.bf16.mxu0 0
    %171 = vmatpush1.bf16.msra.mxu0 0
    %172 = vmatprep.subr.bf16.mxu0 0
    %173 = vmatpush1.bf16.msra.mxu0 0
    %174 = vmatprep.subr.bf16.mxu0 0
    %175 = vmatpush1.bf16.msra.mxu0 0
    %176 = vmatprep.subr.bf16.mxu0 0
    %177 = vmatpush1.bf16.msra.mxu0 0
    %178 = vmatprep.subr.bf16.mxu0 0
    %179 = vmatpush1.bf16.msra.mxu0 0
    %180 = vmatprep.subr.bf16.mxu0 0
    %181 = vmatpush1.bf16.msra.mxu0 0
    %182 = vmatprep.mubr.bf16.mxu0 0
    %183 = vmatmul.mubr.bf16.gmra.mrb[0].mxu0 %v148
    %v184 = vpop.f32.mrb[0].mxu0
    %v185 = vadd.f32 %v133, %v184
    %v186 = vpop.f32.mrb[0].mxu0
    %v187 = vpop.f32.mrb[0].mxu0
    %v188 = vadd.f32 %v133, %v187
    %v189 = vpop.f32.mrb[0].mxu0
    %190 = vdwg.mxu0
    %v191 = vld [vmem:[%s5] sm:$0xf]
    %v192 = vld [vmem:[%s5 + $0x4] sm:$0xf]
    %v193 = vld [vmem:[%s5 + $0x8] sm:$0xf]
    %v194 = vld [vmem:[%s5 + $0xc] sm:$0xf]
    %v195 = vld [vmem:[%s8] sm:$0x1]
    %v197 = vlaneseq
    %v198 = vshrl.u32 %v197, 7
    %v199 = vsub.s32 0, %v198
    %v200 = vrot.slane %v195, %v199
    %v206 = vunpack.c.l.b16 %v191
    %v207 = vunpack.c.l.b16 %v192
    %v208 = vunpack.c.l.b16 %v193
    %v209 = vunpack.c.l.b16 %v194
    %v210 = vpack.c.b16 %v207, %v206
    %v211 = vpack.c.b16 %v209, %v208
    %214 = vmatprep.subr.bf16.mxu0 0
    %215 = vmatpush1.bf16.msra.mxu0 %v210
    %216 = vmatprep.subr.bf16.mxu0 0
    %217 = vmatpush1.bf16.msra.mxu0 %v211
    %218 = vmatprep.subr.bf16.mxu0 0
    %219 = vmatpush1.bf16.msra.mxu0 0
    %220 = vmatprep.subr.bf16.mxu0 0
    %221 = vmatpush1.bf16.msra.mxu0 0
    %222 = vmatprep.subr.bf16.mxu0 0
    %223 = vmatpush1.bf16.msra.mxu0 0
    %224 = vmatprep.subr.bf16.mxu0 0
    %225 = vmatpush1.bf16.msra.mxu0 0
    %226 = vmatprep.subr.bf16.mxu0 0
    %227 = vmatpush1.bf16.msra.mxu0 0
    %228 = vmatprep.subr.bf16.mxu0 0
    %229 = vmatpush1.bf16.msra.mxu0 0
    %230 = vmatprep.subr.bf16.mxu0 0
    %231 = vmatpush1.bf16.msra.mxu0 0
    %232 = vmatprep.subr.bf16.mxu0 0
    %233 = vmatpush1.bf16.msra.mxu0 0
    %234 = vmatprep.subr.bf16.mxu0 0
    %235 = vmatpush1.bf16.msra.mxu0 0
    %236 = vmatprep.subr.bf16.mxu0 0
    %237 = vmatpush1.bf16.msra.mxu0 0
    %238 = vmatprep.subr.bf16.mxu0 0
    %239 = vmatpush1.bf16.msra.mxu0 0
    %240 = vmatprep.subr.bf16.mxu0 0
    %241 = vmatpush1.bf16.msra.mxu0 0
    %242 = vmatprep.subr.bf16.mxu0 0
    %243 = vmatpush1.bf16.msra.mxu0 0
    %244 = vmatprep.subr.bf16.mxu0 0
    %245 = vmatpush1.bf16.msra.mxu0 0
    %246 = vmatprep.mubr.bf16.mxu0 0
    %247 = vmatmul.mubr.bf16.gmra.mrb[0].mxu0 %v148
    %v248 = vpop.f32.mrb[0].mxu0
    %v249 = vadd.f32 %v200, %v248
    %v250 = vpop.f32.mrb[0].mxu0
    %v251 = vpop.f32.mrb[0].mxu0
    %v252 = vadd.f32 %v200, %v251
    %v253 = vpop.f32.mrb[0].mxu0
    %254 = vdwg.mxu0
    %v255 = vld [vmem:[%s6] sm:$0xf]
    %v256 = vld [vmem:[%s6 + $0x4] sm:$0xf]
    %v257 = vld [vmem:[%s6 + $0x8] sm:$0xf]
    %v258 = vld [vmem:[%s6 + $0xc] sm:$0xf]
    %v259 = vld [vmem:[%s9] sm:$0x1]
    %v261 = vlaneseq
    %v262 = vshrl.u32 %v261, 7
    %v263 = vsub.s32 0, %v262
    %v264 = vrot.slane %v259, %v263
    %v270 = vunpack.c.l.b16 %v255
    %v271 = vunpack.c.l.b16 %v256
    %v272 = vunpack.c.l.b16 %v257
    %v273 = vunpack.c.l.b16 %v258
    %v274 = vpack.c.b16 %v271, %v270
    %v275 = vpack.c.b16 %v273, %v272
    %278 = vmatprep.subr.bf16.mxu0 0
    %279 = vmatpush1.bf16.msra.mxu0 %v274
    %280 = vmatprep.subr.bf16.mxu0 0
    %281 = vmatpush1.bf16.msra.mxu0 %v275
    %282 = vmatprep.subr.bf16.mxu0 0
    %283 = vmatpush1.bf16.msra.mxu0 0
    %284 = vmatprep.subr.bf16.mxu0 0
    %285 = vmatpush1.bf16.msra.mxu0 0
    %286 = vmatprep.subr.bf16.mxu0 0
    %287 = vmatpush1.bf16.msra.mxu0 0
    %288 = vmatprep.subr.bf16.mxu0 0
    %289 = vmatpush1.bf16.msra.mxu0 0
    %290 = vmatprep.subr.bf16.mxu0 0
    %291 = vmatpush1.bf16.msra.mxu0 0
    %292 = vmatprep.subr.bf16.mxu0 0
    %293 = vmatpush1.bf16.msra.mxu0 0
    %294 = vmatprep.subr.bf16.mxu0 0
    %295 = vmatpush1.bf16.msra.mxu0 0
    %296 = vmatprep.subr.bf16.mxu0 0
    %297 = vmatpush1.bf16.msra.mxu0 0
    %298 = vmatprep.subr.bf16.mxu0 0
    %299 = vmatpush1.bf16.msra.mxu0 0
    %300 = vmatprep.subr.bf16.mxu0 0
    %301 = vmatpush1.bf16.msra.mxu0 0
    %302 = vmatprep.subr.bf16.mxu0 0
    %303 = vmatpush1.bf16.msra.mxu0 0
    %304 = vmatprep.subr.bf16.mxu0 0
    %305 = vmatpush1.bf16.msra.mxu0 0
    %306 = vmatprep.subr.bf16.mxu0 0
    %307 = vmatpush1.bf16.msra.mxu0 0
    %308 = vmatprep.subr.bf16.mxu0 0
    %309 = vmatpush1.bf16.msra.mxu0 0
    %310 = vmatprep.mubr.bf16.mxu0 0
    %311 = vmatmul.mubr.bf16.gmra.mrb[0].mxu0 %v148
    %v312 = vpop.f32.mrb[0].mxu0
    %v313 = vadd.f32 %v264, %v312
    %v314 = vpop.f32.mrb[0].mxu0
    %v315 = vpop.f32.mrb[0].mxu0
    %v316 = vadd.f32 %v264, %v315
    %v317 = vpop.f32.mrb[0].mxu0
    %318 = vdwg.mxu0
    %v319 = vpack.c.bf16 %v188, %v185
    %v320 = vpack.c.bf16 %v252, %v249
    %vm321 = vcmask 130048
    %v323 = vsel %vm321, %v319, 0
    %v326 = vsel %vm321, %v320, 0
    %328 = vmatprep.subr.bf16.mxu0 0
    %329 = vmatpush1.bf16.xpose.msra.mxu0 %v326
    %330 = vmatprep.subr.bf16.mxu0 0
    %331 = vmatpush1.bf16.xpose.msra.mxu0 0
    %332 = vmatprep.subr.bf16.mxu0 0
    %333 = vmatpush1.bf16.xpose.msra.mxu0 0
    %334 = vmatprep.subr.bf16.mxu0 0
    %335 = vmatpush1.bf16.xpose.msra.mxu0 0
    %336 = vmatprep.subr.bf16.mxu0 0
    %337 = vmatpush1.bf16.xpose.msra.mxu0 0
    %338 = vmatprep.subr.bf16.mxu0 0
    %339 = vmatpush1.bf16.xpose.msra.mxu0 0
    %340 = vmatprep.subr.bf16.mxu0 0
    %341 = vmatpush1.bf16.xpose.msra.mxu0 0
    %342 = vmatprep.subr.bf16.mxu0 0
    %343 = vmatpush1.bf16.xpose.msra.mxu0 0
    %344 = vmatprep.subr.bf16.mxu0 0
    %345 = vmatpush1.bf16.xpose.msra.mxu0 0
    %346 = vmatprep.subr.bf16.mxu0 0
    %347 = vmatpush1.bf16.xpose.msra.mxu0 0
    %348 = vmatprep.subr.bf16.mxu0 0
    %349 = vmatpush1.bf16.xpose.msra.mxu0 0
    %350 = vmatprep.subr.bf16.mxu0 0
    %351 = vmatpush1.bf16.xpose.msra.mxu0 0
    %352 = vmatprep.subr.bf16.mxu0 0
    %353 = vmatpush1.bf16.xpose.msra.mxu0 0
    %354 = vmatprep.subr.bf16.mxu0 0
    %355 = vmatpush1.bf16.xpose.msra.mxu0 0
    %356 = vmatprep.subr.bf16.mxu0 0
    %357 = vmatpush1.bf16.xpose.msra.mxu0 0
    %358 = vmatprep.subr.bf16.mxu0 0
    %359 = vmatpush1.bf16.xpose.msra.mxu0 0
    %360 = vmatprep.mubr.bf16.mxu0 0
    %361 = vmatmul.mubr.bf16.gmra.mrb[0].mxu0 %v323
    %v362 = vpop.f32.mrb[0].mxu0
    %v363 = vadd.f32 0.0, %v362
    %v364 = vpop.f32.mrb[0].mxu0
    %v365 = vpop.f32.mrb[0].mxu0
    %v366 = vadd.f32 0.0, %v365
    %v367 = vpop.f32.mrb[0].mxu0
    %368 = vdwg.mxu0
    %v369 = vmul.f32 %v363, 0.25
    %v370 = vmul.f32 %v366, 0.25
    %v371 = vadd.f32 %v369, %v121
    %v372 = vadd.f32 %v370, %v122
    %v373 = vsel %vm321, %v371, -inf
    %374 = vmax.xlane.f32.xlu0 %v373
    %v375 = vpop.xlane.xlu0 %374
    %v376 = vsel %vm321, %v372, -inf
    %377 = vmax.xlane.f32.xlu0 %v376
    %v378 = vpop.xlane.xlu0 %377
    %v379 = vsub.f32 %v371, %v375
    %v380 = vsub.f32 %v372, %v378
    %v381 = vmul.f32 %v379, 1.442695
    %v382 = vpow.pop %v381
    %v383 = vmul.f32 %v380, 1.442695
    %v384 = vpow.pop %v383
    %v385 = vsel %vm321, %v382, 0.0
    %386 = vadd.xlane.f32.xlu0 %v385
    %v387 = vpop.xlane.xlu0 %386
    %v388 = vsel %vm321, %v384, 0.0
    %389 = vadd.xlane.f32.xlu0 %v388
    %v390 = vpop.xlane.xlu0 %389
    %v391 = vrcp.pop %v387
    %v392 = vrcp.pop %v390
    %v393 = vmul.f32 %v382, %v391
    %v394 = vmul.f32 %v384, %v392
    %v395 = vpack.c.bf16 %v394, %v393
    %v396 = vpack.c.bf16 %v316, %v313
    %v398 = vsel %vm321, %v395, 0
    %400 = vmatprep.subr.bf16.mxu0 0
    %401 = vmatpush1.bf16.msra.mxu0 %v396
    %402 = vmatprep.subr.bf16.mxu0 0
    %403 = vmatpush1.bf16.msra.mxu0 0
    %404 = vmatprep.subr.bf16.mxu0 0
    %405 = vmatpush1.bf16.msra.mxu0 0
    %406 = vmatprep.subr.bf16.mxu0 0
    %407 = vmatpush1.bf16.msra.mxu0 0
    %408 = vmatprep.subr.bf16.mxu0 0
    %409 = vmatpush1.bf16.msra.mxu0 0
    %410 = vmatprep.subr.bf16.mxu0 0
    %411 = vmatpush1.bf16.msra.mxu0 0
    %412 = vmatprep.subr.bf16.mxu0 0
    %413 = vmatpush1.bf16.msra.mxu0 0
    %414 = vmatprep.subr.bf16.mxu0 0
    %415 = vmatpush1.bf16.msra.mxu0 0
    %416 = vmatprep.subr.bf16.mxu0 0
    %417 = vmatpush1.bf16.msra.mxu0 0
    %418 = vmatprep.subr.bf16.mxu0 0
    %419 = vmatpush1.bf16.msra.mxu0 0
    %420 = vmatprep.subr.bf16.mxu0 0
    %421 = vmatpush1.bf16.msra.mxu0 0
    %422 = vmatprep.subr.bf16.mxu0 0
    %423 = vmatpush1.bf16.msra.mxu0 0
    %424 = vmatprep.subr.bf16.mxu0 0
    %425 = vmatpush1.bf16.msra.mxu0 0
    %426 = vmatprep.subr.bf16.mxu0 0
    %427 = vmatpush1.bf16.msra.mxu0 0
    %428 = vmatprep.subr.bf16.mxu0 0
    %429 = vmatpush1.bf16.msra.mxu0 0
    %430 = vmatprep.subr.bf16.mxu0 0
    %431 = vmatpush1.bf16.msra.mxu0 0
    %432 = vmatprep.mubr.bf16.mxu0 0
    %433 = vmatmul.mubr.bf16.gmra.mrb[0].mxu0 %v398
    %v434 = vpop.f32.mrb[0].mxu0
    %v435 = vadd.f32 0.0, %v434
    %v436 = vpop.f32.mrb[0].mxu0
    %v437 = vpop.f32.mrb[0].mxu0
    %v438 = vadd.f32 0.0, %v437
    %v439 = vpop.f32.mrb[0].mxu0
    %440 = vdwg.mxu0
    %v441 = vld [vmem:[%s10] sm:$0xf]
    %v442 = vld [vmem:[%s10 + $0x4] sm:$0xf]
    %v443 = vpack.c.bf16 %v438, %v435
    %s444 = scalar_lea.vmem %s4, 16
    %v445 = vld [vmem:[%s444] sm:$0xf]
    %v446 = vld [vmem:[%s444 + $0x4] sm:$0xf]
    %v447 = vld [vmem:[%s444 + $0x8] sm:$0xf]
    %v448 = vld [vmem:[%s444 + $0xc] sm:$0xf]
    %s449 = scalar_lea.vmem %s7, 1
    %v450 = vld [vmem:[%s449] sm:$0x1]
    %v452 = vlaneseq
    %v453 = vshrl.u32 %v452, 7
    %v454 = vsub.s32 0, %v453
    %v455 = vrot.slane %v450, %v454
    %v461 = vunpack.c.l.b16 %v445
    %v462 = vunpack.c.l.b16 %v446
    %v463 = vunpack.c.l.b16 %v447
    %v464 = vunpack.c.l.b16 %v448
    %v465 = vpack.c.b16 %v462, %v461
    %v466 = vpack.c.b16 %v464, %v463
    %469 = vmatprep.subr.bf16.mxu0 0
    %470 = vmatpush1.bf16.msra.mxu0 %v465
    %471 = vmatprep.subr.bf16.mxu0 0
    %472 = vmatpush1.bf16.msra.mxu0 %v466
    %473 = vmatprep.subr.bf16.mxu0 0
    %474 = vmatpush1.bf16.msra.mxu0 0
    %475 = vmatprep.subr.bf16.mxu0 0
    %476 = vmatpush1.bf16.msra.mxu0 0
    %477 = vmatprep.subr.bf16.mxu0 0
    %478 = vmatpush1.bf16.msra.mxu0 0
    %479 = vmatprep.subr.bf16.mxu0 0
    %480 = vmatpush1.bf16.msra.mxu0 0
    %481 = vmatprep.subr.bf16.mxu0 0
    %482 = vmatpush1.bf16.msra.mxu0 0
    %483 = vmatprep.subr.bf16.mxu0 0
    %484 = vmatpush1.bf16.msra.mxu0 0
    %485 = vmatprep.subr.bf16.mxu0 0
    %486 = vmatpush1.bf16.msra.mxu0 0
    %487 = vmatprep.subr.bf16.mxu0 0
    %488 = vmatpush1.bf16.msra.mxu0 0
    %489 = vmatprep.subr.bf16.mxu0 0
    %490 = vmatpush1.bf16.msra.mxu0 0
    %491 = vmatprep.subr.bf16.mxu0 0
    %492 = vmatpush1.bf16.msra.mxu0 0
    %493 = vmatprep.subr.bf16.mxu0 0
    %494 = vmatpush1.bf16.msra.mxu0 0
    %495 = vmatprep.subr.bf16.mxu0 0
    %496 = vmatpush1.bf16.msra.mxu0 0
    %497 = vmatprep.subr.bf16.mxu0 0
    %498 = vmatpush1.bf16.msra.mxu0 0
    %499 = vmatprep.subr.bf16.mxu0 0
    %500 = vmatpush1.bf16.msra.mxu0 0
    %501 = vmatprep.mubr.bf16.mxu0 0
    %502 = vmatmul.mubr.bf16.gmra.mrb[0].mxu0 %v148
    %v503 = vpop.f32.mrb[0].mxu0
    %v504 = vadd.f32 %v455, %v503
    %v505 = vpop.f32.mrb[0].mxu0
    %v506 = vpop.f32.mrb[0].mxu0
    %v507 = vadd.f32 %v455, %v506
    %v508 = vpop.f32.mrb[0].mxu0
    %509 = vdwg.mxu0
    %s510 = scalar_lea.vmem %s5, 16
    %v511 = vld [vmem:[%s510] sm:$0xf]
    %v512 = vld [vmem:[%s510 + $0x4] sm:$0xf]
    %v513 = vld [vmem:[%s510 + $0x8] sm:$0xf]
    %v514 = vld [vmem:[%s510 + $0xc] sm:$0xf]
    %s515 = scalar_lea.vmem %s8, 1
    %v516 = vld [vmem:[%s515] sm:$0x1]
    %v518 = vlaneseq
    %v519 = vshrl.u32 %v518, 7
    %v520 = vsub.s32 0, %v519
    %v521 = vrot.slane %v516, %v520
    %v527 = vunpack.c.l.b16 %v511
    %v528 = vunpack.c.l.b16 %v512
    %v529 = vunpack.c.l.b16 %v513
    %v530 = vunpack.c.l.b16 %v514
    %v531 = vpack.c.b16 %v528, %v527
    %v532 = vpack.c.b16 %v530, %v529
    %535 = vmatprep.subr.bf16.mxu0 0
    %536 = vmatpush1.bf16.msra.mxu0 %v531
    %537 = vmatprep.subr.bf16.mxu0 0
    %538 = vmatpush1.bf16.msra.mxu0 %v532
    %539 = vmatprep.subr.bf16.mxu0 0
    %540 = vmatpush1.bf16.msra.mxu0 0
    %541 = vmatprep.subr.bf16.mxu0 0
    %542 = vmatpush1.bf16.msra.mxu0 0
    %543 = vmatprep.subr.bf16.mxu0 0
    %544 = vmatpush1.bf16.msra.mxu0 0
    %545 = vmatprep.subr.bf16.mxu0 0
    %546 = vmatpush1.bf16.msra.mxu0 0
    %547 = vmatprep.subr.bf16.mxu0 0
    %548 = vmatpush1.bf16.msra.mxu0 0
    %549 = vmatprep.subr.bf16.mxu0 0
    %550 = vmatpush1.bf16.msra.mxu0 0
    %551 = vmatprep.subr.bf16.mxu0 0
    %552 = vmatpush1.bf16.msra.mxu0 0
    %553 = vmatprep.subr.bf16.mxu0 0
    %554 = vmatpush1.bf16.msra.mxu0 0
    %555 = vmatprep.subr.bf16.mxu0 0
    %556 = vmatpush1.bf16.msra.mxu0 0
    %557 = vmatprep.subr.bf16.mxu0 0
    %558 = vmatpush1.bf16.msra.mxu0 0
    %559 = vmatprep.subr.bf16.mxu0 0
    %560 = vmatpush1.bf16.msra.mxu0 0
    %561 = vmatprep.subr.bf16.mxu0 0
    %562 = vmatpush1.bf16.msra.mxu0 0
    %563 = vmatprep.subr.bf16.mxu0 0
    %564 = vmatpush1.bf16.msra.mxu0 0
    %565 = vmatprep.subr.bf16.mxu0 0
    %566 = vmatpush1.bf16.msra.mxu0 0
    %567 = vmatprep.mubr.bf16.mxu0 0
    %568 = vmatmul.mubr.bf16.gmra.mrb[0].mxu0 %v148
    %v569 = vpop.f32.mrb[0].mxu0
    %v570 = vadd.f32 %v521, %v569
    %v571 = vpop.f32.mrb[0].mxu0
    %v572 = vpop.f32.mrb[0].mxu0
    %v573 = vadd.f32 %v521, %v572
    %v574 = vpop.f32.mrb[0].mxu0
    %575 = vdwg.mxu0
    %s576 = scalar_lea.vmem %s6, 16
    %v577 = vld [vmem:[%s576] sm:$0xf]
    %v578 = vld [vmem:[%s576 + $0x4] sm:$0xf]
    %v579 = vld [vmem:[%s576 + $0x8] sm:$0xf]
    %v580 = vld [vmem:[%s576 + $0xc] sm:$0xf]
    %s581 = scalar_lea.vmem %s9, 1
    %v582 = vld [vmem:[%s581] sm:$0x1]
    %v584 = vlaneseq
    %v585 = vshrl.u32 %v584, 7
    %v586 = vsub.s32 0, %v585
    %v587 = vrot.slane %v582, %v586
    %v593 = vunpack.c.l.b16 %v577
    %v594 = vunpack.c.l.b16 %v578
    %v595 = vunpack.c.l.b16 %v579
    %v596 = vunpack.c.l.b16 %v580
    %v597 = vpack.c.b16 %v594, %v593
    %v598 = vpack.c.b16 %v596, %v595
    %601 = vmatprep.subr.bf16.mxu0 0
    %602 = vmatpush1.bf16.msra.mxu0 %v597
    %603 = vmatprep.subr.bf16.mxu0 0
    %604 = vmatpush1.bf16.msra.mxu0 %v598
    %605 = vmatprep.subr.bf16.mxu0 0
    %606 = vmatpush1.bf16.msra.mxu0 0
    %607 = vmatprep.subr.bf16.mxu0 0
    %608 = vmatpush1.bf16.msra.mxu0 0
    %609 = vmatprep.subr.bf16.mxu0 0
    %610 = vmatpush1.bf16.msra.mxu0 0
    %611 = vmatprep.subr.bf16.mxu0 0
    %612 = vmatpush1.bf16.msra.mxu0 0
    %613 = vmatprep.subr.bf16.mxu0 0
    %614 = vmatpush1.bf16.msra.mxu0 0
    %615 = vmatprep.subr.bf16.mxu0 0
    %616 = vmatpush1.bf16.msra.mxu0 0
    %617 = vmatprep.subr.bf16.mxu0 0
    %618 = vmatpush1.bf16.msra.mxu0 0
    %619 = vmatprep.subr.bf16.mxu0 0
    %620 = vmatpush1.bf16.msra.mxu0 0
    %621 = vmatprep.subr.bf16.mxu0 0
    %622 = vmatpush1.bf16.msra.mxu0 0
    %623 = vmatprep.subr.bf16.mxu0 0
    %624 = vmatpush1.bf16.msra.mxu0 0
    %625 = vmatprep.subr.bf16.mxu0 0
    %626 = vmatpush1.bf16.msra.mxu0 0
    %627 = vmatprep.subr.bf16.mxu0 0
    %628 = vmatpush1.bf16.msra.mxu0 0
    %629 = vmatprep.subr.bf16.mxu0 0
    %630 = vmatpush1.bf16.msra.mxu0 0
    %631 = vmatprep.subr.bf16.mxu0 0
    %632 = vmatpush1.bf16.msra.mxu0 0
    %633 = vmatprep.mubr.bf16.mxu0 0
    %634 = vmatmul.mubr.bf16.gmra.mrb[0].mxu0 %v148
    %v635 = vpop.f32.mrb[0].mxu0
    %v636 = vadd.f32 %v587, %v635
    %v637 = vpop.f32.mrb[0].mxu0
    %v638 = vpop.f32.mrb[0].mxu0
    %v639 = vadd.f32 %v587, %v638
    %v640 = vpop.f32.mrb[0].mxu0
    %641 = vdwg.mxu0
    %v642 = vpack.c.bf16 %v507, %v504
    %v643 = vpack.c.bf16 %v573, %v570
    %v645 = vsel %vm321, %v642, 0
    %v648 = vsel %vm321, %v643, 0
    %650 = vmatprep.subr.bf16.mxu0 0
    %651 = vmatpush1.bf16.xpose.msra.mxu0 %v648
    %652 = vmatprep.subr.bf16.mxu0 0
    %653 = vmatpush1.bf16.xpose.msra.mxu0 0
    %654 = vmatprep.subr.bf16.mxu0 0
    %655 = vmatpush1.bf16.xpose.msra.mxu0 0
    %656 = vmatprep.subr.bf16.mxu0 0
    %657 = vmatpush1.bf16.xpose.msra.mxu0 0
    %658 = vmatprep.subr.bf16.mxu0 0
    %659 = vmatpush1.bf16.xpose.msra.mxu0 0
    %660 = vmatprep.subr.bf16.mxu0 0
    %661 = vmatpush1.bf16.xpose.msra.mxu0 0
    %662 = vmatprep.subr.bf16.mxu0 0
    %663 = vmatpush1.bf16.xpose.msra.mxu0 0
    %664 = vmatprep.subr.bf16.mxu0 0
    %665 = vmatpush1.bf16.xpose.msra.mxu0 0
    %666 = vmatprep.subr.bf16.mxu0 0
    %667 = vmatpush1.bf16.xpose.msra.mxu0 0
    %668 = vmatprep.subr.bf16.mxu0 0
    %669 = vmatpush1.bf16.xpose.msra.mxu0 0
    %670 = vmatprep.subr.bf16.mxu0 0
    %671 = vmatpush1.bf16.xpose.msra.mxu0 0
    %672 = vmatprep.subr.bf16.mxu0 0
    %673 = vmatpush1.bf16.xpose.msra.mxu0 0
    %674 = vmatprep.subr.bf16.mxu0 0
    %675 = vmatpush1.bf16.xpose.msra.mxu0 0
    %676 = vmatprep.subr.bf16.mxu0 0
    %677 = vmatpush1.bf16.xpose.msra.mxu0 0
    %678 = vmatprep.subr.bf16.mxu0 0
    %679 = vmatpush1.bf16.xpose.msra.mxu0 0
    %680 = vmatprep.subr.bf16.mxu0 0
    %681 = vmatpush1.bf16.xpose.msra.mxu0 0
    %682 = vmatprep.mubr.bf16.mxu0 0
    %683 = vmatmul.mubr.bf16.gmra.mrb[0].mxu0 %v645
    %v684 = vpop.f32.mrb[0].mxu0
    %v685 = vadd.f32 0.0, %v684
    %v686 = vpop.f32.mrb[0].mxu0
    %v687 = vpop.f32.mrb[0].mxu0
    %v688 = vadd.f32 0.0, %v687
    %v689 = vpop.f32.mrb[0].mxu0
    %690 = vdwg.mxu0
    %v691 = vmul.f32 %v685, 0.25
    %v692 = vmul.f32 %v688, 0.25
    %v693 = vadd.f32 %v691, %v121
    %v694 = vadd.f32 %v692, %v122
    %v695 = vsel %vm321, %v693, -inf
    %696 = vmax.xlane.f32.xlu0 %v695
    %v697 = vpop.xlane.xlu0 %696
    %v698 = vsel %vm321, %v694, -inf
    %699 = vmax.xlane.f32.xlu0 %v698
    %v700 = vpop.xlane.xlu0 %699
    %v701 = vsub.f32 %v693, %v697
    %v702 = vsub.f32 %v694, %v700
    %v703 = vmul.f32 %v701, 1.442695
    %v704 = vpow.pop %v703
    %v705 = vmul.f32 %v702, 1.442695
    %v706 = vpow.pop %v705
    %v707 = vsel %vm321, %v704, 0.0
    %708 = vadd.xlane.f32.xlu0 %v707
    %v709 = vpop.xlane.xlu0 %708
    %v710 = vsel %vm321, %v706, 0.0
    %711 = vadd.xlane.f32.xlu0 %v710
    %v712 = vpop.xlane.xlu0 %711
    %v713 = vrcp.pop %v709
    %v714 = vrcp.pop %v712
    %v715 = vmul.f32 %v704, %v713
    %v716 = vmul.f32 %v706, %v714
    %v717 = vpack.c.bf16 %v716, %v715
    %v718 = vpack.c.bf16 %v639, %v636
    %v720 = vsel %vm321, %v717, 0
    %722 = vmatprep.subr.bf16.mxu0 0
    %723 = vmatpush1.bf16.msra.mxu0 %v718
    %724 = vmatprep.subr.bf16.mxu0 0
    %725 = vmatpush1.bf16.msra.mxu0 0
    %726 = vmatprep.subr.bf16.mxu0 0
    %727 = vmatpush1.bf16.msra.mxu0 0
    %728 = vmatprep.subr.bf16.mxu0 0
    %729 = vmatpush1.bf16.msra.mxu0 0
    %730 = vmatprep.subr.bf16.mxu0 0
    %731 = vmatpush1.bf16.msra.mxu0 0
    %732 = vmatprep.subr.bf16.mxu0 0
    %733 = vmatpush1.bf16.msra.mxu0 0
    %734 = vmatprep.subr.bf16.mxu0 0
    %735 = vmatpush1.bf16.msra.mxu0 0
    %736 = vmatprep.subr.bf16.mxu0 0
    %737 = vmatpush1.bf16.msra.mxu0 0
    %738 = vmatprep.subr.bf16.mxu0 0
    %739 = vmatpush1.bf16.msra.mxu0 0
    %740 = vmatprep.subr.bf16.mxu0 0
    %741 = vmatpush1.bf16.msra.mxu0 0
    %742 = vmatprep.subr.bf16.mxu0 0
    %743 = vmatpush1.bf16.msra.mxu0 0
    %744 = vmatprep.subr.bf16.mxu0 0
    %745 = vmatpush1.bf16.msra.mxu0 0
    %746 = vmatprep.subr.bf16.mxu0 0
    %747 = vmatpush1.bf16.msra.mxu0 0
    %748 = vmatprep.subr.bf16.mxu0 0
    %749 = vmatpush1.bf16.msra.mxu0 0
    %750 = vmatprep.subr.bf16.mxu0 0
    %751 = vmatpush1.bf16.msra.mxu0 0
    %752 = vmatprep.subr.bf16.mxu0 0
    %753 = vmatpush1.bf16.msra.mxu0 0
    %754 = vmatprep.mubr.bf16.mxu0 0
    %755 = vmatmul.mubr.bf16.gmra.mrb[0].mxu0 %v720
    %v756 = vpop.f32.mrb[0].mxu0
    %v757 = vadd.f32 0.0, %v756
    %v758 = vpop.f32.mrb[0].mxu0
    %v759 = vpop.f32.mrb[0].mxu0
    %v760 = vadd.f32 0.0, %v759
    %v761 = vpop.f32.mrb[0].mxu0
    %762 = vdwg.mxu0
    %s763 = scalar_lea.vmem %s10, 8
    %v764 = vld [vmem:[%s763] sm:$0xf]
    %v765 = vld [vmem:[%s763 + $0x4] sm:$0xf]
    %v766 = vpack.c.bf16 %v760, %v757
    %v769 = vunpack.c.l.b16 %v764
    %v770 = vunpack.c.l.b16 %v765
    %v771 = vpack.c.b16 %v770, %v769
    %v774 = vsel %vm321, %v766, 0
    %776 = vmatprep.subr.bf16.mxu0 0
    %777 = vmatpush1.bf16.msra.mxu0 %v771
    %778 = vmatprep.subr.bf16.mxu0 0
    %779 = vmatpush1.bf16.msra.mxu0 0
    %780 = vmatprep.subr.bf16.mxu0 0
    %781 = vmatpush1.bf16.msra.mxu0 0
    %782 = vmatprep.subr.bf16.mxu0 0
    %783 = vmatpush1.bf16.msra.mxu0 0
    %784 = vmatprep.subr.bf16.mxu0 0
    %785 = vmatpush1.bf16.msra.mxu0 0
    %786 = vmatprep.subr.bf16.mxu0 0
    %787 = vmatpush1.bf16.msra.mxu0 0
    %788 = vmatprep.subr.bf16.mxu0 0
    %789 = vmatpush1.bf16.msra.mxu0 0
    %790 = vmatprep.subr.bf16.mxu0 0
    %791 = vmatpush1.bf16.msra.mxu0 0
    %792 = vmatprep.subr.bf16.mxu0 0
    %793 = vmatpush1.bf16.msra.mxu0 0
    %794 = vmatprep.subr.bf16.mxu0 0
    %795 = vmatpush1.bf16.msra.mxu0 0
    %796 = vmatprep.subr.bf16.mxu0 0
    %797 = vmatpush1.bf16.msra.mxu0 0
    %798 = vmatprep.subr.bf16.mxu0 0
    %799 = vmatpush1.bf16.msra.mxu0 0
    %800 = vmatprep.subr.bf16.mxu0 0
    %801 = vmatpush1.bf16.msra.mxu0 0
    %802 = vmatprep.subr.bf16.mxu0 0
    %803 = vmatpush1.bf16.msra.mxu0 0
    %804 = vmatprep.subr.bf16.mxu0 0
    %805 = vmatpush1.bf16.msra.mxu0 0
    %806 = vmatprep.subr.bf16.mxu0 0
    %807 = vmatpush1.bf16.msra.mxu0 0
    %808 = vmatprep.mubr.bf16.mxu0 0
    %809 = vmatmul.mubr.bf16.gmra.mrb[0].mxu0 %v774
    %v810 = vpop.f32.mrb[0].mxu0
    %v811 = vadd.f32 0.0, %v810
    %v812 = vpop.f32.mrb[0].mxu0
    %v813 = vpop.f32.mrb[0].mxu0
    %v814 = vadd.f32 0.0, %v813
    %v815 = vpop.f32.mrb[0].mxu0
    %816 = vdwg.mxu0
    %v819 = vunpack.c.l.b16 %v441
    %v820 = vunpack.c.l.b16 %v442
    %v821 = vpack.c.b16 %v820, %v819
    %v824 = vsel %vm321, %v443, 0
    %826 = vmatprep.subr.bf16.mxu0 0
    %827 = vmatpush1.bf16.msra.mxu0 %v821
    %828 = vmatprep.subr.bf16.mxu0 0
    %829 = vmatpush1.bf16.msra.mxu0 0
    %830 = vmatprep.subr.bf16.mxu0 0
    %831 = vmatpush1.bf16.msra.mxu0 0
    %832 = vmatprep.subr.bf16.mxu0 0
    %833 = vmatpush1.bf16.msra.mxu0 0
    %834 = vmatprep.subr.bf16.mxu0 0
    %835 = vmatpush1.bf16.msra.mxu0 0
    %836 = vmatprep.subr.bf16.mxu0 0
    %837 = vmatpush1.bf16.msra.mxu0 0
    %838 = vmatprep.subr.bf16.mxu0 0
    %839 = vmatpush1.bf16.msra.mxu0 0
    %840 = vmatprep.subr.bf16.mxu0 0
    %841 = vmatpush1.bf16.msra.mxu0 0
    %842 = vmatprep.subr.bf16.mxu0 0
    %843 = vmatpush1.bf16.msra.mxu0 0
    %844 = vmatprep.subr.bf16.mxu0 0
    %845 = vmatpush1.bf16.msra.mxu0 0
    %846 = vmatprep.subr.bf16.mxu0 0
    %847 = vmatpush1.bf16.msra.mxu0 0
    %848 = vmatprep.subr.bf16.mxu0 0
    %849 = vmatpush1.bf16.msra.mxu0 0
    %850 = vmatprep.subr.bf16.mxu0 0
    %851 = vmatpush1.bf16.msra.mxu0 0
    %852 = vmatprep.subr.bf16.mxu0 0
    %853 = vmatpush1.bf16.msra.mxu0 0
    %854 = vmatprep.subr.bf16.mxu0 0
    %855 = vmatpush1.bf16.msra.mxu0 0
    %856 = vmatprep.subr.bf16.mxu0 0
    %857 = vmatpush1.bf16.msra.mxu0 0
    %858 = vmatprep.mubr.bf16.mxu0 0
    %859 = vmatmul.mubr.bf16.gmra.mrb[0].mxu0 %v824
    %v860 = vpop.f32.mrb[0].mxu0
    %v861 = vadd.f32 %v811, %v860
    %v862 = vpop.f32.mrb[0].mxu0
    %v863 = vpop.f32.mrb[0].mxu0
    %v864 = vadd.f32 %v814, %v863
    %v865 = vpop.f32.mrb[0].mxu0
    %866 = vdwg.mxu0
    %v867 = vld [vmem:[%s11] sm:$0x1]
    %v869 = vlaneseq
    %v870 = vshrl.u32 %v869, 7
    %v871 = vsub.s32 0, %v870
    %v872 = vrot.slane %v867, %v871
    %v874 = vadd.f32 %v861, %v872
    %v875 = vadd.f32 %v864, %v872
    %v876 = vadd.f32 %v874, %v119
    %v877 = vadd.f32 %v875, %v120
    %v878 = vld [vmem:[%s12] sm:$0x1]
    %v879 = vld [vmem:[%s13] sm:$0x1]
    %v880 = vsel %vm77, %v876, 0.0
    %881 = vadd.xlane.f32.xlu0 %v880
    %v882 = vpop.xlane.xlu0 %881
    %v883 = vsel %vm77, %v877, 0.0
    %884 = vadd.xlane.f32.xlu0 %v883
    %v885 = vpop.xlane.xlu0 %884
    %v886 = vmul.f32 %v882, %v84
    %v887 = vmul.f32 %v885, %v84
    %v888 = vsub.f32 %v876, %v886
    %v889 = vsub.f32 %v877, %v887
    %v890 = vmul.f32 %v888, %v888
    %v891 = vmul.f32 %v889, %v889
    %v892 = vsel %vm77, %v890, 0.0
    %893 = vadd.xlane.f32.xlu0 %v892
    %v894 = vpop.xlane.xlu0 %893
    %v895 = vsel %vm77, %v891, 0.0
    %896 = vadd.xlane.f32.xlu0 %v895
    %v897 = vpop.xlane.xlu0 %896
    %v898 = vmul.f32 %v894, %v84
    %v899 = vmul.f32 %v897, %v84
    %v900 = vadd.f32 %v898, 1e-12
    %v901 = vadd.f32 %v899, 1e-12
    %v902 = vrsqrt.pop %v900
    %v903 = vrsqrt.pop %v901
    %v904 = vmul.f32 %v888, %v902
    %v905 = vmul.f32 %v889, %v903
    %v907 = vlaneseq
    %v908 = vshrl.u32 %v907, 7
    %v909 = vsub.s32 0, %v908
    %v910 = vrot.slane %v878, %v909
    %v912 = vmul.f32 %v904, %v910
    %v913 = vmul.f32 %v905, %v910
    %v915 = vlaneseq
    %v916 = vshrl.u32 %v915, 7
    %v917 = vsub.s32 0, %v916
    %v918 = vrot.slane %v879, %v917
    %v920 = vadd.f32 %v912, %v918
    %v921 = vadd.f32 %v913, %v918
    %v922 = vld [vmem:[%s14] sm:$0xf]
    %v923 = vld [vmem:[%s14 + $0x4] sm:$0xf]
    %v924 = vld [vmem:[%s14 + $0x8] sm:$0xf]
    %v925 = vld [vmem:[%s14 + $0xc] sm:$0xf]
    %v926 = vpack.c.bf16 %v921, %v920
    %v927 = vld [vmem:[%s15] sm:$0x1]
    %v929 = vlaneseq
    %v930 = vshrl.u32 %v929, 7
    %v931 = vsub.s32 0, %v930
    %v932 = vrot.slane %v927, %v931
    %v938 = vunpack.c.l.b16 %v922
    %v939 = vunpack.c.l.b16 %v923
    %v940 = vunpack.c.l.b16 %v924
    %v941 = vunpack.c.l.b16 %v925
    %v942 = vpack.c.b16 %v939, %v938
    %v943 = vpack.c.b16 %v941, %v940
    %v947 = vsel %vm77, %v926, 0
    %949 = vmatprep.subr.bf16.mxu0 0
    %950 = vmatpush1.bf16.msra.mxu0 %v942
    %951 = vmatprep.subr.bf16.mxu0 0
    %952 = vmatpush1.bf16.msra.mxu0 %v943
    %953 = vmatprep.subr.bf16.mxu0 0
    %954 = vmatpush1.bf16.msra.mxu0 0
    %955 = vmatprep.subr.bf16.mxu0 0
    %956 = vmatpush1.bf16.msra.mxu0 0
    %957 = vmatprep.subr.bf16.mxu0 0
    %958 = vmatpush1.bf16.msra.mxu0 0
    %959 = vmatprep.subr.bf16.mxu0 0
    %960 = vmatpush1.bf16.msra.mxu0 0
    %961 = vmatprep.subr.bf16.mxu0 0
    %962 = vmatpush1.bf16.msra.mxu0 0
    %963 = vmatprep.subr.bf16.mxu0 0
    %964 = vmatpush1.bf16.msra.mxu0 0
    %965 = vmatprep.subr.bf16.mxu0 0
    %966 = vmatpush1.bf16.msra.mxu0 0
    %967 = vmatprep.subr.bf16.mxu0 0
    %968 = vmatpush1.bf16.msra.mxu0 0
    %969 = vmatprep.subr.bf16.mxu0 0
    %970 = vmatpush1.bf16.msra.mxu0 0
    %971 = vmatprep.subr.bf16.mxu0 0
    %972 = vmatpush1.bf16.msra.mxu0 0
    %973 = vmatprep.subr.bf16.mxu0 0
    %974 = vmatpush1.bf16.msra.mxu0 0
    %975 = vmatprep.subr.bf16.mxu0 0
    %976 = vmatpush1.bf16.msra.mxu0 0
    %977 = vmatprep.subr.bf16.mxu0 0
    %978 = vmatpush1.bf16.msra.mxu0 0
    %979 = vmatprep.subr.bf16.mxu0 0
    %980 = vmatpush1.bf16.msra.mxu0 0
    %981 = vmatprep.mubr.bf16.mxu0 0
    %982 = vmatmul.mubr.bf16.gmra.mrb[0].mxu0 %v947
    %v983 = vpop.f32.mrb[0].mxu0
    %v984 = vadd.f32 %v932, %v983
    %v985 = vpop.f32.mrb[0].mxu0
    %v986 = vpop.f32.mrb[0].mxu0
    %v987 = vadd.f32 %v932, %v986
    %v988 = vpop.f32.mrb[0].mxu0
    %989 = vdwg.mxu0
    %v990 = vmul.f32 %v984, 0.5
    %v991 = vmul.f32 %v987, 0.5
    %v992 = vmul.f32 %v984, 0.044715
    %v993 = vmul.f32 %v987, 0.044715
    %v994 = vmul.f32 %v992, %v984
    %v995 = vmul.f32 %v993, %v987
    %v996 = vmul.f32 %v994, %v984
    %v997 = vmul.f32 %v995, %v987
    %v998 = vadd.f32 %v984, %v996
    %v999 = vadd.f32 %v987, %v997
    %v1000 = vmul.f32 %v998, 0.7978846
    %v1001 = vmul.f32 %v999, 0.7978846
    %v1002 = vtanh.pop %v1000
    %v1003 = vtanh.pop %v1001
    %v1004 = vadd.f32 %v1002, 1.0
    %v1005 = vadd.f32 %v1003, 1.0
    %v1006 = vmul.f32 %v990, %v1004
    %v1007 = vmul.f32 %v991, %v1005
    %v1008 = vld [vmem:[%s16] sm:$0xf]
    %v1009 = vld [vmem:[%s16 + $0x4] sm:$0xf]
    %v1010 = vld [vmem:[%s16 + $0x8] sm:$0xf]
    %v1011 = vld [vmem:[%s16 + $0xc] sm:$0xf]
    %v1012 = vld [vmem:[%s16 + $0x10] sm:$0xf]
    %v1013 = vld [vmem:[%s16 + $0x14] sm:$0xf]
    %v1014 = vld [vmem:[%s16 + $0x18] sm:$0xf]
    %v1015 = vld [vmem:[%s16 + $0x1c] sm:$0xf]
    %v1016 = vpack.c.bf16 %v1007, %v1006
    %v1017 = vld [vmem:[%s17] sm:$0x1]
    %v1019 = vlaneseq
    %v1020 = vshrl.u32 %v1019, 7
    %v1021 = vsub.s32 0, %v1020
    %v1022 = vrot.slane %v1017, %v1021
    %v1032 = vunpack.c.l.b16 %v1008
    %v1033 = vunpack.c.l.b16 %v1009
    %v1034 = vunpack.c.l.b16 %v1010
    %v1035 = vunpack.c.l.b16 %v1011
    %v1036 = vunpack.c.l.b16 %v1012
    %v1037 = vunpack.c.l.b16 %v1013
    %v1038 = vunpack.c.l.b16 %v1014
    %v1039 = vunpack.c.l.b16 %v1015
    %v1040 = vpack.c.b16 %v1033, %v1032
    %v1041 = vpack.c.b16 %v1035, %v1034
    %v1042 = vpack.c.b16 %v1037, %v1036
    %v1043 = vpack.c.b16 %v1039, %v1038
    %vm1048 = vcmask 523264
    %v1050 = vsel %vm1048, %v1016, 0
    %1052 = vmatprep.subr.bf16.mxu0 0
    %1053 = vmatpush1.bf16.msra.mxu0 %v1040
    %1054 = vmatprep.subr.bf16.mxu0 0
    %1055 = vmatpush1.bf16.msra.mxu0 %v1041
    %1056 = vmatprep.subr.bf16.mxu0 0
    %1057 = vmatpush1.bf16.msra.mxu0 %v1042
    %1058 = vmatprep.subr.bf16.mxu0 0
    %1059 = vmatpush1.bf16.msra.mxu0 %v1043
    %1060 = vmatprep.subr.bf16.mxu0 0
    %1061 = vmatpush1.bf16.msra.mxu0 0
    %1062 = vmatprep.subr.bf16.mxu0 0
    %1063 = vmatpush1.bf16.msra.mxu0 0
    %1064 = vmatprep.subr.bf16.mxu0 0
    %1065 = vmatpush1.bf16.msra.mxu0 0
    %1066 = vmatprep.subr.bf16.mxu0 0
    %1067 = vmatpush1.bf16.msra.mxu0 0
    %1068 = vmatprep.subr.bf16.mxu0 0
    %1069 = vmatpush1.bf16.msra.mxu0 0
    %1070 = vmatprep.subr.bf16.mxu0 0
    %1071 = vmatpush1.bf16.msra.mxu0 0
    %1072 = vmatprep.subr.bf16.mxu0 0
    %1073 = vmatpush1.bf16.msra.mxu0 0
    %1074 = vmatprep.subr.bf16.mxu0 0
    %1075 = vmatpush1.bf16.msra.mxu0 0
    %1076 = vmatprep.subr.bf16.mxu0 0
    %1077 = vmatpush1.bf16.msra.mxu0 0
    %1078 = vmatprep.subr.bf16.mxu0 0
    %1079 = vmatpush1.bf16.msra.mxu0 0
    %1080 = vmatprep.subr.bf16.mxu0 0
    %1081 = vmatpush1.bf16.msra.mxu0 0
    %1082 = vmatprep.subr.bf16.mxu0 0
    %1083 = vmatpush1.bf16.msra.mxu0 0
    %1084 = vmatprep.mubr.bf16.mxu0 0
    %1085 = vmatmul.mubr.bf16.gmra.mrb[0].mxu0 %v1050
    %v1086 = vpop.f32.mrb[0].mxu0
    %v1087 = vadd.f32 %v1022, %v1086
    %v1088 = vpop.f32.mrb[0].mxu0
    %v1089 = vpop.f32.mrb[0].mxu0
    %v1090 = vadd.f32 %v1022, %v1089
    %v1091 = vpop.f32.mrb[0].mxu0
    %1092 = vdwg.mxu0
    %v1093 = vadd.f32 %v1087, %v920
    %v1094 = vadd.f32 %v1090, %v921
    %v1095 = vld [vmem:[%s18] sm:$0x1]
    %v1096 = vld [vmem:[%s19] sm:$0x1]
    %v1097 = vsel %vm77, %v1093, 0.0
    %1098 = vadd.xlane.f32.xlu0 %v1097
    %v1099 = vpop.xlane.xlu0 %1098
    %v1100 = vsel %vm77, %v1094, 0.0
    %1101 = vadd.xlane.f32.xlu0 %v1100
    %v1102 = vpop.xlane.xlu0 %1101
    %v1103 = vmul.f32 %v1099, %v84
    %v1104 = vmul.f32 %v1102, %v84
    %v1105 = vsub.f32 %v1093, %v1103
    %v1106 = vsub.f32 %v1094, %v1104
    %v1107 = vmul.f32 %v1105, %v1105
    %v1108 = vmul.f32 %v1106, %v1106
    %v1109 = vsel %vm77, %v1107, 0.0
    %1110 = vadd.xlane.f32.xlu0 %v1109
    %v1111 = vpop.xlane.xlu0 %1110
    %v1112 = vsel %vm77, %v1108, 0.0
    %1113 = vadd.xlane.f32.xlu0 %v1112
    %v1114 = vpop.xlane.xlu0 %1113
    %v1115 = vmul.f32 %v1111, %v84
    %v1116 = vmul.f32 %v1114, %v84
    %v1117 = vadd.f32 %v1115, 1e-12
    %v1118 = vadd.f32 %v1116, 1e-12
    %v1119 = vrsqrt.pop %v1117
    %v1120 = vrsqrt.pop %v1118
    %v1121 = vmul.f32 %v1105, %v1119
    %v1122 = vmul.f32 %v1106, %v1120
    %v1124 = vlaneseq
    %v1125 = vshrl.u32 %v1124, 7
    %v1126 = vsub.s32 0, %v1125
    %v1127 = vrot.slane %v1095, %v1126
    %v1129 = vmul.f32 %v1121, %v1127
    %v1130 = vmul.f32 %v1122, %v1127
    %v1132 = vlaneseq
    %v1133 = vshrl.u32 %v1132, 7
    %v1134 = vsub.s32 0, %v1133
    %v1135 = vrot.slane %v1096, %v1134
    %v1137 = vadd.f32 %v1129, %v1135
    %v1138 = vadd.f32 %v1130, %v1135
    %s1139 = scalar_lea.vmem %s4, 32
    %v1140 = vld [vmem:[%s1139] sm:$0xf]
    %v1141 = vld [vmem:[%s1139 + $0x4] sm:$0xf]
    %v1142 = vld [vmem:[%s1139 + $0x8] sm:$0xf]
    %v1143 = vld [vmem:[%s1139 + $0xc] sm:$0xf]
    %v1144 = vpack.c.bf16 %v1138, %v1137
    %s1145 = scalar_lea.vmem %s7, 2
    %v1146 = vld [vmem:[%s1145] sm:$0x1]
    %v1148 = vlaneseq
    %v1149 = vshrl.u32 %v1148, 7
    %v1150 = vsub.s32 0, %v1149
    %v1151 = vrot.slane %v1146, %v1150
    %v1157 = vunpack.c.l.b16 %v1140
    %v1158 = vunpack.c.l.b16 %v1141
    %v1159 = vunpack.c.l.b16 %v1142
    %v1160 = vunpack.c.l.b16 %v1143
    %v1161 = vpack.c.b16 %v1158, %v1157
    %v1162 = vpack.c.b16 %v1160, %v1159
    %v1166 = vsel %vm77, %v1144, 0
    %1168 = vmatprep.subr.bf16.mxu0 0
    %1169 = vmatpush1.bf16.msra.mxu0 %v1161
    %1170 = vmatprep.subr.bf16.mxu0 0
    %1171 = vmatpush1.bf16.msra.mxu0 %v1162
    %1172 = vmatprep.subr.bf16.mxu0 0
    %1173 = vmatpush1.bf16.msra.mxu0 0
    %1174 = vmatprep.subr.bf16.mxu0 0
    %1175 = vmatpush1.bf16.msra.mxu0 0
    %1176 = vmatprep.subr.bf16.mxu0 0
    %1177 = vmatpush1.bf16.msra.mxu0 0
    %1178 = vmatprep.subr.bf16.mxu0 0
    %1179 = vmatpush1.bf16.msra.mxu0 0
    %1180 = vmatprep.subr.bf16.mxu0 0
    %1181 = vmatpush1.bf16.msra.mxu0 0
    %1182 = vmatprep.subr.bf16.mxu0 0
    %1183 = vmatpush1.bf16.msra.mxu0 0
    %1184 = vmatprep.subr.bf16.mxu0 0
    %1185 = vmatpush1.bf16.msra.mxu0 0
    %1186 = vmatprep.subr.bf16.mxu0 0
    %1187 = vmatpush1.bf16.msra.mxu0 0
    %1188 = vmatprep.subr.bf16.mxu0 0
    %1189 = vmatpush1.bf16.msra.mxu0 0
    %1190 = vmatprep.subr.bf16.mxu0 0
    %1191 = vmatpush1.bf16.msra.mxu0 0
    %1192 = vmatprep.subr.bf16.mxu0 0
    %1193 = vmatpush1.bf16.msra.mxu0 0
    %1194 = vmatprep.subr.bf16.mxu0 0
    %1195 = vmatpush1.bf16.msra.mxu0 0
    %1196 = vmatprep.subr.bf16.mxu0 0
    %1197 = vmatpush1.bf16.msra.mxu0 0
    %1198 = vmatprep.subr.bf16.mxu0 0
    %1199 = vmatpush1.bf16.msra.mxu0 0
    %1200 = vmatprep.mubr.bf16.mxu0 0
    %1201 = vmatmul.mubr.bf16.gmra.mrb[0].mxu0 %v1166
    %v1202 = vpop.f32.mrb[0].mxu0
    %v1203 = vadd.f32 %v1151, %v1202
    %v1204 = vpop.f32.mrb[0].mxu0
    %v1205 = vpop.f32.mrb[0].mxu0
    %v1206 = vadd.f32 %v1151, %v1205
    %v1207 = vpop.f32.mrb[0].mxu0
    %1208 = vdwg.mxu0
    %s1209 = scalar_lea.vmem %s5, 32
    %v1210 = vld [vmem:[%s1209] sm:$0xf]
    %v1211 = vld [vmem:[%s1209 + $0x4] sm:$0xf]
    %v1212 = vld [vmem:[%s1209 + $0x8] sm:$0xf]
    %v1213 = vld [vmem:[%s1209 + $0xc] sm:$0xf]
    %s1214 = scalar_lea.vmem %s8, 2
    %v1215 = vld [vmem:[%s1214] sm:$0x1]
    %v1217 = vlaneseq
    %v1218 = vshrl.u32 %v1217, 7
    %v1219 = vsub.s32 0, %v1218
    %v1220 = vrot.slane %v1215, %v1219
    %v1226 = vunpack.c.l.b16 %v1210
    %v1227 = vunpack.c.l.b16 %v1211
    %v1228 = vunpack.c.l.b16 %v1212
    %v1229 = vunpack.c.l.b16 %v1213
    %v1230 = vpack.c.b16 %v1227, %v1226
    %v1231 = vpack.c.b16 %v1229, %v1228
    %1234 = vmatprep.subr.bf16.mxu0 0
    %1235 = vmatpush1.bf16.msra.mxu0 %v1230
    %1236 = vmatprep.subr.bf16.mxu0 0
    %1237 = vmatpush1.bf16.msra.mxu0 %v1231
    %1238 = vmatprep.subr.bf16.mxu0 0
    %1239 = vmatpush1.bf16.msra.mxu0 0
    %1240 = vmatprep.subr.bf16.mxu0 0
    %1241 = vmatpush1.bf16.msra.mxu0 0
    %1242 = vmatprep.subr.bf16.mxu0 0
    %1243 = vmatpush1.bf16.msra.mxu0 0
    %1244 = vmatprep.subr.bf16.mxu0 0
    %1245 = vmatpush1.bf16.msra.mxu0 0
    %1246 = vmatprep.subr.bf16.mxu0 0
    %1247 = vmatpush1.bf16.msra.mxu0 0
    %1248 = vmatprep.subr.bf16.mxu0 0
    %1249 = vmatpush1.bf16.msra.mxu0 0
    %1250 = vmatprep.subr.bf16.mxu0 0
    %1251 = vmatpush1.bf16.msra.mxu0 0
    %1252 = vmatprep.subr.bf16.mxu0 0
    %1253 = vmatpush1.bf16.msra.mxu0 0
    %1254 = vmatprep.subr.bf16.mxu0 0
    %1255 = vmatpush1.bf16.msra.mxu0 0
    %1256 = vmatprep.subr.bf16.mxu0 0
    %1257 = vmatpush1.bf16.msra.mxu0 0
    %1258 = vmatprep.subr.bf16.mxu0 0
    %1259 = vmatpush1.bf16.msra.mxu0 0
    %1260 = vmatprep.subr.bf16.mxu0 0
    %1261 = vmatpush1.bf16.msra.mxu0 0
    %1262 = vmatprep.subr.bf16.mxu0 0
    %1263 = vmatpush1.bf16.msra.mxu0 0
    %1264 = vmatprep.subr.bf16.mxu0 0
    %1265 = vmatpush1.bf16.msra.mxu0 0
    %1266 = vmatprep.mubr.bf16.mxu0 0
    %1267 = vmatmul.mubr.bf16.gmra.mrb[0].mxu0 %v1166
    %v1268 = vpop.f32.mrb[0].mxu0
    %v1269 = vadd.f32 %v1220, %v1268
    %v1270 = vpop.f32.mrb[0].mxu0
    %v1271 = vpop.f32.mrb[0].mxu0
    %v1272 = vadd.f32 %v1220, %v1271
    %v1273 = vpop.f32.mrb[0].mxu0
    %1274 = vdwg.mxu0
    %s1275 = scalar_lea.vmem %s6, 32
    %v1276 = vld [vmem:[%s1275] sm:$0xf]
    %v1277 = vld [vmem:[%s1275 + $0x4] sm:$0xf]
    %v1278 = vld [vmem:[%s1275 + $0x8] sm:$0xf]
    %v1279 = vld [vmem:[%s1275 + $0xc] sm:$0xf]
    %s1280 = scalar_lea.vmem %s9, 2
    %v1281 = vld [vmem:[%s1280] sm:$0x1]
    %v1283 = vlaneseq
    %v1284 = vshrl.u32 %v1283, 7
    %v1285 = vsub.s32 0, %v1284
    %v1286 = vrot.slane %v1281, %v1285
    %v1292 = vunpack.c.l.b16 %v1276
    %v1293 = vunpack.c.l.b16 %v1277
    %v1294 = vunpack.c.l.b16 %v1278
    %v1295 = vunpack.c.l.b16 %v1279
    %v1296 = vpack.c.b16 %v1293, %v1292
    %v1297 = vpack.c.b16 %v1295, %v1294
    %1300 = vmatprep.subr.bf16.mxu0 0
    %1301 = vmatpush1.bf16.msra.mxu0 %v1296
    %1302 = vmatprep.subr.bf16.mxu0 0
    %1303 = vmatpush1.bf16.msra.mxu0 %v1297
    %1304 = vmatprep.subr.bf16.mxu0 0
    %1305 = vmatpush1.bf16.msra.mxu0 0
    %1306 = vmatprep.subr.bf16.mxu0 0
    %1307 = vmatpush1.bf16.msra.mxu0 0
    %1308 = vmatprep.subr.bf16.mxu0 0
    %1309 = vmatpush1.bf16.msra.mxu0 0
    %1310 = vmatprep.subr.bf16.mxu0 0
    %1311 = vmatpush1.bf16.msra.mxu0 0
    %1312 = vmatprep.subr.bf16.mxu0 0
    %1313 = vmatpush1.bf16.msra.mxu0 0
    %1314 = vmatprep.subr.bf16.mxu0 0
    %1315 = vmatpush1.bf16.msra.mxu0 0
    %1316 = vmatprep.subr.bf16.mxu0 0
    %1317 = vmatpush1.bf16.msra.mxu0 0
    %1318 = vmatprep.subr.bf16.mxu0 0
    %1319 = vmatpush1.bf16.msra.mxu0 0
    %1320 = vmatprep.subr.bf16.mxu0 0
    %1321 = vmatpush1.bf16.msra.mxu0 0
    %1322 = vmatprep.subr.bf16.mxu0 0
    %1323 = vmatpush1.bf16.msra.mxu0 0
    %1324 = vmatprep.subr.bf16.mxu0 0
    %1325 = vmatpush1.bf16.msra.mxu0 0
    %1326 = vmatprep.subr.bf16.mxu0 0
    %1327 = vmatpush1.bf16.msra.mxu0 0
    %1328 = vmatprep.subr.bf16.mxu0 0
    %1329 = vmatpush1.bf16.msra.mxu0 0
    %1330 = vmatprep.subr.bf16.mxu0 0
    %1331 = vmatpush1.bf16.msra.mxu0 0
    %1332 = vmatprep.mubr.bf16.mxu0 0
    %1333 = vmatmul.mubr.bf16.gmra.mrb[0].mxu0 %v1166
    %v1334 = vpop.f32.mrb[0].mxu0
    %v1335 = vadd.f32 %v1286, %v1334
    %v1336 = vpop.f32.mrb[0].mxu0
    %v1337 = vpop.f32.mrb[0].mxu0
    %v1338 = vadd.f32 %v1286, %v1337
    %v1339 = vpop.f32.mrb[0].mxu0
    %1340 = vdwg.mxu0
    %v1341 = vpack.c.bf16 %v1206, %v1203
    %v1342 = vpack.c.bf16 %v1272, %v1269
    %v1344 = vsel %vm321, %v1341, 0
    %v1347 = vsel %vm321, %v1342, 0
    %1349 = vmatprep.subr.bf16.mxu0 0
    %1350 = vmatpush1.bf16.xpose.msra.mxu0 %v1347
    %1351 = vmatprep.subr.bf16.mxu0 0
    %1352 = vmatpush1.bf16.xpose.msra.mxu0 0
    %1353 = vmatprep.subr.bf16.mxu0 0
    %1354 = vmatpush1.bf16.xpose.msra.mxu0 0
    %1355 = vmatprep.subr.bf16.mxu0 0
    %1356 = vmatpush1.bf16.xpose.msra.mxu0 0
    %1357 = vmatprep.subr.bf16.mxu0 0
    %1358 = vmatpush1.bf16.xpose.msra.mxu0 0
    %1359 = vmatprep.subr.bf16.mxu0 0
    %1360 = vmatpush1.bf16.xpose.msra.mxu0 0
    %1361 = vmatprep.subr.bf16.mxu0 0
    %1362 = vmatpush1.bf16.xpose.msra.mxu0 0
    %1363 = vmatprep.subr.bf16.mxu0 0
    %1364 = vmatpush1.bf16.xpose.msra.mxu0 0
    %1365 = vmatprep.subr.bf16.mxu0 0
    %1366 = vmatpush1.bf16.xpose.msra.mxu0 0
    %1367 = vmatprep.subr.bf16.mxu0 0
    %1368 = vmatpush1.bf16.xpose.msra.mxu0 0
    %1369 = vmatprep.subr.bf16.mxu0 0
    %1370 = vmatpush1.bf16.xpose.msra.mxu0 0
    %1371 = vmatprep.subr.bf16.mxu0 0
    %1372 = vmatpush1.bf16.xpose.msra.mxu0 0
    %1373 = vmatprep.subr.bf16.mxu0 0
    %1374 = vmatpush1.bf16.xpose.msra.mxu0 0
    %1375 = vmatprep.subr.bf16.mxu0 0
    %1376 = vmatpush1.bf16.xpose.msra.mxu0 0
    %1377 = vmatprep.subr.bf16.mxu0 0
    %1378 = vmatpush1.bf16.xpose.msra.mxu0 0
    %1379 = vmatprep.subr.bf16.mxu0 0
    %1380 = vmatpush1.bf16.xpose.msra.mxu0 0
    %1381 = vmatprep.mubr.bf16.mxu0 0
    %1382 = vmatmul.mubr.bf16.gmra.mrb[0].mxu0 %v1344
    %v1383 = vpop.f32.mrb[0].mxu0
    %v1384 = vadd.f32 0.0, %v1383
    %v1385 = vpop.f32.mrb[0].mxu0
    %v1386 = vpop.f32.mrb[0].mxu0
    %v1387 = vadd.f32 0.0, %v1386
    %v1388 = vpop.f32.mrb[0].mxu0
    %1389 = vdwg.mxu0
    %v1390 = vmul.f32 %v1384, 0.25
    %v1391 = vmul.f32 %v1387, 0.25
    %v1392 = vadd.f32 %v1390, %v121
    %v1393 = vadd.f32 %v1391, %v122
    %v1394 = vsel %vm321, %v1392, -inf
    %1395 = vmax.xlane.f32.xlu0 %v1394
    %v1396 = vpop.xlane.xlu0 %1395
    %v1397 = vsel %vm321, %v1393, -inf
    %1398 = vmax.xlane.f32.xlu0 %v1397
    %v1399 = vpop.xlane.xlu0 %1398
    %v1400 = vsub.f32 %v1392, %v1396
    %v1401 = vsub.f32 %v1393, %v1399
    %v1402 = vmul.f32 %v1400, 1.442695
    %v1403 = vpow.pop %v1402
    %v1404 = vmul.f32 %v1401, 1.442695
    %v1405 = vpow.pop %v1404
    %v1406 = vsel %vm321, %v1403, 0.0
    %1407 = vadd.xlane.f32.xlu0 %v1406
    %v1408 = vpop.xlane.xlu0 %1407
    %v1409 = vsel %vm321, %v1405, 0.0
    %1410 = vadd.xlane.f32.xlu0 %v1409
    %v1411 = vpop.xlane.xlu0 %1410
    %v1412 = vrcp.pop %v1408
    %v1413 = vrcp.pop %v1411
    %v1414 = vmul.f32 %v1403, %v1412
    %v1415 = vmul.f32 %v1405, %v1413
    %v1416 = vpack.c.bf16 %v1415, %v1414
    %v1417 = vpack.c.bf16 %v1338, %v1335
    %v1419 = vsel %vm321, %v1416, 0
    %1421 = vmatprep.subr.bf16.mxu0 0
    %1422 = vmatpush1.bf16.msra.mxu0 %v1417
    %1423 = vmatprep.subr.bf16.mxu0 0
    %1424 = vmatpush1.bf16.msra.mxu0 0
    %1425 = vmatprep.subr.bf16.mxu0 0
    %1426 = vmatpush1.bf16.msra.mxu0 0
    %1427 = vmatprep.subr.bf16.mxu0 0
    %1428 = vmatpush1.bf16.msra.mxu0 0
    %1429 = vmatprep.subr.bf16.mxu0 0
    %1430 = vmatpush1.bf16.msra.mxu0 0
    %1431 = vmatprep.subr.bf16.mxu0 0
    %1432 = vmatpush1.bf16.msra.mxu0 0
    %1433 = vmatprep.subr.bf16.mxu0 0
    %1434 = vmatpush1.bf16.msra.mxu0 0
    %1435 = vmatprep.subr.bf16.mxu0 0
    %1436 = vmatpush1.bf16.msra.mxu0 0
    %1437 = vmatprep.subr.bf16.mxu0 0
    %1438 = vmatpush1.bf16.msra.mxu0 0
    %1439 = vmatprep.subr.bf16.mxu0 0
    %1440 = vmatpush1.bf16.msra.mxu0 0
    %1441 = vmatprep.subr.bf16.mxu0 0
    %1442 = vmatpush1.bf16.msra.mxu0 0
    %1443 = vmatprep.subr.bf16.mxu0 0
    %1444 = vmatpush1.bf16.msra.mxu0 0
    %1445 = vmatprep.subr.bf16.mxu0 0
    %1446 = vmatpush1.bf16.msra.mxu0 0
    %1447 = vmatprep.subr.bf16.mxu0 0
    %1448 = vmatpush1.bf16.msra.mxu0 0
    %1449 = vmatprep.subr.bf16.mxu0 0
    %1450 = vmatpush1.bf16.msra.mxu0 0
    %1451 = vmatprep.subr.bf16.mxu0 0
    %1452 = vmatpush1.bf16.msra.mxu0 0
    %1453 = vmatprep.mubr.bf16.mxu0 0
    %1454 = vmatmul.mubr.bf16.gmra.mrb[0].mxu0 %v1419
    %v1455 = vpop.f32.mrb[0].mxu0
    %v1456 = vadd.f32 0.0, %v1455
    %v1457 = vpop.f32.mrb[0].mxu0
    %v1458 = vpop.f32.mrb[0].mxu0
    %v1459 = vadd.f32 0.0, %v1458
    %v1460 = vpop.f32.mrb[0].mxu0
    %1461 = vdwg.mxu0
    %s1462 = scalar_lea.vmem %s10, 16
    %v1463 = vld [vmem:[%s1462] sm:$0xf]
    %v1464 = vld [vmem:[%s1462 + $0x4] sm:$0xf]
    %v1465 = vpack.c.bf16 %v1459, %v1456
    %s1466 = scalar_lea.vmem %s4, 48
    %v1467 = vld [vmem:[%s1466] sm:$0xf]
    %v1468 = vld [vmem:[%s1466 + $0x4] sm:$0xf]
    %v1469 = vld [vmem:[%s1466 + $0x8] sm:$0xf]
    %v1470 = vld [vmem:[%s1466 + $0xc] sm:$0xf]
    %s1471 = scalar_lea.vmem %s7, 3
    %v1472 = vld [vmem:[%s1471] sm:$0x1]
    %v1474 = vlaneseq
    %v1475 = vshrl.u32 %v1474, 7
    %v1476 = vsub.s32 0, %v1475
    %v1477 = vrot.slane %v1472, %v1476
    %v1483 = vunpack.c.l.b16 %v1467
    %v1484 = vunpack.c.l.b16 %v1468
    %v1485 = vunpack.c.l.b16 %v1469
    %v1486 = vunpack.c.l.b16 %v1470
    %v1487 = vpack.c.b16 %v1484, %v1483
    %v1488 = vpack.c.b16 %v1486, %v1485
    %1491 = vmatprep.subr.bf16.mxu0 0
    %1492 = vmatpush1.bf16.msra.mxu0 %v1487
    %1493 = vmatprep.subr.bf16.mxu0 0
    %1494 = vmatpush1.bf16.msra.mxu0 %v1488
    %1495 = vmatprep.subr.bf16.mxu0 0
    %1496 = vmatpush1.bf16.msra.mxu0 0
    %1497 = vmatprep.subr.bf16.mxu0 0
    %1498 = vmatpush1.bf16.msra.mxu0 0
    %1499 = vmatprep.subr.bf16.mxu0 0
    %1500 = vmatpush1.bf16.msra.mxu0 0
    %1501 = vmatprep.subr.bf16.mxu0 0
    %1502 = vmatpush1.bf16.msra.mxu0 0
    %1503 = vmatprep.subr.bf16.mxu0 0
    %1504 = vmatpush1.bf16.msra.mxu0 0
    %1505 = vmatprep.subr.bf16.mxu0 0
    %1506 = vmatpush1.bf16.msra.mxu0 0
    %1507 = vmatprep.subr.bf16.mxu0 0
    %1508 = vmatpush1.bf16.msra.mxu0 0
    %1509 = vmatprep.subr.bf16.mxu0 0
    %1510 = vmatpush1.bf16.msra.mxu0 0
    %1511 = vmatprep.subr.bf16.mxu0 0
    %1512 = vmatpush1.bf16.msra.mxu0 0
    %1513 = vmatprep.subr.bf16.mxu0 0
    %1514 = vmatpush1.bf16.msra.mxu0 0
    %1515 = vmatprep.subr.bf16.mxu0 0
    %1516 = vmatpush1.bf16.msra.mxu0 0
    %1517 = vmatprep.subr.bf16.mxu0 0
    %1518 = vmatpush1.bf16.msra.mxu0 0
    %1519 = vmatprep.subr.bf16.mxu0 0
    %1520 = vmatpush1.bf16.msra.mxu0 0
    %1521 = vmatprep.subr.bf16.mxu0 0
    %1522 = vmatpush1.bf16.msra.mxu0 0
    %1523 = vmatprep.mubr.bf16.mxu0 0
    %1524 = vmatmul.mubr.bf16.gmra.mrb[0].mxu0 %v1166
    %v1525 = vpop.f32.mrb[0].mxu0
    %v1526 = vadd.f32 %v1477, %v1525
    %v1527 = vpop.f32.mrb[0].mxu0
    %v1528 = vpop.f32.mrb[0].mxu0
    %v1529 = vadd.f32 %v1477, %v1528
    %v1530 = vpop.f32.mrb[0].mxu0
    %1531 = vdwg.mxu0
    %s1532 = scalar_lea.vmem %s5, 48
    %v1533 = vld [vmem:[%s1532] sm:$0xf]
    %v1534 = vld [vmem:[%s1532 + $0x4] sm:$0xf]
    %v1535 = vld [vmem:[%s1532 + $0x8] sm:$0xf]
    %v1536 = vld [vmem:[%s1532 + $0xc] sm:$0xf]
    %s1537 = scalar_lea.vmem %s8, 3
    %v1538 = vld [vmem:[%s1537] sm:$0x1]
    %v1540 = vlaneseq
    %v1541 = vshrl.u32 %v1540, 7
    %v1542 = vsub.s32 0, %v1541
    %v1543 = vrot.slane %v1538, %v1542
    %v1549 = vunpack.c.l.b16 %v1533
    %v1550 = vunpack.c.l.b16 %v1534
    %v1551 = vunpack.c.l.b16 %v1535
    %v1552 = vunpack.c.l.b16 %v1536
    %v1553 = vpack.c.b16 %v1550, %v1549
    %v1554 = vpack.c.b16 %v1552, %v1551
    %1557 = vmatprep.subr.bf16.mxu0 0
    %1558 = vmatpush1.bf16.msra.mxu0 %v1553
    %1559 = vmatprep.subr.bf16.mxu0 0
    %1560 = vmatpush1.bf16.msra.mxu0 %v1554
    %1561 = vmatprep.subr.bf16.mxu0 0
    %1562 = vmatpush1.bf16.msra.mxu0 0
    %1563 = vmatprep.subr.bf16.mxu0 0
    %1564 = vmatpush1.bf16.msra.mxu0 0
    %1565 = vmatprep.subr.bf16.mxu0 0
    %1566 = vmatpush1.bf16.msra.mxu0 0
    %1567 = vmatprep.subr.bf16.mxu0 0
    %1568 = vmatpush1.bf16.msra.mxu0 0
    %1569 = vmatprep.subr.bf16.mxu0 0
    %1570 = vmatpush1.bf16.msra.mxu0 0
    %1571 = vmatprep.subr.bf16.mxu0 0
    %1572 = vmatpush1.bf16.msra.mxu0 0
    %1573 = vmatprep.subr.bf16.mxu0 0
    %1574 = vmatpush1.bf16.msra.mxu0 0
    %1575 = vmatprep.subr.bf16.mxu0 0
    %1576 = vmatpush1.bf16.msra.mxu0 0
    %1577 = vmatprep.subr.bf16.mxu0 0
    %1578 = vmatpush1.bf16.msra.mxu0 0
    %1579 = vmatprep.subr.bf16.mxu0 0
    %1580 = vmatpush1.bf16.msra.mxu0 0
    %1581 = vmatprep.subr.bf16.mxu0 0
    %1582 = vmatpush1.bf16.msra.mxu0 0
    %1583 = vmatprep.subr.bf16.mxu0 0
    %1584 = vmatpush1.bf16.msra.mxu0 0
    %1585 = vmatprep.subr.bf16.mxu0 0
    %1586 = vmatpush1.bf16.msra.mxu0 0
    %1587 = vmatprep.subr.bf16.mxu0 0
    %1588 = vmatpush1.bf16.msra.mxu0 0
    %1589 = vmatprep.mubr.bf16.mxu0 0
    %1590 = vmatmul.mubr.bf16.gmra.mrb[0].mxu0 %v1166
    %v1591 = vpop.f32.mrb[0].mxu0
    %v1592 = vadd.f32 %v1543, %v1591
    %v1593 = vpop.f32.mrb[0].mxu0
    %v1594 = vpop.f32.mrb[0].mxu0
    %v1595 = vadd.f32 %v1543, %v1594
    %v1596 = vpop.f32.mrb[0].mxu0
    %1597 = vdwg.mxu0
    %s1598 = scalar_lea.vmem %s6, 48
    %v1599 = vld [vmem:[%s1598] sm:$0xf]
    %v1600 = vld [vmem:[%s1598 + $0x4] sm:$0xf]
    %v1601 = vld [vmem:[%s1598 + $0x8] sm:$0xf]
    %v1602 = vld [vmem:[%s1598 + $0xc] sm:$0xf]
    %s1603 = scalar_lea.vmem %s9, 3
    %v1604 = vld [vmem:[%s1603] sm:$0x1]
    %v1606 = vlaneseq
    %v1607 = vshrl.u32 %v1606, 7
    %v1608 = vsub.s32 0, %v1607
    %v1609 = vrot.slane %v1604, %v1608
    %v1615 = vunpack.c.l.b16 %v1599
    %v1616 = vunpack.c.l.b16 %v1600
    %v1617 = vunpack.c.l.b16 %v1601
    %v1618 = vunpack.c.l.b16 %v1602
    %v1619 = vpack.c.b16 %v1616, %v1615
    %v1620 = vpack.c.b16 %v1618, %v1617
    %1623 = vmatprep.subr.bf16.mxu0 0
    %1624 = vmatpush1.bf16.msra.mxu0 %v1619
    %1625 = vmatprep.subr.bf16.mxu0 0
    %1626 = vmatpush1.bf16.msra.mxu0 %v1620
    %1627 = vmatprep.subr.bf16.mxu0 0
    %1628 = vmatpush1.bf16.msra.mxu0 0
    %1629 = vmatprep.subr.bf16.mxu0 0
    %1630 = vmatpush1.bf16.msra.mxu0 0
    %1631 = vmatprep.subr.bf16.mxu0 0
    %1632 = vmatpush1.bf16.msra.mxu0 0
    %1633 = vmatprep.subr.bf16.mxu0 0
    %1634 = vmatpush1.bf16.msra.mxu0 0
    %1635 = vmatprep.subr.bf16.mxu0 0
    %1636 = vmatpush1.bf16.msra.mxu0 0
    %1637 = vmatprep.subr.bf16.mxu0 0
    %1638 = vmatpush1.bf16.msra.mxu0 0
    %1639 = vmatprep.subr.bf16.mxu0 0
    %1640 = vmatpush1.bf16.msra.mxu0 0
    %1641 = vmatprep.subr.bf16.mxu0 0
    %1642 = vmatpush1.bf16.msra.mxu0 0
    %1643 = vmatprep.subr.bf16.mxu0 0
    %1644 = vmatpush1.bf16.msra.mxu0 0
    %1645 = vmatprep.subr.bf16.mxu0 0
    %1646 = vmatpush1.bf16.msra.mxu0 0
    %1647 = vmatprep.subr.bf16.mxu0 0
    %1648 = vmatpush1.bf16.msra.mxu0 0
    %1649 = vmatprep.subr.bf16.mxu0 0
    %1650 = vmatpush1.bf16.msra.mxu0 0
    %1651 = vmatprep.subr.bf16.mxu0 0
    %1652 = vmatpush1.bf16.msra.mxu0 0
    %1653 = vmatprep.subr.bf16.mxu0 0
    %1654 = vmatpush1.bf16.msra.mxu0 0
    %1655 = vmatprep.mubr.bf16.mxu0 0
    %1656 = vmatmul.mubr.bf16.gmra.mrb[0].mxu0 %v1166
    %v1657 = vpop.f32.mrb[0].mxu0
    %v1658 = vadd.f32 %v1609, %v1657
    %v1659 = vpop.f32.mrb[0].mxu0
    %v1660 = vpop.f32.mrb[0].mxu0
    %v1661 = vadd.f32 %v1609, %v1660
    %v1662 = vpop.f32.mrb[0].mxu0
    %1663 = vdwg.mxu0
    %v1664 = vpack.c.bf16 %v1529, %v1526
    %v1665 = vpack.c.bf16 %v1595, %v1592
    %v1667 = vsel %vm321, %v1664, 0
    %v1670 = vsel %vm321, %v1665, 0
    %1672 = vmatprep.subr.bf16.mxu0 0
    %1673 = vmatpush1.bf16.xpose.msra.mxu0 %v1670
    %1674 = vmatprep.subr.bf16.mxu0 0
    %1675 = vmatpush1.bf16.xpose.msra.mxu0 0
    %1676 = vmatprep.subr.bf16.mxu0 0
    %1677 = vmatpush1.bf16.xpose.msra.mxu0 0
    %1678 = vmatprep.subr.bf16.mxu0 0
    %1679 = vmatpush1.bf16.xpose.msra.mxu0 0
    %1680 = vmatprep.subr.bf16.mxu0 0
    %1681 = vmatpush1.bf16.xpose.msra.mxu0 0
    %1682 = vmatprep.subr.bf16.mxu0 0
    %1683 = vmatpush1.bf16.xpose.msra.mxu0 0
    %1684 = vmatprep.subr.bf16.mxu0 0
    %1685 = vmatpush1.bf16.xpose.msra.mxu0 0
    %1686 = vmatprep.subr.bf16.mxu0 0
    %1687 = vmatpush1.bf16.xpose.msra.mxu0 0
    %1688 = vmatprep.subr.bf16.mxu0 0
    %1689 = vmatpush1.bf16.xpose.msra.mxu0 0
    %1690 = vmatprep.subr.bf16.mxu0 0
    %1691 = vmatpush1.bf16.xpose.msra.mxu0 0
    %1692 = vmatprep.subr.bf16.mxu0 0
    %1693 = vmatpush1.bf16.xpose.msra.mxu0 0
    %1694 = vmatprep.subr.bf16.mxu0 0
    %1695 = vmatpush1.bf16.xpose.msra.mxu0 0
    %1696 = vmatprep.subr.bf16.mxu0 0
    %1697 = vmatpush1.bf16.xpose.msra.mxu0 0
    %1698 = vmatprep.subr.bf16.mxu0 0
    %1699 = vmatpush1.bf16.xpose.msra.mxu0 0
    %1700 = vmatprep.subr.bf16.mxu0 0
    %1701 = vmatpush1.bf16.xpose.msra.mxu0 0
    %1702 = vmatprep.subr.bf16.mxu0 0
    %1703 = vmatpush1.bf16.xpose.msra.mxu0 0
    %1704 = vmatprep.mubr.bf16.mxu0 0
    %1705 = vmatmul.mubr.bf16.gmra.mrb[0].mxu0 %v1667
    %v1706 = vpop.f32.mrb[0].mxu0
    %v1707 = vadd.f32 0.0, %v1706
    %v1708 = vpop.f32.mrb[0].mxu0
    %v1709 = vpop.f32.mrb[0].mxu0
    %v1710 = vadd.f32 0.0, %v1709
    %v1711 = vpop.f32.mrb[0].mxu0
    %1712 = vdwg.mxu0
    %v1713 = vmul.f32 %v1707, 0.25
    %v1714 = vmul.f32 %v1710, 0.25
    %v1715 = vadd.f32 %v1713, %v121
    %v1716 = vadd.f32 %v1714, %v122
    %v1717 = vsel %vm321, %v1715, -inf
    %1718 = vmax.xlane.f32.xlu0 %v1717
    %v1719 = vpop.xlane.xlu0 %1718
    %v1720 = vsel %vm321, %v1716, -inf
    %1721 = vmax.xlane.f32.xlu0 %v1720
    %v1722 = vpop.xlane.xlu0 %1721
    %v1723 = vsub.f32 %v1715, %v1719
    %v1724 = vsub.f32 %v1716, %v1722
    %v1725 = vmul.f32 %v1723, 1.442695
    %v1726 = vpow.pop %v1725
    %v1727 = vmul.f32 %v1724, 1.442695
    %v1728 = vpow.pop %v1727
    %v1729 = vsel %vm321, %v1726, 0.0
    %1730 = vadd.xlane.f32.xlu0 %v1729
    %v1731 = vpop.xlane.xlu0 %1730
    %v1732 = vsel %vm321, %v1728, 0.0
    %1733 = vadd.xlane.f32.xlu0 %v1732
    %v1734 = vpop.xlane.xlu0 %1733
    %v1735 = vrcp.pop %v1731
    %v1736 = vrcp.pop %v1734
    %v1737 = vmul.f32 %v1726, %v1735
    %v1738 = vmul.f32 %v1728, %v1736
    %v1739 = vpack.c.bf16 %v1738, %v1737
    %v1740 = vpack.c.bf16 %v1661, %v1658
    %v1742 = vsel %vm321, %v1739, 0
    %1744 = vmatprep.subr.bf16.mxu0 0
    %1745 = vmatpush1.bf16.msra.mxu0 %v1740
    %1746 = vmatprep.subr.bf16.mxu0 0
    %1747 = vmatpush1.bf16.msra.mxu0 0
    %1748 = vmatprep.subr.bf16.mxu0 0
    %1749 = vmatpush1.bf16.msra.mxu0 0
    %1750 = vmatprep.subr.bf16.mxu0 0
    %1751 = vmatpush1.bf16.msra.mxu0 0
    %1752 = vmatprep.subr.bf16.mxu0 0
    %1753 = vmatpush1.bf16.msra.mxu0 0
    %1754 = vmatprep.subr.bf16.mxu0 0
    %1755 = vmatpush1.bf16.msra.mxu0 0
    %1756 = vmatprep.subr.bf16.mxu0 0
    %1757 = vmatpush1.bf16.msra.mxu0 0
    %1758 = vmatprep.subr.bf16.mxu0 0
    %1759 = vmatpush1.bf16.msra.mxu0 0
    %1760 = vmatprep.subr.bf16.mxu0 0
    %1761 = vmatpush1.bf16.msra.mxu0 0
    %1762 = vmatprep.subr.bf16.mxu0 0
    %1763 = vmatpush1.bf16.msra.mxu0 0
    %1764 = vmatprep.subr.bf16.mxu0 0
    %1765 = vmatpush1.bf16.msra.mxu0 0
    %1766 = vmatprep.subr.bf16.mxu0 0
    %1767 = vmatpush1.bf16.msra.mxu0 0
    %1768 = vmatprep.subr.bf16.mxu0 0
    %1769 = vmatpush1.bf16.msra.mxu0 0
    %1770 = vmatprep.subr.bf16.mxu0 0
    %1771 = vmatpush1.bf16.msra.mxu0 0
    %1772 = vmatprep.subr.bf16.mxu0 0
    %1773 = vmatpush1.bf16.msra.mxu0 0
    %1774 = vmatprep.subr.bf16.mxu0 0
    %1775 = vmatpush1.bf16.msra.mxu0 0
    %1776 = vmatprep.mubr.bf16.mxu0 0
    %1777 = vmatmul.mubr.bf16.gmra.mrb[0].mxu0 %v1742
    %v1778 = vpop.f32.mrb[0].mxu0
    %v1779 = vadd.f32 0.0, %v1778
    %v1780 = vpop.f32.mrb[0].mxu0
    %v1781 = vpop.f32.mrb[0].mxu0
    %v1782 = vadd.f32 0.0, %v1781
    %v1783 = vpop.f32.mrb[0].mxu0
    %1784 = vdwg.mxu0
    %s1785 = scalar_lea.vmem %s10, 24
    %v1786 = vld [vmem:[%s1785] sm:$0xf]
    %v1787 = vld [vmem:[%s1785 + $0x4] sm:$0xf]
    %v1788 = vpack.c.bf16 %v1782, %v1779
    %v1791 = vunpack.c.l.b16 %v1786
    %v1792 = vunpack.c.l.b16 %v1787
    %v1793 = vpack.c.b16 %v1792, %v1791
    %v1796 = vsel %vm321, %v1788, 0
    %1798 = vmatprep.subr.bf16.mxu0 0
    %1799 = vmatpush1.bf16.msra.mxu0 %v1793
    %1800 = vmatprep.subr.bf16.mxu0 0
    %1801 = vmatpush1.bf16.msra.mxu0 0
    %1802 = vmatprep.subr.bf16.mxu0 0
    %1803 = vmatpush1.bf16.msra.mxu0 0
    %1804 = vmatprep.subr.bf16.mxu0 0
    %1805 = vmatpush1.bf16.msra.mxu0 0
    %1806 = vmatprep.subr.bf16.mxu0 0
    %1807 = vmatpush1.bf16.msra.mxu0 0
    %1808 = vmatprep.subr.bf16.mxu0 0
    %1809 = vmatpush1.bf16.msra.mxu0 0
    %1810 = vmatprep.subr.bf16.mxu0 0
    %1811 = vmatpush1.bf16.msra.mxu0 0
    %1812 = vmatprep.subr.bf16.mxu0 0
    %1813 = vmatpush1.bf16.msra.mxu0 0
    %1814 = vmatprep.subr.bf16.mxu0 0
    %1815 = vmatpush1.bf16.msra.mxu0 0
    %1816 = vmatprep.subr.bf16.mxu0 0
    %1817 = vmatpush1.bf16.msra.mxu0 0
    %1818 = vmatprep.subr.bf16.mxu0 0
    %1819 = vmatpush1.bf16.msra.mxu0 0
    %1820 = vmatprep.subr.bf16.mxu0 0
    %1821 = vmatpush1.bf16.msra.mxu0 0
    %1822 = vmatprep.subr.bf16.mxu0 0
    %1823 = vmatpush1.bf16.msra.mxu0 0
    %1824 = vmatprep.subr.bf16.mxu0 0
    %1825 = vmatpush1.bf16.msra.mxu0 0
    %1826 = vmatprep.subr.bf16.mxu0 0
    %1827 = vmatpush1.bf16.msra.mxu0 0
    %1828 = vmatprep.subr.bf16.mxu0 0
    %1829 = vmatpush1.bf16.msra.mxu0 0
    %1830 = vmatprep.mubr.bf16.mxu0 0
    %1831 = vmatmul.mubr.bf16.gmra.mrb[0].mxu0 %v1796
    %v1832 = vpop.f32.mrb[0].mxu0
    %v1833 = vadd.f32 0.0, %v1832
    %v1834 = vpop.f32.mrb[0].mxu0
    %v1835 = vpop.f32.mrb[0].mxu0
    %v1836 = vadd.f32 0.0, %v1835
    %v1837 = vpop.f32.mrb[0].mxu0
    %1838 = vdwg.mxu0
    %v1841 = vunpack.c.l.b16 %v1463
    %v1842 = vunpack.c.l.b16 %v1464
    %v1843 = vpack.c.b16 %v1842, %v1841
    %v1846 = vsel %vm321, %v1465, 0
    %1848 = vmatprep.subr.bf16.mxu0 0
    %1849 = vmatpush1.bf16.msra.mxu0 %v1843
    %1850 = vmatprep.subr.bf16.mxu0 0
    %1851 = vmatpush1.bf16.msra.mxu0 0
    %1852 = vmatprep.subr.bf16.mxu0 0
    %1853 = vmatpush1.bf16.msra.mxu0 0
    %1854 = vmatprep.subr.bf16.mxu0 0
    %1855 = vmatpush1.bf16.msra.mxu0 0
    %1856 = vmatprep.subr.bf16.mxu0 0
    %1857 = vmatpush1.bf16.msra.mxu0 0
    %1858 = vmatprep.subr.bf16.mxu0 0
    %1859 = vmatpush1.bf16.msra.mxu0 0
    %1860 = vmatprep.subr.bf16.mxu0 0
    %1861 = vmatpush1.bf16.msra.mxu0 0
    %1862 = vmatprep.subr.bf16.mxu0 0
    %1863 = vmatpush1.bf16.msra.mxu0 0
    %1864 = vmatprep.subr.bf16.mxu0 0
    %1865 = vmatpush1.bf16.msra.mxu0 0
    %1866 = vmatprep.subr.bf16.mxu0 0
    %1867 = vmatpush1.bf16.msra.mxu0 0
    %1868 = vmatprep.subr.bf16.mxu0 0
    %1869 = vmatpush1.bf16.msra.mxu0 0
    %1870 = vmatprep.subr.bf16.mxu0 0
    %1871 = vmatpush1.bf16.msra.mxu0 0
    %1872 = vmatprep.subr.bf16.mxu0 0
    %1873 = vmatpush1.bf16.msra.mxu0 0
    %1874 = vmatprep.subr.bf16.mxu0 0
    %1875 = vmatpush1.bf16.msra.mxu0 0
    %1876 = vmatprep.subr.bf16.mxu0 0
    %1877 = vmatpush1.bf16.msra.mxu0 0
    %1878 = vmatprep.subr.bf16.mxu0 0
    %1879 = vmatpush1.bf16.msra.mxu0 0
    %1880 = vmatprep.mubr.bf16.mxu0 0
    %1881 = vmatmul.mubr.bf16.gmra.mrb[0].mxu0 %v1846
    %v1882 = vpop.f32.mrb[0].mxu0
    %v1883 = vadd.f32 %v1833, %v1882
    %v1884 = vpop.f32.mrb[0].mxu0
    %v1885 = vpop.f32.mrb[0].mxu0
    %v1886 = vadd.f32 %v1836, %v1885
    %v1887 = vpop.f32.mrb[0].mxu0
    %1888 = vdwg.mxu0
    %s1889 = scalar_lea.vmem %s11, 1
    %v1890 = vld [vmem:[%s1889] sm:$0x1]
    %v1892 = vlaneseq
    %v1893 = vshrl.u32 %v1892, 7
    %v1894 = vsub.s32 0, %v1893
    %v1895 = vrot.slane %v1890, %v1894
    %v1897 = vadd.f32 %v1883, %v1895
    %v1898 = vadd.f32 %v1886, %v1895
    %v1899 = vadd.f32 %v1897, %v1137
    %v1900 = vadd.f32 %v1898, %v1138
    %s1901 = scalar_lea.vmem %s12, 1
    %v1902 = vld [vmem:[%s1901] sm:$0x1]
    %s1903 = scalar_lea.vmem %s13, 1
    %v1904 = vld [vmem:[%s1903] sm:$0x1]
    %v1905 = vsel %vm77, %v1899, 0.0
    %1906 = vadd.xlane.f32.xlu0 %v1905
    %v1907 = vpop.xlane.xlu0 %1906
    %v1908 = vsel %vm77, %v1900, 0.0
    %1909 = vadd.xlane.f32.xlu0 %v1908
    %v1910 = vpop.xlane.xlu0 %1909
    %v1911 = vmul.f32 %v1907, %v84
    %v1912 = vmul.f32 %v1910, %v84
    %v1913 = vsub.f32 %v1899, %v1911
    %v1914 = vsub.f32 %v1900, %v1912
    %v1915 = vmul.f32 %v1913, %v1913
    %v1916 = vmul.f32 %v1914, %v1914
    %v1917 = vsel %vm77, %v1915, 0.0
    %1918 = vadd.xlane.f32.xlu0 %v1917
    %v1919 = vpop.xlane.xlu0 %1918
    %v1920 = vsel %vm77, %v1916, 0.0
    %1921 = vadd.xlane.f32.xlu0 %v1920
    %v1922 = vpop.xlane.xlu0 %1921
    %v1923 = vmul.f32 %v1919, %v84
    %v1924 = vmul.f32 %v1922, %v84
    %v1925 = vadd.f32 %v1923, 1e-12
    %v1926 = vadd.f32 %v1924, 1e-12
    %v1927 = vrsqrt.pop %v1925
    %v1928 = vrsqrt.pop %v1926
    %v1929 = vmul.f32 %v1913, %v1927
    %v1930 = vmul.f32 %v1914, %v1928
    %v1932 = vlaneseq
    %v1933 = vshrl.u32 %v1932, 7
    %v1934 = vsub.s32 0, %v1933
    %v1935 = vrot.slane %v1902, %v1934
    %v1937 = vmul.f32 %v1929, %v1935
    %v1938 = vmul.f32 %v1930, %v1935
    %v1940 = vlaneseq
    %v1941 = vshrl.u32 %v1940, 7
    %v1942 = vsub.s32 0, %v1941
    %v1943 = vrot.slane %v1904, %v1942
    %v1945 = vadd.f32 %v1937, %v1943
    %v1946 = vadd.f32 %v1938, %v1943
    %s1947 = scalar_lea.vmem %s14, 16
    %v1948 = vld [vmem:[%s1947] sm:$0xf]
    %v1949 = vld [vmem:[%s1947 + $0x4] sm:$0xf]
    %v1950 = vld [vmem:[%s1947 + $0x8] sm:$0xf]
    %v1951 = vld [vmem:[%s1947 + $0xc] sm:$0xf]
    %v1952 = vpack.c.bf16 %v1946, %v1945
    %s1953 = scalar_lea.vmem %s15, 1
    %v1954 = vld [vmem:[%s1953] sm:$0x1]
    %v1956 = vlaneseq
    %v1957 = vshrl.u32 %v1956, 7
    %v1958 = vsub.s32 0, %v1957
    %v1959 = vrot.slane %v1954, %v1958
    %v1965 = vunpack.c.l.b16 %v1948
    %v1966 = vunpack.c.l.b16 %v1949
    %v1967 = vunpack.c.l.b16 %v1950
    %v1968 = vunpack.c.l.b16 %v1951
    %v1969 = vpack.c.b16 %v1966, %v1965
    %v1970 = vpack.c.b16 %v1968, %v1967
    %v1974 = vsel %vm77, %v1952, 0
    %1976 = vmatprep.subr.bf16.mxu0 0
    %1977 = vmatpush1.bf16.msra.mxu0 %v1969
    %1978 = vmatprep.subr.bf16.mxu0 0
    %1979 = vmatpush1.bf16.msra.mxu0 %v1970
    %1980 = vmatprep.subr.bf16.mxu0 0
    %1981 = vmatpush1.bf16.msra.mxu0 0
    %1982 = vmatprep.subr.bf16.mxu0 0
    %1983 = vmatpush1.bf16.msra.mxu0 0
    %1984 = vmatprep.subr.bf16.mxu0 0
    %1985 = vmatpush1.bf16.msra.mxu0 0
    %1986 = vmatprep.subr.bf16.mxu0 0
    %1987 = vmatpush1.bf16.msra.mxu0 0
    %1988 = vmatprep.subr.bf16.mxu0 0
    %1989 = vmatpush1.bf16.msra.mxu0 0
    %1990 = vmatprep.subr.bf16.mxu0 0
    %1991 = vmatpush1.bf16.msra.mxu0 0
    %1992 = vmatprep.subr.bf16.mxu0 0
    %1993 = vmatpush1.bf16.msra.mxu0 0
    %1994 = vmatprep.subr.bf16.mxu0 0
    %1995 = vmatpush1.bf16.msra.mxu0 0
    %1996 = vmatprep.subr.bf16.mxu0 0
    %1997 = vmatpush1.bf16.msra.mxu0 0
    %1998 = vmatprep.subr.bf16.mxu0 0
    %1999 = vmatpush1.bf16.msra.mxu0 0
    %2000 = vmatprep.subr.bf16.mxu0 0
    %2001 = vmatpush1.bf16.msra.mxu0 0
    %2002 = vmatprep.subr.bf16.mxu0 0
    %2003 = vmatpush1.bf16.msra.mxu0 0
    %2004 = vmatprep.subr.bf16.mxu0 0
    %2005 = vmatpush1.bf16.msra.mxu0 0
    %2006 = vmatprep.subr.bf16.mxu0 0
    %2007 = vmatpush1.bf16.msra.mxu0 0
    %2008 = vmatprep.mubr.bf16.mxu0 0
    %2009 = vmatmul.mubr.bf16.gmra.mrb[0].mxu0 %v1974
    %v2010 = vpop.f32.mrb[0].mxu0
    %v2011 = vadd.f32 %v1959, %v2010
    %v2012 = vpop.f32.mrb[0].mxu0
    %v2013 = vpop.f32.mrb[0].mxu0
    %v2014 = vadd.f32 %v1959, %v2013
    %v2015 = vpop.f32.mrb[0].mxu0
    %2016 = vdwg.mxu0
    %v2017 = vmul.f32 %v2011, 0.5
    %v2018 = vmul.f32 %v2014, 0.5
    %v2019 = vmul.f32 %v2011, 0.044715
    %v2020 = vmul.f32 %v2014, 0.044715
    %v2021 = vmul.f32 %v2019, %v2011
    %v2022 = vmul.f32 %v2020, %v2014
    %v2023 = vmul.f32 %v2021, %v2011
    %v2024 = vmul.f32 %v2022, %v2014
    %v2025 = vadd.f32 %v2011, %v2023
    %v2026 = vadd.f32 %v2014, %v2024
    %v2027 = vmul.f32 %v2025, 0.7978846
    %v2028 = vmul.f32 %v2026, 0.7978846
    %v2029 = vtanh.pop %v2027
    %v2030 = vtanh.pop %v2028
    %v2031 = vadd.f32 %v2029, 1.0
    %v2032 = vadd.f32 %v2030, 1.0
    %v2033 = vmul.f32 %v2017, %v2031
    %v2034 = vmul.f32 %v2018, %v2032
    %s2035 = scalar_lea.vmem %s16, 32
    %v2036 = vld [vmem:[%s2035] sm:$0xf]
    %v2037 = vld [vmem:[%s2035 + $0x4] sm:$0xf]
    %v2038 = vld [vmem:[%s2035 + $0x8] sm:$0xf]
    %v2039 = vld [vmem:[%s2035 + $0xc] sm:$0xf]
    %v2040 = vld [vmem:[%s2035 + $0x10] sm:$0xf]
    %v2041 = vld [vmem:[%s2035 + $0x14] sm:$0xf]
    %v2042 = vld [vmem:[%s2035 + $0x18] sm:$0xf]
    %v2043 = vld [vmem:[%s2035 + $0x1c] sm:$0xf]
    %v2044 = vpack.c.bf16 %v2034, %v2033
    %s2045 = scalar_lea.vmem %s17, 1
    %v2046 = vld [vmem:[%s2045] sm:$0x1]
    %v2048 = vlaneseq
    %v2049 = vshrl.u32 %v2048, 7
    %v2050 = vsub.s32 0, %v2049
    %v2051 = vrot.slane %v2046, %v2050
    %v2061 = vunpack.c.l.b16 %v2036
    %v2062 = vunpack.c.l.b16 %v2037
    %v2063 = vunpack.c.l.b16 %v2038
    %v2064 = vunpack.c.l.b16 %v2039
    %v2065 = vunpack.c.l.b16 %v2040
    %v2066 = vunpack.c.l.b16 %v2041
    %v2067 = vunpack.c.l.b16 %v2042
    %v2068 = vunpack.c.l.b16 %v2043
    %v2069 = vpack.c.b16 %v2062, %v2061
    %v2070 = vpack.c.b16 %v2064, %v2063
    %v2071 = vpack.c.b16 %v2066, %v2065
    %v2072 = vpack.c.b16 %v2068, %v2067
    %v2078 = vsel %vm1048, %v2044, 0
    %2080 = vmatprep.subr.bf16.mxu0 0
    %2081 = vmatpush1.bf16.msra.mxu0 %v2069
    %2082 = vmatprep.subr.bf16.mxu0 0
    %2083 = vmatpush1.bf16.msra.mxu0 %v2070
    %2084 = vmatprep.subr.bf16.mxu0 0
    %2085 = vmatpush1.bf16.msra.mxu0 %v2071
    %2086 = vmatprep.subr.bf16.mxu0 0
    %2087 = vmatpush1.bf16.msra.mxu0 %v2072
    %2088 = vmatprep.subr.bf16.mxu0 0
    %2089 = vmatpush1.bf16.msra.mxu0 0
    %2090 = vmatprep.subr.bf16.mxu0 0
    %2091 = vmatpush1.bf16.msra.mxu0 0
    %2092 = vmatprep.subr.bf16.mxu0 0
    %2093 = vmatpush1.bf16.msra.mxu0 0
    %2094 = vmatprep.subr.bf16.mxu0 0
    %2095 = vmatpush1.bf16.msra.mxu0 0
    %2096 = vmatprep.subr.bf16.mxu0 0
    %2097 = vmatpush1.bf16.msra.mxu0 0
    %2098 = vmatprep.subr.bf16.mxu0 0
    %2099 = vmatpush1.bf16.msra.mxu0 0
    %2100 = vmatprep.subr.bf16.mxu0 0
    %2101 = vmatpush1.bf16.msra.mxu0 0
    %2102 = vmatprep.subr.bf16.mxu0 0
    %2103 = vmatpush1.bf16.msra.mxu0 0
    %2104 = vmatprep.subr.bf16.mxu0 0
    %2105 = vmatpush1.bf16.msra.mxu0 0
    %2106 = vmatprep.subr.bf16.mxu0 0
    %2107 = vmatpush1.bf16.msra.mxu0 0
    %2108 = vmatprep.subr.bf16.mxu0 0
    %2109 = vmatpush1.bf16.msra.mxu0 0
    %2110 = vmatprep.subr.bf16.mxu0 0
    %2111 = vmatpush1.bf16.msra.mxu0 0
    %2112 = vmatprep.mubr.bf16.mxu0 0
    %2113 = vmatmul.mubr.bf16.gmra.mrb[0].mxu0 %v2078
    %v2114 = vpop.f32.mrb[0].mxu0
    %v2115 = vadd.f32 %v2051, %v2114
    %v2116 = vpop.f32.mrb[0].mxu0
    %v2117 = vpop.f32.mrb[0].mxu0
    %v2118 = vadd.f32 %v2051, %v2117
    %v2119 = vpop.f32.mrb[0].mxu0
    %2120 = vdwg.mxu0
    %v2121 = vadd.f32 %v2115, %v1945
    %v2122 = vadd.f32 %v2118, %v1946
    %s2123 = scalar_lea.vmem %s18, 1
    %v2124 = vld [vmem:[%s2123] sm:$0x1]
    %s2125 = scalar_lea.vmem %s19, 1
    %v2126 = vld [vmem:[%s2125] sm:$0x1]
    %v2127 = vsel %vm77, %v2121, 0.0
    %2128 = vadd.xlane.f32.xlu0 %v2127
    %v2129 = vpop.xlane.xlu0 %2128
    %v2130 = vsel %vm77, %v2122, 0.0
    %2131 = vadd.xlane.f32.xlu0 %v2130
    %v2132 = vpop.xlane.xlu0 %2131
    %v2133 = vmul.f32 %v2129, %v84
    %v2134 = vmul.f32 %v2132, %v84
    %v2135 = vsub.f32 %v2121, %v2133
    %v2136 = vsub.f32 %v2122, %v2134
    %v2137 = vmul.f32 %v2135, %v2135
    %v2138 = vmul.f32 %v2136, %v2136
    %v2139 = vsel %vm77, %v2137, 0.0
    %2140 = vadd.xlane.f32.xlu0 %v2139
    %v2141 = vpop.xlane.xlu0 %2140
    %v2142 = vsel %vm77, %v2138, 0.0
    %2143 = vadd.xlane.f32.xlu0 %v2142
    %v2144 = vpop.xlane.xlu0 %2143
    %v2145 = vmul.f32 %v2141, %v84
    %v2146 = vmul.f32 %v2144, %v84
    %v2147 = vadd.f32 %v2145, 1e-12
    %v2148 = vadd.f32 %v2146, 1e-12
    %v2149 = vrsqrt.pop %v2147
    %v2150 = vrsqrt.pop %v2148
    %v2151 = vmul.f32 %v2135, %v2149
    %v2152 = vmul.f32 %v2136, %v2150
    %v2154 = vlaneseq
    %v2155 = vshrl.u32 %v2154, 7
    %v2156 = vsub.s32 0, %v2155
    %v2157 = vrot.slane %v2124, %v2156
    %v2159 = vmul.f32 %v2151, %v2157
    %v2160 = vmul.f32 %v2152, %v2157
    %v2162 = vlaneseq
    %v2163 = vshrl.u32 %v2162, 7
    %v2164 = vsub.s32 0, %v2163
    %v2165 = vrot.slane %v2126, %v2164
    %v2167 = vadd.f32 %v2159, %v2165
    %v2168 = vadd.f32 %v2160, %v2165
    %v2169 = vld [vmem:[%s20] sm:$0xf]
    %v2170 = vld [vmem:[%s20 + $0x4] sm:$0xf]
    %v2171 = vld [vmem:[%s20 + $0x8] sm:$0xf]
    %v2172 = vld [vmem:[%s20 + $0xc] sm:$0xf]
    %v2173 = vpack.c.bf16 %v2168, %v2167
    %v2174 = vld [vmem:[%s21] sm:$0x1]
    %v2176 = vlaneseq
    %v2177 = vshrl.u32 %v2176, 7
    %v2178 = vsub.s32 0, %v2177
    %v2179 = vrot.slane %v2174, %v2178
    %v2185 = vunpack.c.l.b16 %v2169
    %v2186 = vunpack.c.l.b16 %v2170
    %v2187 = vunpack.c.l.b16 %v2171
    %v2188 = vunpack.c.l.b16 %v2172
    %v2189 = vpack.c.b16 %v2186, %v2185
    %v2190 = vpack.c.b16 %v2188, %v2187
    %v2194 = vsel %vm77, %v2173, 0
    %2196 = vmatprep.subr.bf16.mxu0 0
    %2197 = vmatpush1.bf16.msra.mxu0 %v2189
    %2198 = vmatprep.subr.bf16.mxu0 0
    %2199 = vmatpush1.bf16.msra.mxu0 %v2190
    %2200 = vmatprep.subr.bf16.mxu0 0
    %2201 = vmatpush1.bf16.msra.mxu0 0
    %2202 = vmatprep.subr.bf16.mxu0 0
    %2203 = vmatpush1.bf16.msra.mxu0 0
    %2204 = vmatprep.subr.bf16.mxu0 0
    %2205 = vmatpush1.bf16.msra.mxu0 0
    %2206 = vmatprep.subr.bf16.mxu0 0
    %2207 = vmatpush1.bf16.msra.mxu0 0
    %2208 = vmatprep.subr.bf16.mxu0 0
    %2209 = vmatpush1.bf16.msra.mxu0 0
    %2210 = vmatprep.subr.bf16.mxu0 0
    %2211 = vmatpush1.bf16.msra.mxu0 0
    %2212 = vmatprep.subr.bf16.mxu0 0
    %2213 = vmatpush1.bf16.msra.mxu0 0
    %2214 = vmatprep.subr.bf16.mxu0 0
    %2215 = vmatpush1.bf16.msra.mxu0 0
    %2216 = vmatprep.subr.bf16.mxu0 0
    %2217 = vmatpush1.bf16.msra.mxu0 0
    %2218 = vmatprep.subr.bf16.mxu0 0
    %2219 = vmatpush1.bf16.msra.mxu0 0
    %2220 = vmatprep.subr.bf16.mxu0 0
    %2221 = vmatpush1.bf16.msra.mxu0 0
    %2222 = vmatprep.subr.bf16.mxu0 0
    %2223 = vmatpush1.bf16.msra.mxu0 0
    %2224 = vmatprep.subr.bf16.mxu0 0
    %2225 = vmatpush1.bf16.msra.mxu0 0
    %2226 = vmatprep.subr.bf16.mxu0 0
    %2227 = vmatpush1.bf16.msra.mxu0 0
    %2228 = vmatprep.mubr.bf16.mxu0 0
    %2229 = vmatmul.mubr.bf16.gmra.mrb[0].mxu0 %v2194
    %v2230 = vpop.f32.mrb[0].mxu0
    %v2231 = vadd.f32 %v2179, %v2230
    %v2232 = vpop.f32.mrb[0].mxu0
    %v2233 = vpop.f32.mrb[0].mxu0
    %v2234 = vadd.f32 %v2179, %v2233
    %v2235 = vpop.f32.mrb[0].mxu0
    %2236 = vdwg.mxu0
    %2237 = vst [vmem:[#allocation2] sm:$0xff] %v2231
    %2238 = vst [vmem:[#allocation2 + $0x8] sm:$0xff] %v2234
    // Predicated region
    $region90: #{tpu_custom_call.1} parent=1 // pred_check
      _
    $region91: #{tpu_custom_call.1} parent=1 // pred_check_branch
      %2240 = sbr.rel (0) target = $region93
    $region92: #{tpu_custom_call.1} parent=1 // pred_region
      %s2242 = ssub.s32 256, 256
      %2243 = vsyncadd [#allocation3], %s2242
      %s2244 = sshll.u32 [#allocation2], 4
      %s2245 = int_to_ptr.vmem [resolvable:$true] %s2244
      %2250 = dma.vmem_to_hbm [thread:$0]  %s2245, 256, %s22, [#allocation3], 128, 128, 8
    $region93: #{tpu_custom_call.1} parent=1 // pred_fallthru
      _
    // Predicated region
    $region94: #{tpu_custom_call.1} parent=1 // pred_check
      _
    $region95: #{tpu_custom_call.1} parent=1 // pred_check_branch
      %2252 = sbr.rel (0) target = $region97
    $region96: #{tpu_custom_call.1} parent=1 // pred_region
      %2253 = dma.done [#allocation3], 256
    $region97: #{tpu_custom_call.1} parent=1 // pred_fallthru
      _
    %2254 = vsyncpa [#allocation3], 1

</llo_original>
